<compile_context>
chip_gen: v6e
topology: v6e:2x2x1
jax: 0.10.0
libtpu: 0.0.40
codegen_flags: <defaults>
</compile_context>

<pallas_src>
import functools

import jax
import jax.numpy as jnp
from jax import lax
from jax.experimental import pallas as pl
from jax.experimental.pallas import tpu as pltpu


# ---------------------------------------------------------------------------
# Shared helper: conv as kh*kw lane-shifted matmuls on the flattened padded
# image ("fused im2col").  acc[co, p] = sum_t  w_t[co, :] @ x[:, p + off_t],
# where p indexes the padded grid (p = y*Wp + x).  Columns with (p % Wp) >= Wo
# are garbage (they wrap across rows) and are masked / never stored.
# ---------------------------------------------------------------------------
def _accum_conv(x_ref, w_ref, *, offsets, lacc):
    # x_ref: (1, Cin, Lx)   flat zero-padded image (bf16 or f32)
    # w_ref: (T, Ctile, Cin) per-tap weight matrices
    acc = None
    for t, off in enumerate(offsets):                 # static Python unroll
        win = x_ref[0, :, off:off + lacc]             # (Cin, lacc), static slice
        part = jnp.dot(w_ref[t], win, preferred_element_type=jnp.float32)
        acc = part if acc is None else acc + part
    return acc                                        # (Ctile, lacc) f32


# ---------------------------------------------------------------------------
# Pass 1: per-image per-channel sum and centered M2 (no conv written to HBM).
# ---------------------------------------------------------------------------
def _stats_kernel(x_ref, w_ref, mask_ref, stats_ref, *, offsets, lacc, count):
    acc = _accum_conv(x_ref, w_ref, offsets=offsets, lacc=lacc)
    mask = mask_ref[...]                              # (1, lacc) f32, 1 on valid cols
    masked = acc * mask
    s = jnp.sum(masked, axis=1, keepdims=True)        # (Ctile, 1) per-image sum
    mu = s * (1.0 / count)                            # per-image per-channel mean
    d = acc - mu
    m2 = jnp.sum(d * d * mask, axis=1, keepdims=True)  # centered sum of squares
    stats_ref[0, :, 0:1] = s                          # packed: one tiny output
    stats_ref[0, :, 1:2] = m2


# ---------------------------------------------------------------------------
# Pass 2: recompute conv, apply folded BN affine + leaky ReLU, store the valid
# columns row-by-row into a lane-dense (Cout, Ho*Wo) output block.
# ---------------------------------------------------------------------------
def _apply_kernel(x_ref, w_ref, aff_ref, o_ref, buf_ref, *,
                  offsets, lacc, wp, wo, ho, cblk, slope):
    acc = _accum_conv(x_ref, w_ref, offsets=offsets, lacc=lacc)
    scale = aff_ref[:, 0:1]                           # (Ctile, 1)
    shift = aff_ref[:, 1:2]
    y = acc * scale + shift                           # f32 VPU math
    y = jnp.where(y >= 0.0, y, slope * y)
    buf_ref[...] = y                                  # VMEM scratch for extraction
    # Drop the (kw-1) garbage columns of each padded row: copy Wo valid lanes
    # per output row from the padded-grid layout into the dense output block.
    for r in range(ho):                               # static unroll
        o_ref[0, :, r * wo:(r + 1) * wo] = buf_ref[0:cblk, r * wp:r * wp + wo]


def _vmem_limit_bytes():
    # Generation-aware scoped-VMEM limit: ~48 MiB on v7x (64 MiB physical),
    # ~96 MiB on v5e/v6e (128 MiB physical).
    try:
        cap = int(pltpu.get_tpu_info().vmem_capacity_bytes)
    except Exception:
        cap = 64 << 20
    return int(min(max(3 * cap // 4, 32 << 20), 100 << 20))


@functools.partial(
    jax.jit,
    static_argnames=("padding", "stride", "eps", "negative_slope", "leaky",
                     "matmul_dtype"))
def conv_norm_relu(x_nchw, weight, bias, gamma, beta, *, padding=1, stride=1,
                   eps=1e-5, negative_slope=0.2, leaky=True,
                   matmul_dtype=jnp.bfloat16):
    """ConvNormRelu forward.  x: (N,Cin,H,W), weight: (Cout,Cin,kh,kw),
    bias/gamma/beta: (Cout,).  Returns (N, Cout, Ho, Wo) float32."""
    if stride != 1:
        # TODO(synk): stride>1 breaks the flattened-shift conv; not implemented.
        raise NotImplementedError("only stride=1 (module default) is supported")
    del bias  # exact no-op under training-mode BatchNorm (cancels in conv - mean)

    n, cin, h, w = x_nchw.shape
    cout, cin_w, kh, kw = weight.shape
    assert cin == cin_w
    hp, wp = h + 2 * padding, w + 2 * padding
    ho, wo = hp - kh + 1, wp - kw + 1
    ntaps = kh * kw
    lacc = ho * wp                                    # padded-grid columns spanned
    lx = hp * wp + (kw - 1)                           # flat length incl. tap slack
    count = ho * wo                                   # valid positions per image

    # ---- output-channel tiling (bounds weight/acc VMEM for big Cout) -------
    coutp = -(-cout // 8) * 8
    if coutp <= 256:
        tile_co, num_co = coutp, 1
    else:
        tile_co = 256
        coutp = -(-cout // 256) * 256
        num_co = coutp // 256
    n_out_c = cout if num_co == 1 else coutp          # channels in the out array
    cblk = n_out_c if num_co == 1 else tile_co        # channel rows stored / step

    # ---- XLA-side prep (input-sized only; pad+cast+flatten fuse) -----------
    xp = jnp.pad(x_nchw, ((0, 0), (0, 0), (padding, padding), (padding, padding)))
    xf = xp.reshape(n, cin, hp * wp).astype(matmul_dtype)
    xf = jnp.pad(xf, ((0, 0), (0, 0), (0, lx - hp * wp)))      # tap-slack zeros

    wt = jnp.transpose(weight.reshape(cout, cin, ntaps), (2, 0, 1))  # (T,Cout,Cin)
    wt = jnp.pad(wt, ((0, 0), (0, coutp - cout), (0, 0))).astype(matmul_dtype)

    col = jnp.arange(lacc, dtype=jnp.int32) % wp
    mask = (col < wo).astype(jnp.float32).reshape(1, lacc)     # valid-column mask

    offsets = tuple(i * wp + j for i in range(kh) for j in range(kw))

    vmem_limit = _vmem_limit_bytes()
    cparams = pltpu.CompilerParams(
        dimension_semantics=("parallel", "arbitrary"),  # batch axis splits TCs
        vmem_limit_bytes=vmem_limit)

    # Rough per-step working set (double-buffered blocks + scratch).
    item = jnp.dtype(matmul_dtype).itemsize
    est = (2 * cin * lx * item + 2 * ntaps * tile_co * cin * item
           + 2 * lacc * 4 + tile_co * lacc * 4 + 2 * cblk * ho * wo * 4
           + (1 << 20))
    if est > vmem_limit:
        raise NotImplementedError(
            "per-image block exceeds VMEM budget; TODO(synk): spatial row tiling")

    # ---- pass 1: statistics only (no conv intermediate in HBM) -------------
    stats = pl.pallas_call(
        functools.partial(_stats_kernel, offsets=offsets, lacc=lacc, count=count),
        out_shape=jax.ShapeDtypeStruct((n, coutp, 2), jnp.float32),
        grid=(n, num_co),
        in_specs=[
            pl.BlockSpec((1, cin, lx), lambda b, c: (b, 0, 0)),
            pl.BlockSpec((ntaps, tile_co, cin), lambda b, c: (0, c, 0)),
            pl.BlockSpec((1, lacc), lambda b, c: (0, 0)),
        ],
        out_specs=pl.BlockSpec((1, tile_co, 2), lambda b, c: (b, c, 0)),
        compiler_params=cparams,
    )(xf, wt, mask)

    # ---- tiny finalize in XLA: Chan/Welford combine -> folded BN affine ----
    s = stats[..., 0]                                 # (N, Coutp) per-image sums
    m2 = stats[..., 1]                                # (N, Coutp) centered M2
    total = n * count
    mean = jnp.sum(s, axis=0) / total
    mu_i = s / count
    var = (jnp.sum(m2, axis=0) + count * jnp.sum((mu_i - mean) ** 2, axis=0)) / total
    inv_std = lax.rsqrt(var + eps)                    # biased var (PyTorch BN fwd)
    gamma_p = jnp.pad(gamma.astype(jnp.float32), (0, coutp - cout))
    beta_p = jnp.pad(beta.astype(jnp.float32), (0, coutp - cout))
    scale = gamma_p * inv_std
    shift = beta_p - mean * scale
    aff = jnp.stack([scale, shift], axis=1)           # (Coutp, 2)

    # ---- pass 2: recompute conv, fused BN + activation, dense output -------
    slope = float(negative_slope) if leaky else 0.0
    out_flat = pl.pallas_call(
        functools.partial(_apply_kernel, offsets=offsets, lacc=lacc, wp=wp,
                          wo=wo, ho=ho, cblk=cblk, slope=slope),
        out_shape=jax.ShapeDtypeStruct((n, n_out_c, ho * wo), jnp.float32),
        grid=(n, num_co),
        in_specs=[
            pl.BlockSpec((1, cin, lx), lambda b, c: (b, 0, 0)),
            pl.BlockSpec((ntaps, tile_co, cin), lambda b, c: (0, c, 0)),
            pl.BlockSpec((tile_co, 2), lambda b, c: (c, 0)),
        ],
        out_specs=pl.BlockSpec((1, cblk, ho * wo), lambda b, c: (b, c, 0)),
        scratch_shapes=[pltpu.VMEM((tile_co, lacc), jnp.float32)],
        compiler_params=cparams,
    )(xf, wt, aff)

    if n_out_c != cout:
        out_flat = out_flat[:, :cout, :]              # only when Cout tiled & padded
    # Free reshape (splits the trailing dim, layout-preserving) -> NCHW.
    return out_flat.reshape(n, cout, ho, wo)


# ---------------------------------------------------------------------------
# Pure-JAX reference (matches the PyTorch module forward).
# ---------------------------------------------------------------------------
def _reference(x_nchw, weight, bias, gamma, beta, *, padding=1, eps=1e-5,
               negative_slope=0.2, leaky=True):
    conv = lax.conv_general_dilated(
        x_nchw, weight, window_strides=(1, 1),
        padding=[(padding, padding), (padding, padding)],
        dimension_numbers=("NCHW", "OIHW", "NCHW"),
        precision=lax.Precision.HIGHEST)
    conv = conv + bias.reshape(1, -1, 1, 1)
    mean = jnp.mean(conv, axis=(0, 2, 3), keepdims=True)
    var = jnp.mean((conv - mean) ** 2, axis=(0, 2, 3), keepdims=True)
    y = (conv - mean) * lax.rsqrt(var + eps)
    y = y * gamma.reshape(1, -1, 1, 1) + beta.reshape(1, -1, 1, 1)
    if leaky:
        return jnp.where(y >= 0, y, negative_slope * y)
    return jnp.maximum(y, 0.0)


if __name__ == "__main__":
    # ConvNormRelu(in_channels=4, out_channels=8, kernel_size=3) defaults:
    # padding=(1,'zeros'), stride=1, norm='batch', leaky=True, conv_type='forward'
    key = jax.random.PRNGKey(0)
    k_x, k_w, k_b, k_g, k_be, k_x2 = jax.random.split(key, 6)

    N, Cin, H, W = 2, 4, 16, 16
    Cout, KH, KW = 8, 3, 3

    x = jax.random.normal(k_x, (N, Cin, H, W), dtype=jnp.float32)
    weight = jax.random.normal(k_w, (Cout, Cin, KH, KW), dtype=jnp.float32) * 0.1
    bias = jax.random.normal(k_b, (Cout,), dtype=jnp.float32) * 0.1
    gamma = 1.0 + 0.1 * jax.random.normal(k_g, (Cout,), dtype=jnp.float32)
    beta = 0.1 * jax.random.normal(k_be, (Cout,), dtype=jnp.float32)

    ref = jax.block_until_ready(_reference(x, weight, bias, gamma, beta))

    # 1) f32 MXU inputs — tight-ish tolerance.
    out = jax.block_until_ready(
        conv_norm_relu(x, weight, bias, gamma, beta, matmul_dtype=jnp.float32))
    assert out.shape == (N, Cout, H, W)
    assert jnp.allclose(out, ref, atol=2e-2, rtol=2e-2)

    # 2) bf16 MXU inputs (fast path on v6e/v7x) — looser tolerance.
    out_bf16 = jax.block_until_ready(conv_norm_relu(x, weight, bias, gamma, beta))
    assert out_bf16.shape == (N, Cout, H, W)
    assert jnp.allclose(out_bf16, ref, atol=7e-2, rtol=7e-2)

    # 3) Odd spatial size: exercises the valid-column masking, the unaligned
    #    lane slices and the non-128-multiple output lane width.
    x2 = jax.random.normal(k_x2, (N, Cin, 15, 15), dtype=jnp.float32)
    ref2 = jax.block_until_ready(_reference(x2, weight, bias, gamma, beta))
    out2 = jax.block_until_ready(
        conv_norm_relu(x2, weight, bias, gamma, beta, matmul_dtype=jnp.float32))
    assert out2.shape == (N, Cout, 15, 15)
    assert jnp.allclose(out2, ref2, atol=2e-2, rtol=2e-2)

    print("KERNEL_OK")
</pallas_src>

<mosaic_0001>
module attributes {stable_mosaic.version = 11 : i64} {
  func.func @_stats_kernel(%arg0: i32, %arg1: i32, %arg2: memref<1x4x326xf32, #tpu.memory_space<vmem>>, %arg3: memref<9x8x4xf32, #tpu.memory_space<vmem>>, %arg4: memref<1x288xf32, #tpu.memory_space<vmem>>, %arg5: memref<1x8x2xf32, #tpu.memory_space<vmem>>) attributes {dimension_semantics = [#tpu.dimension_semantics<parallel>, #tpu.dimension_semantics<arbitrary>], iteration_bounds = array<i64: 2, 1>, scalar_prefetch = 0 : i64, scratch_operands = 0 : i64, tpu.core_type = #tpu.core_type<tc>, window_params = [{transform_indices = @transform_0, window_bounds = array<i64: 1, 4, 326>}, {transform_indices = @transform_1, window_bounds = array<i64: 9, 8, 4>}, {pipeline_mode = #tpu.pipeline_mode<synchronous>, transform_indices = @transform_2, window_bounds = array<i64: 1, 288>}, {transform_indices = @transform_3, window_bounds = array<i64: 1, 8, 2>}]} {
    %c0 = arith.constant 0 : index
    %c0_0 = arith.constant 0 : index
    %c0_1 = arith.constant 0 : index
    %0 = vector.load %arg2[%c0, %c0_0, %c0_1] : memref<1x4x326xf32, #tpu.memory_space<vmem>>, vector<1x4x288xf32>
    %1 = vector.shape_cast %0 : vector<1x4x288xf32> to vector<4x288xf32>
    %c0_2 = arith.constant 0 : index
    %c0_3 = arith.constant 0 : index
    %c0_4 = arith.constant 0 : index
    %2 = vector.load %arg3[%c0_2, %c0_3, %c0_4] : memref<9x8x4xf32, #tpu.memory_space<vmem>>, vector<1x8x4xf32>
    %3 = vector.shape_cast %2 : vector<1x8x4xf32> to vector<8x4xf32>
    %cst = arith.constant dense<0.000000e+00> : vector<8x288xf32>
    %4 = tpu.matmul %3, %1, %cst {dimension_numbers = #tpu.dot_dimension_numbers<[1], [0], [0], [1], [0, 0, 1, 1], [], []>} : vector<8x4xf32>, vector<4x288xf32>, vector<8x288xf32> -> vector<8x288xf32>
    %c0_5 = arith.constant 0 : index
    %c0_6 = arith.constant 0 : index
    %c1 = arith.constant 1 : index
    %5 = vector.load %arg2[%c0_5, %c0_6, %c1] : memref<1x4x326xf32, #tpu.memory_space<vmem>>, vector<1x4x288xf32>
    %6 = vector.shape_cast %5 : vector<1x4x288xf32> to vector<4x288xf32>
    %c1_7 = arith.constant 1 : index
    %c0_8 = arith.constant 0 : index
    %c0_9 = arith.constant 0 : index
    %7 = vector.load %arg3[%c1_7, %c0_8, %c0_9] : memref<9x8x4xf32, #tpu.memory_space<vmem>>, vector<1x8x4xf32>
    %8 = vector.shape_cast %7 : vector<1x8x4xf32> to vector<8x4xf32>
    %cst_10 = arith.constant dense<0.000000e+00> : vector<8x288xf32>
    %9 = tpu.matmul %8, %6, %cst_10 {dimension_numbers = #tpu.dot_dimension_numbers<[1], [0], [0], [1], [0, 0, 1, 1], [], []>} : vector<8x4xf32>, vector<4x288xf32>, vector<8x288xf32> -> vector<8x288xf32>
    %10 = arith.addf %4, %9 : vector<8x288xf32>
    %c0_11 = arith.constant 0 : index
    %c0_12 = arith.constant 0 : index
    %c2 = arith.constant 2 : index
    %11 = vector.load %arg2[%c0_11, %c0_12, %c2] : memref<1x4x326xf32, #tpu.memory_space<vmem>>, vector<1x4x288xf32>
    %12 = vector.shape_cast %11 : vector<1x4x288xf32> to vector<4x288xf32>
    %c2_13 = arith.constant 2 : index
    %c0_14 = arith.constant 0 : index
    %c0_15 = arith.constant 0 : index
    %13 = vector.load %arg3[%c2_13, %c0_14, %c0_15] : memref<9x8x4xf32, #tpu.memory_space<vmem>>, vector<1x8x4xf32>
    %14 = vector.shape_cast %13 : vector<1x8x4xf32> to vector<8x4xf32>
    %cst_16 = arith.constant dense<0.000000e+00> : vector<8x288xf32>
    %15 = tpu.matmul %14, %12, %cst_16 {dimension_numbers = #tpu.dot_dimension_numbers<[1], [0], [0], [1], [0, 0, 1, 1], [], []>} : vector<8x4xf32>, vector<4x288xf32>, vector<8x288xf32> -> vector<8x288xf32>
    %16 = arith.addf %10, %15 : vector<8x288xf32>
    %c0_17 = arith.constant 0 : index
    %c0_18 = arith.constant 0 : index
    %c18 = arith.constant 18 : index
    %17 = vector.load %arg2[%c0_17, %c0_18, %c18] : memref<1x4x326xf32, #tpu.memory_space<vmem>>, vector<1x4x288xf32>
    %18 = vector.shape_cast %17 : vector<1x4x288xf32> to vector<4x288xf32>
    %c3 = arith.constant 3 : index
    %c0_19 = arith.constant 0 : index
    %c0_20 = arith.constant 0 : index
    %19 = vector.load %arg3[%c3, %c0_19, %c0_20] : memref<9x8x4xf32, #tpu.memory_space<vmem>>, vector<1x8x4xf32>
    %20 = vector.shape_cast %19 : vector<1x8x4xf32> to vector<8x4xf32>
    %cst_21 = arith.constant dense<0.000000e+00> : vector<8x288xf32>
    %21 = tpu.matmul %20, %18, %cst_21 {dimension_numbers = #tpu.dot_dimension_numbers<[1], [0], [0], [1], [0, 0, 1, 1], [], []>} : vector<8x4xf32>, vector<4x288xf32>, vector<8x288xf32> -> vector<8x288xf32>
    %22 = arith.addf %16, %21 : vector<8x288xf32>
    %c0_22 = arith.constant 0 : index
    %c0_23 = arith.constant 0 : index
    %c19 = arith.constant 19 : index
    %23 = vector.load %arg2[%c0_22, %c0_23, %c19] : memref<1x4x326xf32, #tpu.memory_space<vmem>>, vector<1x4x288xf32>
    %24 = vector.shape_cast %23 : vector<1x4x288xf32> to vector<4x288xf32>
    %c4 = arith.constant 4 : index
    %c0_24 = arith.constant 0 : index
    %c0_25 = arith.constant 0 : index
    %25 = vector.load %arg3[%c4, %c0_24, %c0_25] : memref<9x8x4xf32, #tpu.memory_space<vmem>>, vector<1x8x4xf32>
    %26 = vector.shape_cast %25 : vector<1x8x4xf32> to vector<8x4xf32>
    %cst_26 = arith.constant dense<0.000000e+00> : vector<8x288xf32>
    %27 = tpu.matmul %26, %24, %cst_26 {dimension_numbers = #tpu.dot_dimension_numbers<[1], [0], [0], [1], [0, 0, 1, 1], [], []>} : vector<8x4xf32>, vector<4x288xf32>, vector<8x288xf32> -> vector<8x288xf32>
    %28 = arith.addf %22, %27 : vector<8x288xf32>
    %c0_27 = arith.constant 0 : index
    %c0_28 = arith.constant 0 : index
    %c20 = arith.constant 20 : index
    %29 = vector.load %arg2[%c0_27, %c0_28, %c20] : memref<1x4x326xf32, #tpu.memory_space<vmem>>, vector<1x4x288xf32>
    %30 = vector.shape_cast %29 : vector<1x4x288xf32> to vector<4x288xf32>
    %c5 = arith.constant 5 : index
    %c0_29 = arith.constant 0 : index
    %c0_30 = arith.constant 0 : index
    %31 = vector.load %arg3[%c5, %c0_29, %c0_30] : memref<9x8x4xf32, #tpu.memory_space<vmem>>, vector<1x8x4xf32>
    %32 = vector.shape_cast %31 : vector<1x8x4xf32> to vector<8x4xf32>
    %cst_31 = arith.constant dense<0.000000e+00> : vector<8x288xf32>
    %33 = tpu.matmul %32, %30, %cst_31 {dimension_numbers = #tpu.dot_dimension_numbers<[1], [0], [0], [1], [0, 0, 1, 1], [], []>} : vector<8x4xf32>, vector<4x288xf32>, vector<8x288xf32> -> vector<8x288xf32>
    %34 = arith.addf %28, %33 : vector<8x288xf32>
    %c0_32 = arith.constant 0 : index
    %c0_33 = arith.constant 0 : index
    %c36 = arith.constant 36 : index
    %35 = vector.load %arg2[%c0_32, %c0_33, %c36] : memref<1x4x326xf32, #tpu.memory_space<vmem>>, vector<1x4x288xf32>
    %36 = vector.shape_cast %35 : vector<1x4x288xf32> to vector<4x288xf32>
    %c6 = arith.constant 6 : index
    %c0_34 = arith.constant 0 : index
    %c0_35 = arith.constant 0 : index
    %37 = vector.load %arg3[%c6, %c0_34, %c0_35] : memref<9x8x4xf32, #tpu.memory_space<vmem>>, vector<1x8x4xf32>
    %38 = vector.shape_cast %37 : vector<1x8x4xf32> to vector<8x4xf32>
    %cst_36 = arith.constant dense<0.000000e+00> : vector<8x288xf32>
    %39 = tpu.matmul %38, %36, %cst_36 {dimension_numbers = #tpu.dot_dimension_numbers<[1], [0], [0], [1], [0, 0, 1, 1], [], []>} : vector<8x4xf32>, vector<4x288xf32>, vector<8x288xf32> -> vector<8x288xf32>
    %40 = arith.addf %34, %39 : vector<8x288xf32>
    %c0_37 = arith.constant 0 : index
    %c0_38 = arith.constant 0 : index
    %c37 = arith.constant 37 : index
    %41 = vector.load %arg2[%c0_37, %c0_38, %c37] : memref<1x4x326xf32, #tpu.memory_space<vmem>>, vector<1x4x288xf32>
    %42 = vector.shape_cast %41 : vector<1x4x288xf32> to vector<4x288xf32>
    %c7 = arith.constant 7 : index
    %c0_39 = arith.constant 0 : index
    %c0_40 = arith.constant 0 : index
    %43 = vector.load %arg3[%c7, %c0_39, %c0_40] : memref<9x8x4xf32, #tpu.memory_space<vmem>>, vector<1x8x4xf32>
    %44 = vector.shape_cast %43 : vector<1x8x4xf32> to vector<8x4xf32>
    %cst_41 = arith.constant dense<0.000000e+00> : vector<8x288xf32>
    %45 = tpu.matmul %44, %42, %cst_41 {dimension_numbers = #tpu.dot_dimension_numbers<[1], [0], [0], [1], [0, 0, 1, 1], [], []>} : vector<8x4xf32>, vector<4x288xf32>, vector<8x288xf32> -> vector<8x288xf32>
    %46 = arith.addf %40, %45 : vector<8x288xf32>
    %c0_42 = arith.constant 0 : index
    %c0_43 = arith.constant 0 : index
    %c38 = arith.constant 38 : index
    %47 = vector.load %arg2[%c0_42, %c0_43, %c38] : memref<1x4x326xf32, #tpu.memory_space<vmem>>, vector<1x4x288xf32>
    %48 = vector.shape_cast %47 : vector<1x4x288xf32> to vector<4x288xf32>
    %c8 = arith.constant 8 : index
    %c0_44 = arith.constant 0 : index
    %c0_45 = arith.constant 0 : index
    %49 = vector.load %arg3[%c8, %c0_44, %c0_45] : memref<9x8x4xf32, #tpu.memory_space<vmem>>, vector<1x8x4xf32>
    %50 = vector.shape_cast %49 : vector<1x8x4xf32> to vector<8x4xf32>
    %cst_46 = arith.constant dense<0.000000e+00> : vector<8x288xf32>
    %51 = tpu.matmul %50, %48, %cst_46 {dimension_numbers = #tpu.dot_dimension_numbers<[1], [0], [0], [1], [0, 0, 1, 1], [], []>} : vector<8x4xf32>, vector<4x288xf32>, vector<8x288xf32> -> vector<8x288xf32>
    %52 = arith.addf %46, %51 : vector<8x288xf32>
    %c0_47 = arith.constant 0 : index
    %c0_48 = arith.constant 0 : index
    %53 = vector.load %arg4[%c0_47, %c0_48] : memref<1x288xf32, #tpu.memory_space<vmem>>, vector<1x288xf32>
    %54 = vector.broadcast %53 : vector<1x288xf32> to vector<8x288xf32>
    %55 = arith.mulf %52, %54 : vector<8x288xf32>
    %cst_49 = arith.constant dense<0.000000e+00> : vector<8xf32>
    %56 = vector.multi_reduction <add>, %55, %cst_49 [1] : vector<8x288xf32> to vector<8xf32>
    %57 = vector.shape_cast %56 : vector<8xf32> to vector<8x1xf32>
    %cst_50 = arith.constant 3.906250e-03 : f32
    %58 = vector.broadcast %cst_50 : f32 to vector<8x1xf32>
    %59 = arith.mulf %57, %58 : vector<8x1xf32>
    %60 = vector.broadcast %59 : vector<8x1xf32> to vector<8x288xf32>
    %61 = arith.subf %52, %60 : vector<8x288xf32>
    %62 = arith.mulf %61, %61 : vector<8x288xf32>
    %63 = vector.broadcast %53 : vector<1x288xf32> to vector<8x288xf32>
    %64 = arith.mulf %62, %63 : vector<8x288xf32>
    %cst_51 = arith.constant dense<0.000000e+00> : vector<8xf32>
    %65 = vector.multi_reduction <add>, %64, %cst_51 [1] : vector<8x288xf32> to vector<8xf32>
    %66 = vector.shape_cast %65 : vector<8xf32> to vector<8x1xf32>
    %c0_52 = arith.constant 0 : index
    %c0_53 = arith.constant 0 : index
    %c0_54 = arith.constant 0 : index
    %67 = vector.load %arg5[%c0_52, %c0_53, %c0_54] : memref<1x8x2xf32, #tpu.memory_space<vmem>>, vector<1x8x1xf32>
    %68 = vector.shape_cast %67 : vector<1x8x1xf32> to vector<8x1xf32>
    %69 = vector.shape_cast %57 : vector<8x1xf32> to vector<1x8x1xf32>
    tpu.vector_store %arg5[%c0_52, %c0_53, %c0_54], %69 {strides = array<i32>} : memref<1x8x2xf32, #tpu.memory_space<vmem>>, vector<1x8x1xf32>,
    %c0_55 = arith.constant 0 : index
    %c0_56 = arith.constant 0 : index
    %c1_57 = arith.constant 1 : index
    %70 = vector.load %arg5[%c0_55, %c0_56, %c1_57] : memref<1x8x2xf32, #tpu.memory_space<vmem>>, vector<1x8x1xf32>
    %71 = vector.shape_cast %70 : vector<1x8x1xf32> to vector<8x1xf32>
    %72 = vector.shape_cast %66 : vector<8x1xf32> to vector<1x8x1xf32>
    tpu.vector_store %arg5[%c0_55, %c0_56, %c1_57], %72 {strides = array<i32>} : memref<1x8x2xf32, #tpu.memory_space<vmem>>, vector<1x8x1xf32>,
    return
  }
  func.func @transform_0(%arg0: i32, %arg1: i32) -> (i32, i32, i32) {
    %c0_i32 = arith.constant 0 : i32
    %c0_i32_0 = arith.constant 0 : i32
    %c0_i32_1 = arith.constant 0 : i32
    return %arg0, %c0_i32, %c0_i32_0 : i32, i32, i32
  }
  func.func @transform_1(%arg0: i32, %arg1: i32) -> (i32, i32, i32) {
    %c0_i32 = arith.constant 0 : i32
    %c0_i32_0 = arith.constant 0 : i32
    %c0_i32_1 = arith.constant 0 : i32
    return %c0_i32, %arg1, %c0_i32_0 : i32, i32, i32
  }
  func.func @transform_2(%arg0: i32, %arg1: i32) -> (i32, i32) {
    %c0_i32 = arith.constant 0 : i32
    %c0_i32_0 = arith.constant 0 : i32
    %c0_i32_1 = arith.constant 0 : i32
    return %c0_i32, %c0_i32_0 : i32, i32
  }
  func.func @transform_3(%arg0: i32, %arg1: i32) -> (i32, i32, i32) {
    %c0_i32 = arith.constant 0 : i32
    %c0_i32_0 = arith.constant 0 : i32
    return %arg0, %arg1, %c0_i32 : i32, i32, i32
  }
}

module attributes {stable_mosaic.version = 11 : i64} {
  func.func @_apply_kernel(%arg0: i32, %arg1: i32, %arg2: memref<1x4x326xf32, #tpu.memory_space<vmem>>, %arg3: memref<9x8x4xf32, #tpu.memory_space<vmem>>, %arg4: memref<8x2xf32, #tpu.memory_space<vmem>>, %arg5: memref<1x8x256xf32, #tpu.memory_space<vmem>>, %arg6: memref<8x288xf32, #tpu.memory_space<vmem>>) attributes {dimension_semantics = [#tpu.dimension_semantics<parallel>, #tpu.dimension_semantics<arbitrary>], iteration_bounds = array<i64: 2, 1>, scalar_prefetch = 0 : i64, scratch_operands = 1 : i64, tpu.core_type = #tpu.core_type<tc>, window_params = [{transform_indices = @transform_0, window_bounds = array<i64: 1, 4, 326>}, {transform_indices = @transform_1, window_bounds = array<i64: 9, 8, 4>}, {transform_indices = @transform_2, window_bounds = array<i64: 8, 2>}, {transform_indices = @transform_3, window_bounds = array<i64: 1, 8, 256>}]} {
    %c0 = arith.constant 0 : index
    %c0_0 = arith.constant 0 : index
    %c0_1 = arith.constant 0 : index
    %0 = vector.load %arg2[%c0, %c0_0, %c0_1] : memref<1x4x326xf32, #tpu.memory_space<vmem>>, vector<1x4x288xf32>
    %1 = vector.shape_cast %0 : vector<1x4x288xf32> to vector<4x288xf32>
    %c0_2 = arith.constant 0 : index
    %c0_3 = arith.constant 0 : index
    %c0_4 = arith.constant 0 : index
    %2 = vector.load %arg3[%c0_2, %c0_3, %c0_4] : memref<9x8x4xf32, #tpu.memory_space<vmem>>, vector<1x8x4xf32>
    %3 = vector.shape_cast %2 : vector<1x8x4xf32> to vector<8x4xf32>
    %cst = arith.constant dense<0.000000e+00> : vector<8x288xf32>
    %4 = tpu.matmul %3, %1, %cst {dimension_numbers = #tpu.dot_dimension_numbers<[1], [0], [0], [1], [0, 0, 1, 1], [], []>} : vector<8x4xf32>, vector<4x288xf32>, vector<8x288xf32> -> vector<8x288xf32>
    %c0_5 = arith.constant 0 : index
    %c0_6 = arith.constant 0 : index
    %c1 = arith.constant 1 : index
    %5 = vector.load %arg2[%c0_5, %c0_6, %c1] : memref<1x4x326xf32, #tpu.memory_space<vmem>>, vector<1x4x288xf32>
    %6 = vector.shape_cast %5 : vector<1x4x288xf32> to vector<4x288xf32>
    %c1_7 = arith.constant 1 : index
    %c0_8 = arith.constant 0 : index
    %c0_9 = arith.constant 0 : index
    %7 = vector.load %arg3[%c1_7, %c0_8, %c0_9] : memref<9x8x4xf32, #tpu.memory_space<vmem>>, vector<1x8x4xf32>
    %8 = vector.shape_cast %7 : vector<1x8x4xf32> to vector<8x4xf32>
    %cst_10 = arith.constant dense<0.000000e+00> : vector<8x288xf32>
    %9 = tpu.matmul %8, %6, %cst_10 {dimension_numbers = #tpu.dot_dimension_numbers<[1], [0], [0], [1], [0, 0, 1, 1], [], []>} : vector<8x4xf32>, vector<4x288xf32>, vector<8x288xf32> -> vector<8x288xf32>
    %10 = arith.addf %4, %9 : vector<8x288xf32>
    %c0_11 = arith.constant 0 : index
    %c0_12 = arith.constant 0 : index
    %c2 = arith.constant 2 : index
    %11 = vector.load %arg2[%c0_11, %c0_12, %c2] : memref<1x4x326xf32, #tpu.memory_space<vmem>>, vector<1x4x288xf32>
    %12 = vector.shape_cast %11 : vector<1x4x288xf32> to vector<4x288xf32>
    %c2_13 = arith.constant 2 : index
    %c0_14 = arith.constant 0 : index
    %c0_15 = arith.constant 0 : index
    %13 = vector.load %arg3[%c2_13, %c0_14, %c0_15] : memref<9x8x4xf32, #tpu.memory_space<vmem>>, vector<1x8x4xf32>
    %14 = vector.shape_cast %13 : vector<1x8x4xf32> to vector<8x4xf32>
    %cst_16 = arith.constant dense<0.000000e+00> : vector<8x288xf32>
    %15 = tpu.matmul %14, %12, %cst_16 {dimension_numbers = #tpu.dot_dimension_numbers<[1], [0], [0], [1], [0, 0, 1, 1], [], []>} : vector<8x4xf32>, vector<4x288xf32>, vector<8x288xf32> -> vector<8x288xf32>
    %16 = arith.addf %10, %15 : vector<8x288xf32>
    %c0_17 = arith.constant 0 : index
    %c0_18 = arith.constant 0 : index
    %c18 = arith.constant 18 : index
    %17 = vector.load %arg2[%c0_17, %c0_18, %c18] : memref<1x4x326xf32, #tpu.memory_space<vmem>>, vector<1x4x288xf32>
    %18 = vector.shape_cast %17 : vector<1x4x288xf32> to vector<4x288xf32>
    %c3 = arith.constant 3 : index
    %c0_19 = arith.constant 0 : index
    %c0_20 = arith.constant 0 : index
    %19 = vector.load %arg3[%c3, %c0_19, %c0_20] : memref<9x8x4xf32, #tpu.memory_space<vmem>>, vector<1x8x4xf32>
    %20 = vector.shape_cast %19 : vector<1x8x4xf32> to vector<8x4xf32>
    %cst_21 = arith.constant dense<0.000000e+00> : vector<8x288xf32>
    %21 = tpu.matmul %20, %18, %cst_21 {dimension_numbers = #tpu.dot_dimension_numbers<[1], [0], [0], [1], [0, 0, 1, 1], [], []>} : vector<8x4xf32>, vector<4x288xf32>, vector<8x288xf32> -> vector<8x288xf32>
    %22 = arith.addf %16, %21 : vector<8x288xf32>
    %c0_22 = arith.constant 0 : index
    %c0_23 = arith.constant 0 : index
    %c19 = arith.constant 19 : index
    %23 = vector.load %arg2[%c0_22, %c0_23, %c19] : memref<1x4x326xf32, #tpu.memory_space<vmem>>, vector<1x4x288xf32>
    %24 = vector.shape_cast %23 : vector<1x4x288xf32> to vector<4x288xf32>
    %c4 = arith.constant 4 : index
    %c0_24 = arith.constant 0 : index
    %c0_25 = arith.constant 0 : index
    %25 = vector.load %arg3[%c4, %c0_24, %c0_25] : memref<9x8x4xf32, #tpu.memory_space<vmem>>, vector<1x8x4xf32>
    %26 = vector.shape_cast %25 : vector<1x8x4xf32> to vector<8x4xf32>
    %cst_26 = arith.constant dense<0.000000e+00> : vector<8x288xf32>
    %27 = tpu.matmul %26, %24, %cst_26 {dimension_numbers = #tpu.dot_dimension_numbers<[1], [0], [0], [1], [0, 0, 1, 1], [], []>} : vector<8x4xf32>, vector<4x288xf32>, vector<8x288xf32> -> vector<8x288xf32>
    %28 = arith.addf %22, %27 : vector<8x288xf32>
    %c0_27 = arith.constant 0 : index
    %c0_28 = arith.constant 0 : index
    %c20 = arith.constant 20 : index
    %29 = vector.load %arg2[%c0_27, %c0_28, %c20] : memref<1x4x326xf32, #tpu.memory_space<vmem>>, vector<1x4x288xf32>
    %30 = vector.shape_cast %29 : vector<1x4x288xf32> to vector<4x288xf32>
    %c5 = arith.constant 5 : index
    %c0_29 = arith.constant 0 : index
    %c0_30 = arith.constant 0 : index
    %31 = vector.load %arg3[%c5, %c0_29, %c0_30] : memref<9x8x4xf32, #tpu.memory_space<vmem>>, vector<1x8x4xf32>
    %32 = vector.shape_cast %31 : vector<1x8x4xf32> to vector<8x4xf32>
    %cst_31 = arith.constant dense<0.000000e+00> : vector<8x288xf32>
    %33 = tpu.matmul %32, %30, %cst_31 {dimension_numbers = #tpu.dot_dimension_numbers<[1], [0], [0], [1], [0, 0, 1, 1], [], []>} : vector<8x4xf32>, vector<4x288xf32>, vector<8x288xf32> -> vector<8x288xf32>
    %34 = arith.addf %28, %33 : vector<8x288xf32>
    %c0_32 = arith.constant 0 : index
    %c0_33 = arith.constant 0 : index
    %c36 = arith.constant 36 : index
    %35 = vector.load %arg2[%c0_32, %c0_33, %c36] : memref<1x4x326xf32, #tpu.memory_space<vmem>>, vector<1x4x288xf32>
    %36 = vector.shape_cast %35 : vector<1x4x288xf32> to vector<4x288xf32>
    %c6 = arith.constant 6 : index
    %c0_34 = arith.constant 0 : index
    %c0_35 = arith.constant 0 : index
    %37 = vector.load %arg3[%c6, %c0_34, %c0_35] : memref<9x8x4xf32, #tpu.memory_space<vmem>>, vector<1x8x4xf32>
    %38 = vector.shape_cast %37 : vector<1x8x4xf32> to vector<8x4xf32>
    %cst_36 = arith.constant dense<0.000000e+00> : vector<8x288xf32>
    %39 = tpu.matmul %38, %36, %cst_36 {dimension_numbers = #tpu.dot_dimension_numbers<[1], [0], [0], [1], [0, 0, 1, 1], [], []>} : vector<8x4xf32>, vector<4x288xf32>, vector<8x288xf32> -> vector<8x288xf32>
    %40 = arith.addf %34, %39 : vector<8x288xf32>
    %c0_37 = arith.constant 0 : index
    %c0_38 = arith.constant 0 : index
    %c37 = arith.constant 37 : index
    %41 = vector.load %arg2[%c0_37, %c0_38, %c37] : memref<1x4x326xf32, #tpu.memory_space<vmem>>, vector<1x4x288xf32>
    %42 = vector.shape_cast %41 : vector<1x4x288xf32> to vector<4x288xf32>
    %c7 = arith.constant 7 : index
    %c0_39 = arith.constant 0 : index
    %c0_40 = arith.constant 0 : index
    %43 = vector.load %arg3[%c7, %c0_39, %c0_40] : memref<9x8x4xf32, #tpu.memory_space<vmem>>, vector<1x8x4xf32>
    %44 = vector.shape_cast %43 : vector<1x8x4xf32> to vector<8x4xf32>
    %cst_41 = arith.constant dense<0.000000e+00> : vector<8x288xf32>
    %45 = tpu.matmul %44, %42, %cst_41 {dimension_numbers = #tpu.dot_dimension_numbers<[1], [0], [0], [1], [0, 0, 1, 1], [], []>} : vector<8x4xf32>, vector<4x288xf32>, vector<8x288xf32> -> vector<8x288xf32>
    %46 = arith.addf %40, %45 : vector<8x288xf32>
    %c0_42 = arith.constant 0 : index
    %c0_43 = arith.constant 0 : index
    %c38 = arith.constant 38 : index
    %47 = vector.load %arg2[%c0_42, %c0_43, %c38] : memref<1x4x326xf32, #tpu.memory_space<vmem>>, vector<1x4x288xf32>
    %48 = vector.shape_cast %47 : vector<1x4x288xf32> to vector<4x288xf32>
    %c8 = arith.constant 8 : index
    %c0_44 = arith.constant 0 : index
    %c0_45 = arith.constant 0 : index
    %49 = vector.load %arg3[%c8, %c0_44, %c0_45] : memref<9x8x4xf32, #tpu.memory_space<vmem>>, vector<1x8x4xf32>
    %50 = vector.shape_cast %49 : vector<1x8x4xf32> to vector<8x4xf32>
    %cst_46 = arith.constant dense<0.000000e+00> : vector<8x288xf32>
    %51 = tpu.matmul %50, %48, %cst_46 {dimension_numbers = #tpu.dot_dimension_numbers<[1], [0], [0], [1], [0, 0, 1, 1], [], []>} : vector<8x4xf32>, vector<4x288xf32>, vector<8x288xf32> -> vector<8x288xf32>
    %52 = arith.addf %46, %51 : vector<8x288xf32>
    %c0_47 = arith.constant 0 : index
    %c0_48 = arith.constant 0 : index
    %53 = vector.load %arg4[%c0_47, %c0_48] : memref<8x2xf32, #tpu.memory_space<vmem>>, vector<8x1xf32>
    %c0_49 = arith.constant 0 : index
    %c1_50 = arith.constant 1 : index
    %54 = vector.load %arg4[%c0_49, %c1_50] : memref<8x2xf32, #tpu.memory_space<vmem>>, vector<8x1xf32>
    %55 = vector.broadcast %53 : vector<8x1xf32> to vector<8x288xf32>
    %56 = arith.mulf %52, %55 : vector<8x288xf32>
    %57 = vector.broadcast %54 : vector<8x1xf32> to vector<8x288xf32>
    %58 = arith.addf %56, %57 : vector<8x288xf32>
    %cst_51 = arith.constant 0.000000e+00 : f32
    %59 = vector.broadcast %cst_51 : f32 to vector<8x288xf32>
    %60 = arith.cmpf oge, %58, %59 : vector<8x288xf32>
    %cst_52 = arith.constant 2.000000e-01 : f32
    %61 = vector.broadcast %cst_52 : f32 to vector<8x288xf32>
    %62 = arith.mulf %61, %58 : vector<8x288xf32>
    %63 = arith.select %60, %58, %62 : vector<8x288xi1>, vector<8x288xf32>
    %c0_53 = arith.constant 0 : index
    %c0_54 = arith.constant 0 : index
    %64 = vector.load %arg6[%c0_53, %c0_54] : memref<8x288xf32, #tpu.memory_space<vmem>>, vector<8x288xf32>
    tpu.vector_store %arg6[%c0_53, %c0_54], %63 {strides = array<i32>} : memref<8x288xf32, #tpu.memory_space<vmem>>, vector<8x288xf32>,
    %c0_55 = arith.constant 0 : index
    %c0_56 = arith.constant 0 : index
    %65 = vector.load %arg6[%c0_55, %c0_56] : memref<8x288xf32, #tpu.memory_space<vmem>>, vector<8x16xf32>
    %c0_57 = arith.constant 0 : index
    %c0_58 = arith.constant 0 : index
    %c0_59 = arith.constant 0 : index
    %66 = vector.load %arg5[%c0_57, %c0_58, %c0_59] : memref<1x8x256xf32, #tpu.memory_space<vmem>>, vector<1x8x16xf32>
    %67 = vector.shape_cast %66 : vector<1x8x16xf32> to vector<8x16xf32>
    %68 = vector.shape_cast %65 : vector<8x16xf32> to vector<1x8x16xf32>
    tpu.vector_store %arg5[%c0_57, %c0_58, %c0_59], %68 {strides = array<i32>} : memref<1x8x256xf32, #tpu.memory_space<vmem>>, vector<1x8x16xf32>,
    %c0_60 = arith.constant 0 : index
    %c18_61 = arith.constant 18 : index
    %69 = vector.load %arg6[%c0_60, %c18_61] : memref<8x288xf32, #tpu.memory_space<vmem>>, vector<8x16xf32>
    %c0_62 = arith.constant 0 : index
    %c0_63 = arith.constant 0 : index
    %c16 = arith.constant 16 : index
    %70 = vector.load %arg5[%c0_62, %c0_63, %c16] : memref<1x8x256xf32, #tpu.memory_space<vmem>>, vector<1x8x16xf32>
    %71 = vector.shape_cast %70 : vector<1x8x16xf32> to vector<8x16xf32>
    %72 = vector.shape_cast %69 : vector<8x16xf32> to vector<1x8x16xf32>
    tpu.vector_store %arg5[%c0_62, %c0_63, %c16], %72 {strides = array<i32>} : memref<1x8x256xf32, #tpu.memory_space<vmem>>, vector<1x8x16xf32>,
    %c0_64 = arith.constant 0 : index
    %c36_65 = arith.constant 36 : index
    %73 = vector.load %arg6[%c0_64, %c36_65] : memref<8x288xf32, #tpu.memory_space<vmem>>, vector<8x16xf32>
    %c0_66 = arith.constant 0 : index
    %c0_67 = arith.constant 0 : index
    %c32 = arith.constant 32 : index
    %74 = vector.load %arg5[%c0_66, %c0_67, %c32] : memref<1x8x256xf32, #tpu.memory_space<vmem>>, vector<1x8x16xf32>
    %75 = vector.shape_cast %74 : vector<1x8x16xf32> to vector<8x16xf32>
    %76 = vector.shape_cast %73 : vector<8x16xf32> to vector<1x8x16xf32>
    tpu.vector_store %arg5[%c0_66, %c0_67, %c32], %76 {strides = array<i32>} : memref<1x8x256xf32, #tpu.memory_space<vmem>>, vector<1x8x16xf32>,
    %c0_68 = arith.constant 0 : index
    %c54 = arith.constant 54 : index
    %77 = vector.load %arg6[%c0_68, %c54] : memref<8x288xf32, #tpu.memory_space<vmem>>, vector<8x16xf32>
    %c0_69 = arith.constant 0 : index
    %c0_70 = arith.constant 0 : index
    %c48 = arith.constant 48 : index
    %78 = vector.load %arg5[%c0_69, %c0_70, %c48] : memref<1x8x256xf32, #tpu.memory_space<vmem>>, vector<1x8x16xf32>
    %79 = vector.shape_cast %78 : vector<1x8x16xf32> to vector<8x16xf32>
    %80 = vector.shape_cast %77 : vector<8x16xf32> to vector<1x8x16xf32>
    tpu.vector_store %arg5[%c0_69, %c0_70, %c48], %80 {strides = array<i32>} : memref<1x8x256xf32, #tpu.memory_space<vmem>>, vector<1x8x16xf32>,
    %c0_71 = arith.constant 0 : index
    %c72 = arith.constant 72 : index
    %81 = vector.load %arg6[%c0_71, %c72] : memref<8x288xf32, #tpu.memory_space<vmem>>, vector<8x16xf32>
    %c0_72 = arith.constant 0 : index
    %c0_73 = arith.constant 0 : index
    %c64 = arith.constant 64 : index
    %82 = vector.load %arg5[%c0_72, %c0_73, %c64] : memref<1x8x256xf32, #tpu.memory_space<vmem>>, vector<1x8x16xf32>
    %83 = vector.shape_cast %82 : vector<1x8x16xf32> to vector<8x16xf32>
    %84 = vector.shape_cast %81 : vector<8x16xf32> to vector<1x8x16xf32>
    tpu.vector_store %arg5[%c0_72, %c0_73, %c64], %84 {strides = array<i32>} : memref<1x8x256xf32, #tpu.memory_space<vmem>>, vector<1x8x16xf32>,
    %c0_74 = arith.constant 0 : index
    %c90 = arith.constant 90 : index
    %85 = vector.load %arg6[%c0_74, %c90] : memref<8x288xf32, #tpu.memory_space<vmem>>, vector<8x16xf32>
    %c0_75 = arith.constant 0 : index
    %c0_76 = arith.constant 0 : index
    %c80 = arith.constant 80 : index
    %86 = vector.load %arg5[%c0_75, %c0_76, %c80] : memref<1x8x256xf32, #tpu.memory_space<vmem>>, vector<1x8x16xf32>
    %87 = vector.shape_cast %86 : vector<1x8x16xf32> to vector<8x16xf32>
    %88 = vector.shape_cast %85 : vector<8x16xf32> to vector<1x8x16xf32>
    tpu.vector_store %arg5[%c0_75, %c0_76, %c80], %88 {strides = array<i32>} : memref<1x8x256xf32, #tpu.memory_space<vmem>>, vector<1x8x16xf32>,
    %c0_77 = arith.constant 0 : index
    %c108 = arith.constant 108 : index
    %89 = vector.load %arg6[%c0_77, %c108] : memref<8x288xf32, #tpu.memory_space<vmem>>, vector<8x16xf32>
    %c0_78 = arith.constant 0 : index
    %c0_79 = arith.constant 0 : index
    %c96 = arith.constant 96 : index
    %90 = vector.load %arg5[%c0_78, %c0_79, %c96] : memref<1x8x256xf32, #tpu.memory_space<vmem>>, vector<1x8x16xf32>
    %91 = vector.shape_cast %90 : vector<1x8x16xf32> to vector<8x16xf32>
    %92 = vector.shape_cast %89 : vector<8x16xf32> to vector<1x8x16xf32>
    tpu.vector_store %arg5[%c0_78, %c0_79, %c96], %92 {strides = array<i32>} : memref<1x8x256xf32, #tpu.memory_space<vmem>>, vector<1x8x16xf32>,
    %c0_80 = arith.constant 0 : index
    %c126 = arith.constant 126 : index
    %93 = vector.load %arg6[%c0_80, %c126] : memref<8x288xf32, #tpu.memory_space<vmem>>, vector<8x16xf32>
    %c0_81 = arith.constant 0 : index
    %c0_82 = arith.constant 0 : index
    %c112 = arith.constant 112 : index
    %94 = vector.load %arg5[%c0_81, %c0_82, %c112] : memref<1x8x256xf32, #tpu.memory_space<vmem>>, vector<1x8x16xf32>
    %95 = vector.shape_cast %94 : vector<1x8x16xf32> to vector<8x16xf32>
    %96 = vector.shape_cast %93 : vector<8x16xf32> to vector<1x8x16xf32>
    tpu.vector_store %arg5[%c0_81, %c0_82, %c112], %96 {strides = array<i32>} : memref<1x8x256xf32, #tpu.memory_space<vmem>>, vector<1x8x16xf32>,
    %c0_83 = arith.constant 0 : index
    %c144 = arith.constant 144 : index
    %97 = vector.load %arg6[%c0_83, %c144] : memref<8x288xf32, #tpu.memory_space<vmem>>, vector<8x16xf32>
    %c0_84 = arith.constant 0 : index
    %c0_85 = arith.constant 0 : index
    %c128 = arith.constant 128 : index
    %98 = vector.load %arg5[%c0_84, %c0_85, %c128] : memref<1x8x256xf32, #tpu.memory_space<vmem>>, vector<1x8x16xf32>
    %99 = vector.shape_cast %98 : vector<1x8x16xf32> to vector<8x16xf32>
    %100 = vector.shape_cast %97 : vector<8x16xf32> to vector<1x8x16xf32>
    tpu.vector_store %arg5[%c0_84, %c0_85, %c128], %100 {strides = array<i32>} : memref<1x8x256xf32, #tpu.memory_space<vmem>>, vector<1x8x16xf32>,
    %c0_86 = arith.constant 0 : index
    %c162 = arith.constant 162 : index
    %101 = vector.load %arg6[%c0_86, %c162] : memref<8x288xf32, #tpu.memory_space<vmem>>, vector<8x16xf32>
    %c0_87 = arith.constant 0 : index
    %c0_88 = arith.constant 0 : index
    %c144_89 = arith.constant 144 : index
    %102 = vector.load %arg5[%c0_87, %c0_88, %c144_89] : memref<1x8x256xf32, #tpu.memory_space<vmem>>, vector<1x8x16xf32>
    %103 = vector.shape_cast %102 : vector<1x8x16xf32> to vector<8x16xf32>
    %104 = vector.shape_cast %101 : vector<8x16xf32> to vector<1x8x16xf32>
    tpu.vector_store %arg5[%c0_87, %c0_88, %c144_89], %104 {strides = array<i32>} : memref<1x8x256xf32, #tpu.memory_space<vmem>>, vector<1x8x16xf32>,
    %c0_90 = arith.constant 0 : index
    %c180 = arith.constant 180 : index
    %105 = vector.load %arg6[%c0_90, %c180] : memref<8x288xf32, #tpu.memory_space<vmem>>, vector<8x16xf32>
    %c0_91 = arith.constant 0 : index
    %c0_92 = arith.constant 0 : index
    %c160 = arith.constant 160 : index
    %106 = vector.load %arg5[%c0_91, %c0_92, %c160] : memref<1x8x256xf32, #tpu.memory_space<vmem>>, vector<1x8x16xf32>
    %107 = vector.shape_cast %106 : vector<1x8x16xf32> to vector<8x16xf32>
    %108 = vector.shape_cast %105 : vector<8x16xf32> to vector<1x8x16xf32>
    tpu.vector_store %arg5[%c0_91, %c0_92, %c160], %108 {strides = array<i32>} : memref<1x8x256xf32, #tpu.memory_space<vmem>>, vector<1x8x16xf32>,
    %c0_93 = arith.constant 0 : index
    %c198 = arith.constant 198 : index
    %109 = vector.load %arg6[%c0_93, %c198] : memref<8x288xf32, #tpu.memory_space<vmem>>, vector<8x16xf32>
    %c0_94 = arith.constant 0 : index
    %c0_95 = arith.constant 0 : index
    %c176 = arith.constant 176 : index
    %110 = vector.load %arg5[%c0_94, %c0_95, %c176] : memref<1x8x256xf32, #tpu.memory_space<vmem>>, vector<1x8x16xf32>
    %111 = vector.shape_cast %110 : vector<1x8x16xf32> to vector<8x16xf32>
    %112 = vector.shape_cast %109 : vector<8x16xf32> to vector<1x8x16xf32>
    tpu.vector_store %arg5[%c0_94, %c0_95, %c176], %112 {strides = array<i32>} : memref<1x8x256xf32, #tpu.memory_space<vmem>>, vector<1x8x16xf32>,
    %c0_96 = arith.constant 0 : index
    %c216 = arith.constant 216 : index
    %113 = vector.load %arg6[%c0_96, %c216] : memref<8x288xf32, #tpu.memory_space<vmem>>, vector<8x16xf32>
    %c0_97 = arith.constant 0 : index
    %c0_98 = arith.constant 0 : index
    %c192 = arith.constant 192 : index
    %114 = vector.load %arg5[%c0_97, %c0_98, %c192] : memref<1x8x256xf32, #tpu.memory_space<vmem>>, vector<1x8x16xf32>
    %115 = vector.shape_cast %114 : vector<1x8x16xf32> to vector<8x16xf32>
    %116 = vector.shape_cast %113 : vector<8x16xf32> to vector<1x8x16xf32>
    tpu.vector_store %arg5[%c0_97, %c0_98, %c192], %116 {strides = array<i32>} : memref<1x8x256xf32, #tpu.memory_space<vmem>>, vector<1x8x16xf32>,
    %c0_99 = arith.constant 0 : index
    %c234 = arith.constant 234 : index
    %117 = vector.load %arg6[%c0_99, %c234] : memref<8x288xf32, #tpu.memory_space<vmem>>, vector<8x16xf32>
    %c0_100 = arith.constant 0 : index
    %c0_101 = arith.constant 0 : index
    %c208 = arith.constant 208 : index
    %118 = vector.load %arg5[%c0_100, %c0_101, %c208] : memref<1x8x256xf32, #tpu.memory_space<vmem>>, vector<1x8x16xf32>
    %119 = vector.shape_cast %118 : vector<1x8x16xf32> to vector<8x16xf32>
    %120 = vector.shape_cast %117 : vector<8x16xf32> to vector<1x8x16xf32>
    tpu.vector_store %arg5[%c0_100, %c0_101, %c208], %120 {strides = array<i32>} : memref<1x8x256xf32, #tpu.memory_space<vmem>>, vector<1x8x16xf32>,
    %c0_102 = arith.constant 0 : index
    %c252 = arith.constant 252 : index
    %121 = vector.load %arg6[%c0_102, %c252] : memref<8x288xf32, #tpu.memory_space<vmem>>, vector<8x16xf32>
    %c0_103 = arith.constant 0 : index
    %c0_104 = arith.constant 0 : index
    %c224 = arith.constant 224 : index
    %122 = vector.load %arg5[%c0_103, %c0_104, %c224] : memref<1x8x256xf32, #tpu.memory_space<vmem>>, vector<1x8x16xf32>
    %123 = vector.shape_cast %122 : vector<1x8x16xf32> to vector<8x16xf32>
    %124 = vector.shape_cast %121 : vector<8x16xf32> to vector<1x8x16xf32>
    tpu.vector_store %arg5[%c0_103, %c0_104, %c224], %124 {strides = array<i32>} : memref<1x8x256xf32, #tpu.memory_space<vmem>>, vector<1x8x16xf32>,
    %c0_105 = arith.constant 0 : index
    %c270 = arith.constant 270 : index
    %125 = vector.load %arg6[%c0_105, %c270] : memref<8x288xf32, #tpu.memory_space<vmem>>, vector<8x16xf32>
    %c0_106 = arith.constant 0 : index
    %c0_107 = arith.constant 0 : index
    %c240 = arith.constant 240 : index
    %126 = vector.load %arg5[%c0_106, %c0_107, %c240] : memref<1x8x256xf32, #tpu.memory_space<vmem>>, vector<1x8x16xf32>
    %127 = vector.shape_cast %126 : vector<1x8x16xf32> to vector<8x16xf32>
    %128 = vector.shape_cast %125 : vector<8x16xf32> to vector<1x8x16xf32>
    tpu.vector_store %arg5[%c0_106, %c0_107, %c240], %128 {strides = array<i32>} : memref<1x8x256xf32, #tpu.memory_space<vmem>>, vector<1x8x16xf32>,
    return
  }
  func.func @transform_0(%arg0: i32, %arg1: i32) -> (i32, i32, i32) {
    %c0_i32 = arith.constant 0 : i32
    %c0_i32_0 = arith.constant 0 : i32
    %c0_i32_1 = arith.constant 0 : i32
    return %arg0, %c0_i32, %c0_i32_0 : i32, i32, i32
  }
  func.func @transform_1(%arg0: i32, %arg1: i32) -> (i32, i32, i32) {
    %c0_i32 = arith.constant 0 : i32
    %c0_i32_0 = arith.constant 0 : i32
    %c0_i32_1 = arith.constant 0 : i32
    return %c0_i32, %arg1, %c0_i32_0 : i32, i32, i32
  }
  func.func @transform_2(%arg0: i32, %arg1: i32) -> (i32, i32) {
    %c0_i32 = arith.constant 0 : i32
    %c0_i32_0 = arith.constant 0 : i32
    return %arg1, %c0_i32 : i32, i32
  }
  func.func @transform_3(%arg0: i32, %arg1: i32) -> (i32, i32, i32) {
    %c0_i32 = arith.constant 0 : i32
    %c0_i32_0 = arith.constant 0 : i32
    return %arg0, %arg1, %c0_i32 : i32, i32, i32
  }
}

</mosaic_0001>

<llo_original>
// kernel: conv_norm_relu.3
$region0: #{conv_norm_relu.3}
  #allocation0 [shape = 'u32[]', space=smem, size = 0x4, offset = 0x4, fixed_abs, tag = 'smem constant byte address 0x4 - core index']
  #allocation1 [shape = 'u32[144,128]{1,0:T(1,128)}', space=vmem, size = 0x12000, scoped, tag = 'internal scratch']
  #allocation2 [shape = 'f32[8,288]{1,0:T(8,128)}', space=vmem, size = 0x3000, scoped, tag = 'scratch operand']
  %s0 = inlined_call_operand.vmem [shape: f32[2,4,326], index: 0, kind: input, shape index: {}]
  %s1 = inlined_call_operand.vmem [shape: f32[9,8,4], index: 1, kind: input, shape index: {}]
  %s2 = inlined_call_operand.vmem [shape: f32[8,2], index: 2, kind: input, shape index: {}]
  %s3 = inlined_call_operand.vmem [shape: f32[2,8,256], index: 3, kind: output, shape index: {}]
  %s4 = sld [smem:[#allocation0]]
  $region45: #{conv_norm_relu.3} parent=0
    _
  %s6 = ssub.s32 1, %s4
  %s7 = scalar_select 0, %s6, %s4
  loop: start=0, step=1, limit=4
  $region2: #{conv_norm_relu.3} parent=0 // loop_pre_header
    _
  $region3: #{conv_norm_relu.3} parent=0 // loop_header
    %s9 = sphi 0, %s13
    %p10 = scmp.ge.s32.totalorder %s9, 4
    %s16 = sphi 0, %s28
    %s17 = sphi 0, %s24
    %s18 = sphi 0, %s16
    %s19 = sphi 0, %s17
    %s20 = sphi 0, %s18
    %s21 = sphi 0, %s19
    %s31 = sphi 0, %s33
    %s34 = sphi 0, %s31
    %s35 = sphi 0, %s34
    %s51 = sphi 0, %s35
    %s57 = sphi 0, %s59
    %s60 = sphi 0, %s57
    %s61 = sphi 0, %s60
    %s77 = sphi 0, %s61
    %s83 = sphi 0, %s85
    %s86 = sphi 0, %s83
    %s87 = sphi 0, %s86
    %s103 = sphi 0, %s87
    %s111 = sphi 0, %s113
    %s114 = sphi 0, %s111
    %s115 = sphi 0, %s114
    %s131 = sphi 0, %s115
  $region4: #{conv_norm_relu.3} parent=0 // loop_header_branch
    %12 = sbr.rel (%p10) target = $region8
  $region5: #{conv_norm_relu.3} parent=0 // loop_body
    %s14 = ssub.s32 %s9, 1
    %s15 = ssub.s32 %s9, 2
    %s22 = sadd.s32 1, %s17
    %p23 = scmp.ge.s32.totalorder %s22, 1
    %s24 = scalar_select %p23, 0, %s22
    %s25 = sadd.s32 1, %s16
    %s26 = scalar_select %p23, %s25, %s16
    %p27 = scmp.ge.s32.totalorder %s26, 2
    %s28 = scalar_select %p27, 0, %s26
    %s29 = ssub.s32 %s16, %s28
    %p30 = scmp.eq.s32.totalorder %s29, 0
    %s32 = sadd.s32 %s31, 1
    %s33 = scalar_select %p30, %s31, %s32
    %p36 = pneg %p30
    %p37 = scmp.eq.s32.totalorder %s9, 1
    %p38 = por %p36, %p37
    %p39 = scmp.ne.s32.totalorder %s31, %s34
    %p40 = scmp.eq.s32.totalorder %s9, 0
    %p41 = por %p39, %p40
    %p42 = scmp.ne.s32.totalorder %s31, %s34
    %p43 = scmp.eq.s32.totalorder %s14, 1
    %p44 = por %p42, %p43
    %p45 = scmp.ne.s32.totalorder %s34, %s35
    %p46 = scmp.eq.s32.totalorder %s14, 0
    %p47 = por %p45, %p46
    %p48 = scmp.ne.s32.totalorder %s34, %s35
    %p49 = scmp.eq.s32.totalorder %s15, 1
    %p50 = por %p48, %p49
    %p52 = scmp.ne.s32.totalorder %s35, %s51
    %p53 = scmp.eq.s32.totalorder %s15, 0
    %p54 = por %p52, %p53
    %s55 = ssub.s32 %s17, %s24
    %p56 = scmp.eq.s32.totalorder %s55, 0
    %s58 = sadd.s32 %s57, 1
    %s59 = scalar_select %p56, %s57, %s58
    %p62 = pneg %p56
    %p63 = scmp.eq.s32.totalorder %s9, 1
    %p64 = por %p62, %p63
    %p65 = scmp.ne.s32.totalorder %s57, %s60
    %p66 = scmp.eq.s32.totalorder %s9, 0
    %p67 = por %p65, %p66
    %p68 = scmp.ne.s32.totalorder %s57, %s60
    %p69 = scmp.eq.s32.totalorder %s14, 1
    %p70 = por %p68, %p69
    %p71 = scmp.ne.s32.totalorder %s60, %s61
    %p72 = scmp.eq.s32.totalorder %s14, 0
    %p73 = por %p71, %p72
    %p74 = scmp.ne.s32.totalorder %s60, %s61
    %p75 = scmp.eq.s32.totalorder %s15, 1
    %p76 = por %p74, %p75
    %p78 = scmp.ne.s32.totalorder %s61, %s77
    %p79 = scmp.eq.s32.totalorder %s15, 0
    %p80 = por %p78, %p79
    %s81 = ssub.s32 %s17, %s24
    %p82 = scmp.eq.s32.totalorder %s81, 0
    %s84 = sadd.s32 %s83, 1
    %s85 = scalar_select %p82, %s83, %s84
    %p88 = pneg %p82
    %p89 = scmp.eq.s32.totalorder %s9, 1
    %p90 = por %p88, %p89
    %p91 = scmp.ne.s32.totalorder %s83, %s86
    %p92 = scmp.eq.s32.totalorder %s9, 0
    %p93 = por %p91, %p92
    %p94 = scmp.ne.s32.totalorder %s83, %s86
    %p95 = scmp.eq.s32.totalorder %s14, 1
    %p96 = por %p94, %p95
    %p97 = scmp.ne.s32.totalorder %s86, %s87
    %p98 = scmp.eq.s32.totalorder %s14, 0
    %p99 = por %p97, %p98
    %p100 = scmp.ne.s32.totalorder %s86, %s87
    %p101 = scmp.eq.s32.totalorder %s15, 1
    %p102 = por %p100, %p101
    %p104 = scmp.ne.s32.totalorder %s87, %s103
    %p105 = scmp.eq.s32.totalorder %s15, 0
    %p106 = por %p104, %p105
    %s107 = ssub.s32 %s16, %s28
    %s108 = ssub.s32 %s17, %s24
    %s109 = sor.u32 %s107, %s108
    %p110 = scmp.eq.s32.totalorder %s109, 0
    %s112 = sadd.s32 %s111, 1
    %s113 = scalar_select %p110, %s111, %s112
    %p116 = pneg %p110
    %p117 = scmp.eq.s32.totalorder %s9, 1
    %p118 = por %p116, %p117
    %p119 = scmp.ne.s32.totalorder %s111, %s114
    %p120 = scmp.eq.s32.totalorder %s9, 0
    %p121 = por %p119, %p120
    %p122 = scmp.ne.s32.totalorder %s111, %s114
    %p123 = scmp.eq.s32.totalorder %s14, 1
    %p124 = por %p122, %p123
    %p125 = scmp.ne.s32.totalorder %s114, %s115
    %p126 = scmp.eq.s32.totalorder %s14, 0
    %p127 = por %p125, %p126
    %p128 = scmp.ne.s32.totalorder %s114, %s115
    %p129 = scmp.eq.s32.totalorder %s15, 1
    %p130 = por %p128, %p129
    %p132 = scmp.ne.s32.totalorder %s115, %s131
    %p133 = scmp.eq.s32.totalorder %s15, 0
    %p134 = por %p132, %p133
    %p135 = scmp.le.s32.totalorder 1, %s9
    %p136 = scmp.lt.s32.totalorder %s9, 3
    %p137 = pnand %p135, %p136
    %p138 = pneg %p137
    // Predicated region
    $region9: #{conv_norm_relu.3} parent=5 // pred_check
      _
    $region10: #{conv_norm_relu.3} parent=5 // pred_check_branch
      %140 = sbr.rel (%p137) target = $region12
    $region11: #{conv_norm_relu.3} parent=5 // pred_region
      %s141 = ssub.s32 %s9, 1
      // Predicated region
      $region13: #{conv_norm_relu.3} parent=11 // pred_check
        %p142 = pneg %p73
      $region14: #{conv_norm_relu.3} parent=11 // pred_check_branch
        %144 = sbr.rel (%p142) target = $region16
      $region15: #{conv_norm_relu.3} parent=11 // pred_region
        %p145 = scmp.lt.s32.totalorder %s19, 0
        %s146 = scalar_select %p145, %s19, 0
        %s147 = smul.addr %s146, 8
        %s148 = scalar_lea.vmem %s1, %s147
      $region16: #{conv_norm_relu.3} parent=11 // pred_fallthru
        _
      // Predicated region
      $region17: #{conv_norm_relu.3} parent=11 // pred_check
        %p149 = pneg %p99
      $region18: #{conv_norm_relu.3} parent=11 // pred_check_branch
        %151 = sbr.rel (%p149) target = $region20
      $region19: #{conv_norm_relu.3} parent=11 // pred_region
        %p152 = scmp.lt.s32.totalorder %s19, 0
        %s153 = scalar_select %p152, %s19, 0
        %s154 = smul.addr %s153, 8
        %s155 = scalar_lea.vmem %s2, %s154
      $region20: #{conv_norm_relu.3} parent=11 // pred_fallthru
        _
    $region12: #{conv_norm_relu.3} parent=5 // pred_fallthru
      _
    %p156 = scmp.lt.s32.totalorder %s9, 2
    // Predicated region
    $region21: #{conv_norm_relu.3} parent=5 // pred_check
      %p157 = pneg %p156
    $region22: #{conv_norm_relu.3} parent=5 // pred_check_branch
      %159 = sbr.rel (%p157) target = $region24
    $region23: #{conv_norm_relu.3} parent=5 // pred_region
      // Predicated region
      $region25: #{conv_norm_relu.3} parent=23 // pred_check
        %p160 = pneg %p41
      $region26: #{conv_norm_relu.3} parent=23 // pred_check_branch
        %162 = sbr.rel (%p160) target = $region28
      $region27: #{conv_norm_relu.3} parent=23 // pred_region
        %p163 = scmp.lt.s32.totalorder %s16, 1
        %s164 = scalar_select %p163, %s16, 1
        %s165 = smul.addr %s164, 3
        %s166 = smul.addr %s165, 4
        %s167 = scalar_lea.vmem %s0, %s166
      $region28: #{conv_norm_relu.3} parent=23 // pred_fallthru
        _
    $region24: #{conv_norm_relu.3} parent=5 // pred_fallthru
      _
    %p168 = scmp.le.s32.totalorder 1, %s9
    %p169 = scmp.lt.s32.totalorder %s9, 3
    %p170 = pnand %p168, %p169
    %p171 = pneg %p170
    // Predicated region
    $region29: #{conv_norm_relu.3} parent=5 // pred_check
      _
    $region30: #{conv_norm_relu.3} parent=5 // pred_check_branch
      %173 = sbr.rel (%p170) target = $region32
    $region31: #{conv_norm_relu.3} parent=5 // pred_region
      %s174 = ssub.s32 %s9, 1
      %p175 = scmp.lt.s32.totalorder %s18, 1
      %s176 = scalar_select %p175, %s18, 1
      %s177 = smul.addr %s176, 3
      %s178 = smul.addr %s177, 4
      %s179 = scalar_lea.vmem %s0, %s178
      %p180 = pneg %p47
      %p181 = pneg %p44
      %p182 = scmp.lt.s32.totalorder %s19, 0
      %s183 = scalar_select %p182, %s19, 0
      %s184 = smul.addr %s183, 8
      %s185 = scalar_lea.vmem %s1, %s184
      %p186 = pneg %p73
      %p187 = pneg %p70
      %p188 = scmp.lt.s32.totalorder %s19, 0
      %s189 = scalar_select %p188, %s19, 0
      %s190 = smul.addr %s189, 8
      %s191 = scalar_lea.vmem %s2, %s190
      %p192 = pneg %p99
      %p193 = pneg %p96
      %p194 = pneg %p127
      %p195 = pneg %p124
      %p196 = scmp.lt.s32.totalorder %s18, 1
      %s197 = scalar_select %p196, %s18, 1
      %p198 = scmp.lt.s32.totalorder %s19, 0
      %s199 = scalar_select %p198, %s19, 0
      %s200 = smul.addr %s199, 2
      %s201 = smul.addr %s197, 2
      %s202 = sadd.s32 %s200, %s201
      %s203 = smul.addr %s202, 8
      %s204 = scalar_lea.vmem %s3, %s203
      %p205 = scmp.lt.s32.totalorder %s18, 1
      %s206 = scalar_select %p205, %s18, 1
      %s207 = smul.addr %s206, 3
      %s208 = smul.addr %s207, 4
      %s209 = scalar_lea.vmem %s0, %s208
      %p210 = scmp.lt.s32.totalorder %s19, 0
      %s211 = scalar_select %p210, %s19, 0
      %s212 = smul.addr %s211, 8
      %s213 = scalar_lea.vmem %s1, %s212
      %p214 = scmp.lt.s32.totalorder %s19, 0
      %s215 = scalar_select %p214, %s19, 0
      %s216 = smul.addr %s215, 8
      %s217 = scalar_lea.vmem %s2, %s216
      %p218 = scmp.lt.s32.totalorder %s18, 1
      %s219 = scalar_select %p218, %s18, 1
      %p220 = scmp.lt.s32.totalorder %s19, 0
      %s221 = scalar_select %p220, %s19, 0
      %s222 = smul.addr %s221, 2
      %s223 = smul.addr %s219, 2
      %s224 = sadd.s32 %s222, %s223
      %s225 = smul.addr %s224, 8
      %s226 = scalar_lea.vmem %s3, %s225
      %v227 = vld [vmem:[%s209] sm:$0xff]
      %v228 = vld [vmem:[%s209 + $0x8] sm:$0xf]
      %v229 = vld [vmem:[%s213] sm:$0xff]
      %s230 = scalar_lea.vmem %s213, 8
      %v231 = vld [vmem:[%s230] sm:$0xff]
      %v234 = vcombine.high %v227, %v227
      %235 = vrot.lane.b32.xlu0 %v227, 127
      %v236 = vpop.permute.xlu0 %235
      %237 = vrot.lane.b32.xlu0 %v234, 127
      %v238 = vpop.permute.xlu0 %237
      %239 = vrot.lane.b32.xlu0 %v228, 127
      %v240 = vpop.permute.xlu0 %239
      %vm241 = vcmask 1039360
      %v242 = vsel %vm241, %v236, %v238
      %v243 = vsel %vm241, %v238, %v240
      %vm244 = vcmask 31744
      %v246 = vsel %vm244, %v231, 0
      %vm248 = vcmask 1043456
      %v249 = vsel %vm248, %v242, 0
      %v251 = vsel %vm248, %v243, 0
      %v253 = vsel %vm248, %v240, 0
      %255 = vmatprep.subr.mxu0 0.0
      %256 = vmatpush1.msra.mxu0 0.0
      %257 = vmatprep.subr.mxu0 0.0
      %258 = vmatpush1.msra.mxu0 0.0
      %259 = vmatprep.subr.mxu0 0.0
      %260 = vmatpush1.msra.mxu0 0.0
      %261 = vmatprep.subr.mxu0 0.0
      %262 = vmatpush1.msra.mxu0 0.0
      %263 = vmatprep.subr.mxu0 0.0
      %264 = vmatpush1.msra.mxu0 0.0
      %265 = vmatprep.subr.mxu0 0.0
      %266 = vmatpush1.msra.mxu0 0.0
      %267 = vmatprep.subr.mxu0 0.0
      %268 = vmatpush1.msra.mxu0 0.0
      %269 = vmatprep.subr.mxu0 0.0
      %270 = vmatpush1.msra.mxu0 0.0
      %271 = vmatprep.subr.mxu0 0.0
      %272 = vmatpush1.msra.mxu0 0.0
      %273 = vmatprep.subr.mxu0 0.0
      %274 = vmatpush1.msra.mxu0 0.0
      %275 = vmatprep.subr.mxu0 0.0
      %276 = vmatpush1.msra.mxu0 0.0
      %277 = vmatprep.subr.mxu0 0.0
      %278 = vmatpush1.msra.mxu0 0.0
      %279 = vmatprep.subr.mxu0 0.0
      %280 = vmatpush1.msra.mxu0 0.0
      %281 = vmatprep.subr.mxu0 0.0
      %282 = vmatpush1.msra.mxu0 0.0
      %283 = vmatprep.subr.mxu0 0.0
      %284 = vmatpush1.msra.mxu0 0.0
      %285 = vmatprep.subr.mxu0 %v251
      %286 = vmatpush1.msra.mxu0 %v249
      %287 = vmatprep.subr.mxu0 0.0
      %288 = vmatpush2.msra.mxu0 0.0
      %289 = vmatprep.subr.mxu0 0.0
      %290 = vmatpush2.msra.mxu0 0.0
      %291 = vmatprep.subr.mxu0 0.0
      %292 = vmatpush2.msra.mxu0 0.0
      %293 = vmatprep.subr.mxu0 0.0
      %294 = vmatpush2.msra.mxu0 0.0
      %295 = vmatprep.subr.mxu0 0.0
      %296 = vmatpush2.msra.mxu0 0.0
      %297 = vmatprep.subr.mxu0 0.0
      %298 = vmatpush2.msra.mxu0 0.0
      %299 = vmatprep.subr.mxu0 0.0
      %300 = vmatpush2.msra.mxu0 0.0
      %301 = vmatprep.subr.mxu0 0.0
      %302 = vmatpush2.msra.mxu0 0.0
      %303 = vmatprep.subr.mxu0 0.0
      %304 = vmatpush2.msra.mxu0 0.0
      %305 = vmatprep.subr.mxu0 0.0
      %306 = vmatpush2.msra.mxu0 0.0
      %307 = vmatprep.subr.mxu0 0.0
      %308 = vmatpush2.msra.mxu0 0.0
      %309 = vmatprep.subr.mxu0 0.0
      %310 = vmatpush2.msra.mxu0 0.0
      %311 = vmatprep.subr.mxu0 0.0
      %312 = vmatpush2.msra.mxu0 0.0
      %313 = vmatprep.subr.mxu0 0.0
      %314 = vmatpush2.msra.mxu0 0.0
      %315 = vmatprep.subr.mxu0 0.0
      %316 = vmatpush2.msra.mxu0 0.0
      %317 = vmatprep.subr.mxu0 0.0
      %318 = vmatpush2.msra.mxu0 0.0
      %319 = vmatprep.mubr.f32.mxu0 0.0
      %320 = vmatmul.mubr.f32.gmra.mxu0 %v246
      %v321 = vpop.f32.mrf.mxu0
      %v322 = vadd.f32 0.0, %v321
      %v323 = vpop.f32.mrf.mxu0
      %v324 = vadd.f32 0.0, %v323
      %325 = vdwg.mxu0
      %326 = vmatprep.subr.mxu0 0.0
      %327 = vmatpush1.msra.mxu0 0.0
      %328 = vmatprep.subr.mxu0 0.0
      %329 = vmatpush1.msra.mxu0 0.0
      %330 = vmatprep.subr.mxu0 0.0
      %331 = vmatpush1.msra.mxu0 0.0
      %332 = vmatprep.subr.mxu0 0.0
      %333 = vmatpush1.msra.mxu0 0.0
      %334 = vmatprep.subr.mxu0 0.0
      %335 = vmatpush1.msra.mxu0 0.0
      %336 = vmatprep.subr.mxu0 0.0
      %337 = vmatpush1.msra.mxu0 0.0
      %338 = vmatprep.subr.mxu0 0.0
      %339 = vmatpush1.msra.mxu0 0.0
      %340 = vmatprep.subr.mxu0 0.0
      %341 = vmatpush1.msra.mxu0 0.0
      %342 = vmatprep.subr.mxu0 0.0
      %343 = vmatpush1.msra.mxu0 0.0
      %344 = vmatprep.subr.mxu0 0.0
      %345 = vmatpush1.msra.mxu0 0.0
      %346 = vmatprep.subr.mxu0 0.0
      %347 = vmatpush1.msra.mxu0 0.0
      %348 = vmatprep.subr.mxu0 0.0
      %349 = vmatpush1.msra.mxu0 0.0
      %350 = vmatprep.subr.mxu0 0.0
      %351 = vmatpush1.msra.mxu0 0.0
      %352 = vmatprep.subr.mxu0 0.0
      %353 = vmatpush1.msra.mxu0 0.0
      %354 = vmatprep.subr.mxu0 0.0
      %355 = vmatpush1.msra.mxu0 0.0
      %356 = vmatprep.subr.mxu0 0.0
      %357 = vmatpush1.msra.mxu0 %v253
      %358 = vmatprep.subr.mxu0 0.0
      %359 = vmatpush2.msra.mxu0 0.0
      %360 = vmatprep.subr.mxu0 0.0
      %361 = vmatpush2.msra.mxu0 0.0
      %362 = vmatprep.subr.mxu0 0.0
      %363 = vmatpush2.msra.mxu0 0.0
      %364 = vmatprep.subr.mxu0 0.0
      %365 = vmatpush2.msra.mxu0 0.0
      %366 = vmatprep.subr.mxu0 0.0
      %367 = vmatpush2.msra.mxu0 0.0
      %368 = vmatprep.subr.mxu0 0.0
      %369 = vmatpush2.msra.mxu0 0.0
      %370 = vmatprep.subr.mxu0 0.0
      %371 = vmatpush2.msra.mxu0 0.0
      %372 = vmatprep.subr.mxu0 0.0
      %373 = vmatpush2.msra.mxu0 0.0
      %374 = vmatprep.subr.mxu0 0.0
      %375 = vmatpush2.msra.mxu0 0.0
      %376 = vmatprep.subr.mxu0 0.0
      %377 = vmatpush2.msra.mxu0 0.0
      %378 = vmatprep.subr.mxu0 0.0
      %379 = vmatpush2.msra.mxu0 0.0
      %380 = vmatprep.subr.mxu0 0.0
      %381 = vmatpush2.msra.mxu0 0.0
      %382 = vmatprep.subr.mxu0 0.0
      %383 = vmatpush2.msra.mxu0 0.0
      %384 = vmatprep.subr.mxu0 0.0
      %385 = vmatpush2.msra.mxu0 0.0
      %386 = vmatprep.subr.mxu0 0.0
      %387 = vmatpush2.msra.mxu0 0.0
      %388 = vmatprep.subr.mxu0 0.0
      %389 = vmatpush2.msra.mxu0 0.0
      %390 = vmatprep.mubr.f32.mxu0 0.0
      %391 = vmatmul.mubr.f32.gmra.mxu0 %v246
      %v392 = vpop.f32.mrf.mxu0
      %v393 = vadd.f32 0.0, %v392
      %v394 = vpop.f32.mrf.mxu0
      %395 = vdwg.mxu0
      %v397 = vsel %vm244, %v229, 0
      %v399 = vsel %vm248, %v227, 0
      %v401 = vsel %vm248, %v234, 0
      %v403 = vsel %vm248, %v228, 0
      %405 = vmatprep.subr.mxu0 0.0
      %406 = vmatpush1.msra.mxu0 0.0
      %407 = vmatprep.subr.mxu0 0.0
      %408 = vmatpush1.msra.mxu0 0.0
      %409 = vmatprep.subr.mxu0 0.0
      %410 = vmatpush1.msra.mxu0 0.0
      %411 = vmatprep.subr.mxu0 0.0
      %412 = vmatpush1.msra.mxu0 0.0
      %413 = vmatprep.subr.mxu0 0.0
      %414 = vmatpush1.msra.mxu0 0.0
      %415 = vmatprep.subr.mxu0 0.0
      %416 = vmatpush1.msra.mxu0 0.0
      %417 = vmatprep.subr.mxu0 0.0
      %418 = vmatpush1.msra.mxu0 0.0
      %419 = vmatprep.subr.mxu0 0.0
      %420 = vmatpush1.msra.mxu0 0.0
      %421 = vmatprep.subr.mxu0 0.0
      %422 = vmatpush1.msra.mxu0 0.0
      %423 = vmatprep.subr.mxu0 0.0
      %424 = vmatpush1.msra.mxu0 0.0
      %425 = vmatprep.subr.mxu0 0.0
      %426 = vmatpush1.msra.mxu0 0.0
      %427 = vmatprep.subr.mxu0 0.0
      %428 = vmatpush1.msra.mxu0 0.0
      %429 = vmatprep.subr.mxu0 0.0
      %430 = vmatpush1.msra.mxu0 0.0
      %431 = vmatprep.subr.mxu0 0.0
      %432 = vmatpush1.msra.mxu0 0.0
      %433 = vmatprep.subr.mxu0 0.0
      %434 = vmatpush1.msra.mxu0 0.0
      %435 = vmatprep.subr.mxu0 %v401
      %436 = vmatpush1.msra.mxu0 %v399
      %437 = vmatprep.subr.mxu0 0.0
      %438 = vmatpush2.msra.mxu0 0.0
      %439 = vmatprep.subr.mxu0 0.0
      %440 = vmatpush2.msra.mxu0 0.0
      %441 = vmatprep.subr.mxu0 0.0
      %442 = vmatpush2.msra.mxu0 0.0
      %443 = vmatprep.subr.mxu0 0.0
      %444 = vmatpush2.msra.mxu0 0.0
      %445 = vmatprep.subr.mxu0 0.0
      %446 = vmatpush2.msra.mxu0 0.0
      %447 = vmatprep.subr.mxu0 0.0
      %448 = vmatpush2.msra.mxu0 0.0
      %449 = vmatprep.subr.mxu0 0.0
      %450 = vmatpush2.msra.mxu0 0.0
      %451 = vmatprep.subr.mxu0 0.0
      %452 = vmatpush2.msra.mxu0 0.0
      %453 = vmatprep.subr.mxu0 0.0
      %454 = vmatpush2.msra.mxu0 0.0
      %455 = vmatprep.subr.mxu0 0.0
      %456 = vmatpush2.msra.mxu0 0.0
      %457 = vmatprep.subr.mxu0 0.0
      %458 = vmatpush2.msra.mxu0 0.0
      %459 = vmatprep.subr.mxu0 0.0
      %460 = vmatpush2.msra.mxu0 0.0
      %461 = vmatprep.subr.mxu0 0.0
      %462 = vmatpush2.msra.mxu0 0.0
      %463 = vmatprep.subr.mxu0 0.0
      %464 = vmatpush2.msra.mxu0 0.0
      %465 = vmatprep.subr.mxu0 0.0
      %466 = vmatpush2.msra.mxu0 0.0
      %467 = vmatprep.subr.mxu0 0.0
      %468 = vmatpush2.msra.mxu0 0.0
      %469 = vmatprep.mubr.f32.mxu0 0.0
      %470 = vmatmul.mubr.f32.gmra.mxu0 %v397
      %v471 = vpop.f32.mrf.mxu0
      %v472 = vadd.f32 %v322, %v471
      %v473 = vpop.f32.mrf.mxu0
      %v474 = vadd.f32 %v324, %v473
      %475 = vdwg.mxu0
      %476 = vmatprep.subr.mxu0 0.0
      %477 = vmatpush1.msra.mxu0 0.0
      %478 = vmatprep.subr.mxu0 0.0
      %479 = vmatpush1.msra.mxu0 0.0
      %480 = vmatprep.subr.mxu0 0.0
      %481 = vmatpush1.msra.mxu0 0.0
      %482 = vmatprep.subr.mxu0 0.0
      %483 = vmatpush1.msra.mxu0 0.0
      %484 = vmatprep.subr.mxu0 0.0
      %485 = vmatpush1.msra.mxu0 0.0
      %486 = vmatprep.subr.mxu0 0.0
      %487 = vmatpush1.msra.mxu0 0.0
      %488 = vmatprep.subr.mxu0 0.0
      %489 = vmatpush1.msra.mxu0 0.0
      %490 = vmatprep.subr.mxu0 0.0
      %491 = vmatpush1.msra.mxu0 0.0
      %492 = vmatprep.subr.mxu0 0.0
      %493 = vmatpush1.msra.mxu0 0.0
      %494 = vmatprep.subr.mxu0 0.0
      %495 = vmatpush1.msra.mxu0 0.0
      %496 = vmatprep.subr.mxu0 0.0
      %497 = vmatpush1.msra.mxu0 0.0
      %498 = vmatprep.subr.mxu0 0.0
      %499 = vmatpush1.msra.mxu0 0.0
      %500 = vmatprep.subr.mxu0 0.0
      %501 = vmatpush1.msra.mxu0 0.0
      %502 = vmatprep.subr.mxu0 0.0
      %503 = vmatpush1.msra.mxu0 0.0
      %504 = vmatprep.subr.mxu0 0.0
      %505 = vmatpush1.msra.mxu0 0.0
      %506 = vmatprep.subr.mxu0 0.0
      %507 = vmatpush1.msra.mxu0 %v403
      %508 = vmatprep.subr.mxu0 0.0
      %509 = vmatpush2.msra.mxu0 0.0
      %510 = vmatprep.subr.mxu0 0.0
      %511 = vmatpush2.msra.mxu0 0.0
      %512 = vmatprep.subr.mxu0 0.0
      %513 = vmatpush2.msra.mxu0 0.0
      %514 = vmatprep.subr.mxu0 0.0
      %515 = vmatpush2.msra.mxu0 0.0
      %516 = vmatprep.subr.mxu0 0.0
      %517 = vmatpush2.msra.mxu0 0.0
      %518 = vmatprep.subr.mxu0 0.0
      %519 = vmatpush2.msra.mxu0 0.0
      %520 = vmatprep.subr.mxu0 0.0
      %521 = vmatpush2.msra.mxu0 0.0
      %522 = vmatprep.subr.mxu0 0.0
      %523 = vmatpush2.msra.mxu0 0.0
      %524 = vmatprep.subr.mxu0 0.0
      %525 = vmatpush2.msra.mxu0 0.0
      %526 = vmatprep.subr.mxu0 0.0
      %527 = vmatpush2.msra.mxu0 0.0
      %528 = vmatprep.subr.mxu0 0.0
      %529 = vmatpush2.msra.mxu0 0.0
      %530 = vmatprep.subr.mxu0 0.0
      %531 = vmatpush2.msra.mxu0 0.0
      %532 = vmatprep.subr.mxu0 0.0
      %533 = vmatpush2.msra.mxu0 0.0
      %534 = vmatprep.subr.mxu0 0.0
      %535 = vmatpush2.msra.mxu0 0.0
      %536 = vmatprep.subr.mxu0 0.0
      %537 = vmatpush2.msra.mxu0 0.0
      %538 = vmatprep.subr.mxu0 0.0
      %539 = vmatpush2.msra.mxu0 0.0
      %540 = vmatprep.mubr.f32.mxu0 0.0
      %541 = vmatmul.mubr.f32.gmra.mxu0 %v397
      %v542 = vpop.f32.mrf.mxu0
      %v543 = vadd.f32 %v393, %v542
      %v544 = vpop.f32.mrf.mxu0
      %545 = vdwg.mxu0
      %v546 = vld [vmem:[%s209] sm:$0xff]
      %v547 = vld [vmem:[%s209 + $0x8] sm:$0xf]
      %s548 = scalar_lea.vmem %s213, 16
      %v549 = vld [vmem:[%s548] sm:$0xff]
      %v552 = vcombine.high %v546, %v546
      %553 = vrot.lane.b32.xlu0 %v546, 126
      %v554 = vpop.permute.xlu0 %553
      %555 = vrot.lane.b32.xlu0 %v552, 126
      %v556 = vpop.permute.xlu0 %555
      %557 = vrot.lane.b32.xlu0 %v547, 126
      %v558 = vpop.permute.xlu0 %557
      %vm559 = vcmask 1031168
      %v560 = vsel %vm559, %v554, %v556
      %v561 = vsel %vm559, %v556, %v558
      %v563 = vsel %vm244, %v549, 0
      %v565 = vsel %vm248, %v560, 0
      %v567 = vsel %vm248, %v561, 0
      %v569 = vsel %vm248, %v558, 0
      %571 = vmatprep.subr.mxu0 0.0
      %572 = vmatpush1.msra.mxu0 0.0
      %573 = vmatprep.subr.mxu0 0.0
      %574 = vmatpush1.msra.mxu0 0.0
      %575 = vmatprep.subr.mxu0 0.0
      %576 = vmatpush1.msra.mxu0 0.0
      %577 = vmatprep.subr.mxu0 0.0
      %578 = vmatpush1.msra.mxu0 0.0
      %579 = vmatprep.subr.mxu0 0.0
      %580 = vmatpush1.msra.mxu0 0.0
      %581 = vmatprep.subr.mxu0 0.0
      %582 = vmatpush1.msra.mxu0 0.0
      %583 = vmatprep.subr.mxu0 0.0
      %584 = vmatpush1.msra.mxu0 0.0
      %585 = vmatprep.subr.mxu0 0.0
      %586 = vmatpush1.msra.mxu0 0.0
      %587 = vmatprep.subr.mxu0 0.0
      %588 = vmatpush1.msra.mxu0 0.0
      %589 = vmatprep.subr.mxu0 0.0
      %590 = vmatpush1.msra.mxu0 0.0
      %591 = vmatprep.subr.mxu0 0.0
      %592 = vmatpush1.msra.mxu0 0.0
      %593 = vmatprep.subr.mxu0 0.0
      %594 = vmatpush1.msra.mxu0 0.0
      %595 = vmatprep.subr.mxu0 0.0
      %596 = vmatpush1.msra.mxu0 0.0
      %597 = vmatprep.subr.mxu0 0.0
      %598 = vmatpush1.msra.mxu0 0.0
      %599 = vmatprep.subr.mxu0 0.0
      %600 = vmatpush1.msra.mxu0 0.0
      %601 = vmatprep.subr.mxu0 %v567
      %602 = vmatpush1.msra.mxu0 %v565
      %603 = vmatprep.subr.mxu0 0.0
      %604 = vmatpush2.msra.mxu0 0.0
      %605 = vmatprep.subr.mxu0 0.0
      %606 = vmatpush2.msra.mxu0 0.0
      %607 = vmatprep.subr.mxu0 0.0
      %608 = vmatpush2.msra.mxu0 0.0
      %609 = vmatprep.subr.mxu0 0.0
      %610 = vmatpush2.msra.mxu0 0.0
      %611 = vmatprep.subr.mxu0 0.0
      %612 = vmatpush2.msra.mxu0 0.0
      %613 = vmatprep.subr.mxu0 0.0
      %614 = vmatpush2.msra.mxu0 0.0
      %615 = vmatprep.subr.mxu0 0.0
      %616 = vmatpush2.msra.mxu0 0.0
      %617 = vmatprep.subr.mxu0 0.0
      %618 = vmatpush2.msra.mxu0 0.0
      %619 = vmatprep.subr.mxu0 0.0
      %620 = vmatpush2.msra.mxu0 0.0
      %621 = vmatprep.subr.mxu0 0.0
      %622 = vmatpush2.msra.mxu0 0.0
      %623 = vmatprep.subr.mxu0 0.0
      %624 = vmatpush2.msra.mxu0 0.0
      %625 = vmatprep.subr.mxu0 0.0
      %626 = vmatpush2.msra.mxu0 0.0
      %627 = vmatprep.subr.mxu0 0.0
      %628 = vmatpush2.msra.mxu0 0.0
      %629 = vmatprep.subr.mxu0 0.0
      %630 = vmatpush2.msra.mxu0 0.0
      %631 = vmatprep.subr.mxu0 0.0
      %632 = vmatpush2.msra.mxu0 0.0
      %633 = vmatprep.subr.mxu0 0.0
      %634 = vmatpush2.msra.mxu0 0.0
      %635 = vmatprep.mubr.f32.mxu0 0.0
      %636 = vmatmul.mubr.f32.gmra.mxu0 %v563
      %v637 = vpop.f32.mrf.mxu0
      %v638 = vadd.f32 0.0, %v637
      %v639 = vpop.f32.mrf.mxu0
      %v640 = vadd.f32 0.0, %v639
      %641 = vdwg.mxu0
      %642 = vmatprep.subr.mxu0 0.0
      %643 = vmatpush1.msra.mxu0 0.0
      %644 = vmatprep.subr.mxu0 0.0
      %645 = vmatpush1.msra.mxu0 0.0
      %646 = vmatprep.subr.mxu0 0.0
      %647 = vmatpush1.msra.mxu0 0.0
      %648 = vmatprep.subr.mxu0 0.0
      %649 = vmatpush1.msra.mxu0 0.0
      %650 = vmatprep.subr.mxu0 0.0
      %651 = vmatpush1.msra.mxu0 0.0
      %652 = vmatprep.subr.mxu0 0.0
      %653 = vmatpush1.msra.mxu0 0.0
      %654 = vmatprep.subr.mxu0 0.0
      %655 = vmatpush1.msra.mxu0 0.0
      %656 = vmatprep.subr.mxu0 0.0
      %657 = vmatpush1.msra.mxu0 0.0
      %658 = vmatprep.subr.mxu0 0.0
      %659 = vmatpush1.msra.mxu0 0.0
      %660 = vmatprep.subr.mxu0 0.0
      %661 = vmatpush1.msra.mxu0 0.0
      %662 = vmatprep.subr.mxu0 0.0
      %663 = vmatpush1.msra.mxu0 0.0
      %664 = vmatprep.subr.mxu0 0.0
      %665 = vmatpush1.msra.mxu0 0.0
      %666 = vmatprep.subr.mxu0 0.0
      %667 = vmatpush1.msra.mxu0 0.0
      %668 = vmatprep.subr.mxu0 0.0
      %669 = vmatpush1.msra.mxu0 0.0
      %670 = vmatprep.subr.mxu0 0.0
      %671 = vmatpush1.msra.mxu0 0.0
      %672 = vmatprep.subr.mxu0 0.0
      %673 = vmatpush1.msra.mxu0 %v569
      %674 = vmatprep.subr.mxu0 0.0
      %675 = vmatpush2.msra.mxu0 0.0
      %676 = vmatprep.subr.mxu0 0.0
      %677 = vmatpush2.msra.mxu0 0.0
      %678 = vmatprep.subr.mxu0 0.0
      %679 = vmatpush2.msra.mxu0 0.0
      %680 = vmatprep.subr.mxu0 0.0
      %681 = vmatpush2.msra.mxu0 0.0
      %682 = vmatprep.subr.mxu0 0.0
      %683 = vmatpush2.msra.mxu0 0.0
      %684 = vmatprep.subr.mxu0 0.0
      %685 = vmatpush2.msra.mxu0 0.0
      %686 = vmatprep.subr.mxu0 0.0
      %687 = vmatpush2.msra.mxu0 0.0
      %688 = vmatprep.subr.mxu0 0.0
      %689 = vmatpush2.msra.mxu0 0.0
      %690 = vmatprep.subr.mxu0 0.0
      %691 = vmatpush2.msra.mxu0 0.0
      %692 = vmatprep.subr.mxu0 0.0
      %693 = vmatpush2.msra.mxu0 0.0
      %694 = vmatprep.subr.mxu0 0.0
      %695 = vmatpush2.msra.mxu0 0.0
      %696 = vmatprep.subr.mxu0 0.0
      %697 = vmatpush2.msra.mxu0 0.0
      %698 = vmatprep.subr.mxu0 0.0
      %699 = vmatpush2.msra.mxu0 0.0
      %700 = vmatprep.subr.mxu0 0.0
      %701 = vmatpush2.msra.mxu0 0.0
      %702 = vmatprep.subr.mxu0 0.0
      %703 = vmatpush2.msra.mxu0 0.0
      %704 = vmatprep.subr.mxu0 0.0
      %705 = vmatpush2.msra.mxu0 0.0
      %706 = vmatprep.mubr.f32.mxu0 0.0
      %707 = vmatmul.mubr.f32.gmra.mxu0 %v563
      %v708 = vpop.f32.mrf.mxu0
      %v709 = vadd.f32 0.0, %v708
      %v710 = vpop.f32.mrf.mxu0
      %711 = vdwg.mxu0
      %v712 = vadd.f32 %v472, %v638
      %v713 = vadd.f32 %v474, %v640
      %v714 = vadd.f32 %v543, %v709
      %v715 = vld [vmem:[%s209] sm:$0xff]
      %v716 = vld [vmem:[%s209 + $0x8] sm:$0xf]
      %s717 = scalar_lea.vmem %s213, 24
      %v718 = vld [vmem:[%s717] sm:$0xff]
      %v721 = vcombine.high %v715, %v715
      %722 = vrot.lane.b32.xlu0 %v715, 110
      %v723 = vpop.permute.xlu0 %722
      %724 = vrot.lane.b32.xlu0 %v721, 110
      %v725 = vpop.permute.xlu0 %724
      %726 = vrot.lane.b32.xlu0 %v716, 110
      %v727 = vpop.permute.xlu0 %726
      %vm728 = vcmask 900096
      %v729 = vsel %vm728, %v723, %v725
      %v730 = vsel %vm728, %v725, %v727
      %v732 = vsel %vm244, %v718, 0
      %v734 = vsel %vm248, %v729, 0
      %v736 = vsel %vm248, %v730, 0
      %v738 = vsel %vm248, %v727, 0
      %740 = vmatprep.subr.mxu0 0.0
      %741 = vmatpush1.msra.mxu0 0.0
      %742 = vmatprep.subr.mxu0 0.0
      %743 = vmatpush1.msra.mxu0 0.0
      %744 = vmatprep.subr.mxu0 0.0
      %745 = vmatpush1.msra.mxu0 0.0
      %746 = vmatprep.subr.mxu0 0.0
      %747 = vmatpush1.msra.mxu0 0.0
      %748 = vmatprep.subr.mxu0 0.0
      %749 = vmatpush1.msra.mxu0 0.0
      %750 = vmatprep.subr.mxu0 0.0
      %751 = vmatpush1.msra.mxu0 0.0
      %752 = vmatprep.subr.mxu0 0.0
      %753 = vmatpush1.msra.mxu0 0.0
      %754 = vmatprep.subr.mxu0 0.0
      %755 = vmatpush1.msra.mxu0 0.0
      %756 = vmatprep.subr.mxu0 0.0
      %757 = vmatpush1.msra.mxu0 0.0
      %758 = vmatprep.subr.mxu0 0.0
      %759 = vmatpush1.msra.mxu0 0.0
      %760 = vmatprep.subr.mxu0 0.0
      %761 = vmatpush1.msra.mxu0 0.0
      %762 = vmatprep.subr.mxu0 0.0
      %763 = vmatpush1.msra.mxu0 0.0
      %764 = vmatprep.subr.mxu0 0.0
      %765 = vmatpush1.msra.mxu0 0.0
      %766 = vmatprep.subr.mxu0 0.0
      %767 = vmatpush1.msra.mxu0 0.0
      %768 = vmatprep.subr.mxu0 0.0
      %769 = vmatpush1.msra.mxu0 0.0
      %770 = vmatprep.subr.mxu0 %v736
      %771 = vmatpush1.msra.mxu0 %v734
      %772 = vmatprep.subr.mxu0 0.0
      %773 = vmatpush2.msra.mxu0 0.0
      %774 = vmatprep.subr.mxu0 0.0
      %775 = vmatpush2.msra.mxu0 0.0
      %776 = vmatprep.subr.mxu0 0.0
      %777 = vmatpush2.msra.mxu0 0.0
      %778 = vmatprep.subr.mxu0 0.0
      %779 = vmatpush2.msra.mxu0 0.0
      %780 = vmatprep.subr.mxu0 0.0
      %781 = vmatpush2.msra.mxu0 0.0
      %782 = vmatprep.subr.mxu0 0.0
      %783 = vmatpush2.msra.mxu0 0.0
      %784 = vmatprep.subr.mxu0 0.0
      %785 = vmatpush2.msra.mxu0 0.0
      %786 = vmatprep.subr.mxu0 0.0
      %787 = vmatpush2.msra.mxu0 0.0
      %788 = vmatprep.subr.mxu0 0.0
      %789 = vmatpush2.msra.mxu0 0.0
      %790 = vmatprep.subr.mxu0 0.0
      %791 = vmatpush2.msra.mxu0 0.0
      %792 = vmatprep.subr.mxu0 0.0
      %793 = vmatpush2.msra.mxu0 0.0
      %794 = vmatprep.subr.mxu0 0.0
      %795 = vmatpush2.msra.mxu0 0.0
      %796 = vmatprep.subr.mxu0 0.0
      %797 = vmatpush2.msra.mxu0 0.0
      %798 = vmatprep.subr.mxu0 0.0
      %799 = vmatpush2.msra.mxu0 0.0
      %800 = vmatprep.subr.mxu0 0.0
      %801 = vmatpush2.msra.mxu0 0.0
      %802 = vmatprep.subr.mxu0 0.0
      %803 = vmatpush2.msra.mxu0 0.0
      %804 = vmatprep.mubr.f32.mxu0 0.0
      %805 = vmatmul.mubr.f32.gmra.mxu0 %v732
      %v806 = vpop.f32.mrf.mxu0
      %v807 = vadd.f32 0.0, %v806
      %v808 = vpop.f32.mrf.mxu0
      %v809 = vadd.f32 0.0, %v808
      %810 = vdwg.mxu0
      %811 = vmatprep.subr.mxu0 0.0
      %812 = vmatpush1.msra.mxu0 0.0
      %813 = vmatprep.subr.mxu0 0.0
      %814 = vmatpush1.msra.mxu0 0.0
      %815 = vmatprep.subr.mxu0 0.0
      %816 = vmatpush1.msra.mxu0 0.0
      %817 = vmatprep.subr.mxu0 0.0
      %818 = vmatpush1.msra.mxu0 0.0
      %819 = vmatprep.subr.mxu0 0.0
      %820 = vmatpush1.msra.mxu0 0.0
      %821 = vmatprep.subr.mxu0 0.0
      %822 = vmatpush1.msra.mxu0 0.0
      %823 = vmatprep.subr.mxu0 0.0
      %824 = vmatpush1.msra.mxu0 0.0
      %825 = vmatprep.subr.mxu0 0.0
      %826 = vmatpush1.msra.mxu0 0.0
      %827 = vmatprep.subr.mxu0 0.0
      %828 = vmatpush1.msra.mxu0 0.0
      %829 = vmatprep.subr.mxu0 0.0
      %830 = vmatpush1.msra.mxu0 0.0
      %831 = vmatprep.subr.mxu0 0.0
      %832 = vmatpush1.msra.mxu0 0.0
      %833 = vmatprep.subr.mxu0 0.0
      %834 = vmatpush1.msra.mxu0 0.0
      %835 = vmatprep.subr.mxu0 0.0
      %836 = vmatpush1.msra.mxu0 0.0
      %837 = vmatprep.subr.mxu0 0.0
      %838 = vmatpush1.msra.mxu0 0.0
      %839 = vmatprep.subr.mxu0 0.0
      %840 = vmatpush1.msra.mxu0 0.0
      %841 = vmatprep.subr.mxu0 0.0
      %842 = vmatpush1.msra.mxu0 %v738
      %843 = vmatprep.subr.mxu0 0.0
      %844 = vmatpush2.msra.mxu0 0.0
      %845 = vmatprep.subr.mxu0 0.0
      %846 = vmatpush2.msra.mxu0 0.0
      %847 = vmatprep.subr.mxu0 0.0
      %848 = vmatpush2.msra.mxu0 0.0
      %849 = vmatprep.subr.mxu0 0.0
      %850 = vmatpush2.msra.mxu0 0.0
      %851 = vmatprep.subr.mxu0 0.0
      %852 = vmatpush2.msra.mxu0 0.0
      %853 = vmatprep.subr.mxu0 0.0
      %854 = vmatpush2.msra.mxu0 0.0
      %855 = vmatprep.subr.mxu0 0.0
      %856 = vmatpush2.msra.mxu0 0.0
      %857 = vmatprep.subr.mxu0 0.0
      %858 = vmatpush2.msra.mxu0 0.0
      %859 = vmatprep.subr.mxu0 0.0
      %860 = vmatpush2.msra.mxu0 0.0
      %861 = vmatprep.subr.mxu0 0.0
      %862 = vmatpush2.msra.mxu0 0.0
      %863 = vmatprep.subr.mxu0 0.0
      %864 = vmatpush2.msra.mxu0 0.0
      %865 = vmatprep.subr.mxu0 0.0
      %866 = vmatpush2.msra.mxu0 0.0
      %867 = vmatprep.subr.mxu0 0.0
      %868 = vmatpush2.msra.mxu0 0.0
      %869 = vmatprep.subr.mxu0 0.0
      %870 = vmatpush2.msra.mxu0 0.0
      %871 = vmatprep.subr.mxu0 0.0
      %872 = vmatpush2.msra.mxu0 0.0
      %873 = vmatprep.subr.mxu0 0.0
      %874 = vmatpush2.msra.mxu0 0.0
      %875 = vmatprep.mubr.f32.mxu0 0.0
      %876 = vmatmul.mubr.f32.gmra.mxu0 %v732
      %v877 = vpop.f32.mrf.mxu0
      %v878 = vadd.f32 0.0, %v877
      %v879 = vpop.f32.mrf.mxu0
      %880 = vdwg.mxu0
      %v881 = vadd.f32 %v712, %v807
      %v882 = vadd.f32 %v713, %v809
      %v883 = vadd.f32 %v714, %v878
      %v884 = vld [vmem:[%s209] sm:$0xff]
      %v885 = vld [vmem:[%s209 + $0x8] sm:$0xf]
      %s886 = scalar_lea.vmem %s213, 32
      %v887 = vld [vmem:[%s886] sm:$0xff]
      %v890 = vcombine.high %v884, %v884
      %891 = vrot.lane.b32.xlu0 %v884, 109
      %v892 = vpop.permute.xlu0 %891
      %893 = vrot.lane.b32.xlu0 %v890, 109
      %v894 = vpop.permute.xlu0 %893
      %895 = vrot.lane.b32.xlu0 %v885, 109
      %v896 = vpop.permute.xlu0 %895
      %vm897 = vcmask 891904
      %v898 = vsel %vm897, %v892, %v894
      %v899 = vsel %vm897, %v894, %v896
      %v901 = vsel %vm244, %v887, 0
      %v903 = vsel %vm248, %v898, 0
      %v905 = vsel %vm248, %v899, 0
      %v907 = vsel %vm248, %v896, 0
      %909 = vmatprep.subr.mxu0 0.0
      %910 = vmatpush1.msra.mxu0 0.0
      %911 = vmatprep.subr.mxu0 0.0
      %912 = vmatpush1.msra.mxu0 0.0
      %913 = vmatprep.subr.mxu0 0.0
      %914 = vmatpush1.msra.mxu0 0.0
      %915 = vmatprep.subr.mxu0 0.0
      %916 = vmatpush1.msra.mxu0 0.0
      %917 = vmatprep.subr.mxu0 0.0
      %918 = vmatpush1.msra.mxu0 0.0
      %919 = vmatprep.subr.mxu0 0.0
      %920 = vmatpush1.msra.mxu0 0.0
      %921 = vmatprep.subr.mxu0 0.0
      %922 = vmatpush1.msra.mxu0 0.0
      %923 = vmatprep.subr.mxu0 0.0
      %924 = vmatpush1.msra.mxu0 0.0
      %925 = vmatprep.subr.mxu0 0.0
      %926 = vmatpush1.msra.mxu0 0.0
      %927 = vmatprep.subr.mxu0 0.0
      %928 = vmatpush1.msra.mxu0 0.0
      %929 = vmatprep.subr.mxu0 0.0
      %930 = vmatpush1.msra.mxu0 0.0
      %931 = vmatprep.subr.mxu0 0.0
      %932 = vmatpush1.msra.mxu0 0.0
      %933 = vmatprep.subr.mxu0 0.0
      %934 = vmatpush1.msra.mxu0 0.0
      %935 = vmatprep.subr.mxu0 0.0
      %936 = vmatpush1.msra.mxu0 0.0
      %937 = vmatprep.subr.mxu0 0.0
      %938 = vmatpush1.msra.mxu0 0.0
      %939 = vmatprep.subr.mxu0 %v905
      %940 = vmatpush1.msra.mxu0 %v903
      %941 = vmatprep.subr.mxu0 0.0
      %942 = vmatpush2.msra.mxu0 0.0
      %943 = vmatprep.subr.mxu0 0.0
      %944 = vmatpush2.msra.mxu0 0.0
      %945 = vmatprep.subr.mxu0 0.0
      %946 = vmatpush2.msra.mxu0 0.0
      %947 = vmatprep.subr.mxu0 0.0
      %948 = vmatpush2.msra.mxu0 0.0
      %949 = vmatprep.subr.mxu0 0.0
      %950 = vmatpush2.msra.mxu0 0.0
      %951 = vmatprep.subr.mxu0 0.0
      %952 = vmatpush2.msra.mxu0 0.0
      %953 = vmatprep.subr.mxu0 0.0
      %954 = vmatpush2.msra.mxu0 0.0
      %955 = vmatprep.subr.mxu0 0.0
      %956 = vmatpush2.msra.mxu0 0.0
      %957 = vmatprep.subr.mxu0 0.0
      %958 = vmatpush2.msra.mxu0 0.0
      %959 = vmatprep.subr.mxu0 0.0
      %960 = vmatpush2.msra.mxu0 0.0
      %961 = vmatprep.subr.mxu0 0.0
      %962 = vmatpush2.msra.mxu0 0.0
      %963 = vmatprep.subr.mxu0 0.0
      %964 = vmatpush2.msra.mxu0 0.0
      %965 = vmatprep.subr.mxu0 0.0
      %966 = vmatpush2.msra.mxu0 0.0
      %967 = vmatprep.subr.mxu0 0.0
      %968 = vmatpush2.msra.mxu0 0.0
      %969 = vmatprep.subr.mxu0 0.0
      %970 = vmatpush2.msra.mxu0 0.0
      %971 = vmatprep.subr.mxu0 0.0
      %972 = vmatpush2.msra.mxu0 0.0
      %973 = vmatprep.mubr.f32.mxu0 0.0
      %974 = vmatmul.mubr.f32.gmra.mxu0 %v901
      %v975 = vpop.f32.mrf.mxu0
      %v976 = vadd.f32 0.0, %v975
      %v977 = vpop.f32.mrf.mxu0
      %v978 = vadd.f32 0.0, %v977
      %979 = vdwg.mxu0
      %980 = vmatprep.subr.mxu0 0.0
      %981 = vmatpush1.msra.mxu0 0.0
      %982 = vmatprep.subr.mxu0 0.0
      %983 = vmatpush1.msra.mxu0 0.0
      %984 = vmatprep.subr.mxu0 0.0
      %985 = vmatpush1.msra.mxu0 0.0
      %986 = vmatprep.subr.mxu0 0.0
      %987 = vmatpush1.msra.mxu0 0.0
      %988 = vmatprep.subr.mxu0 0.0
      %989 = vmatpush1.msra.mxu0 0.0
      %990 = vmatprep.subr.mxu0 0.0
      %991 = vmatpush1.msra.mxu0 0.0
      %992 = vmatprep.subr.mxu0 0.0
      %993 = vmatpush1.msra.mxu0 0.0
      %994 = vmatprep.subr.mxu0 0.0
      %995 = vmatpush1.msra.mxu0 0.0
      %996 = vmatprep.subr.mxu0 0.0
      %997 = vmatpush1.msra.mxu0 0.0
      %998 = vmatprep.subr.mxu0 0.0
      %999 = vmatpush1.msra.mxu0 0.0
      %1000 = vmatprep.subr.mxu0 0.0
      %1001 = vmatpush1.msra.mxu0 0.0
      %1002 = vmatprep.subr.mxu0 0.0
      %1003 = vmatpush1.msra.mxu0 0.0
      %1004 = vmatprep.subr.mxu0 0.0
      %1005 = vmatpush1.msra.mxu0 0.0
      %1006 = vmatprep.subr.mxu0 0.0
      %1007 = vmatpush1.msra.mxu0 0.0
      %1008 = vmatprep.subr.mxu0 0.0
      %1009 = vmatpush1.msra.mxu0 0.0
      %1010 = vmatprep.subr.mxu0 0.0
      %1011 = vmatpush1.msra.mxu0 %v907
      %1012 = vmatprep.subr.mxu0 0.0
      %1013 = vmatpush2.msra.mxu0 0.0
      %1014 = vmatprep.subr.mxu0 0.0
      %1015 = vmatpush2.msra.mxu0 0.0
      %1016 = vmatprep.subr.mxu0 0.0
      %1017 = vmatpush2.msra.mxu0 0.0
      %1018 = vmatprep.subr.mxu0 0.0
      %1019 = vmatpush2.msra.mxu0 0.0
      %1020 = vmatprep.subr.mxu0 0.0
      %1021 = vmatpush2.msra.mxu0 0.0
      %1022 = vmatprep.subr.mxu0 0.0
      %1023 = vmatpush2.msra.mxu0 0.0
      %1024 = vmatprep.subr.mxu0 0.0
      %1025 = vmatpush2.msra.mxu0 0.0
      %1026 = vmatprep.subr.mxu0 0.0
      %1027 = vmatpush2.msra.mxu0 0.0
      %1028 = vmatprep.subr.mxu0 0.0
      %1029 = vmatpush2.msra.mxu0 0.0
      %1030 = vmatprep.subr.mxu0 0.0
      %1031 = vmatpush2.msra.mxu0 0.0
      %1032 = vmatprep.subr.mxu0 0.0
      %1033 = vmatpush2.msra.mxu0 0.0
      %1034 = vmatprep.subr.mxu0 0.0
      %1035 = vmatpush2.msra.mxu0 0.0
      %1036 = vmatprep.subr.mxu0 0.0
      %1037 = vmatpush2.msra.mxu0 0.0
      %1038 = vmatprep.subr.mxu0 0.0
      %1039 = vmatpush2.msra.mxu0 0.0
      %1040 = vmatprep.subr.mxu0 0.0
      %1041 = vmatpush2.msra.mxu0 0.0
      %1042 = vmatprep.subr.mxu0 0.0
      %1043 = vmatpush2.msra.mxu0 0.0
      %1044 = vmatprep.mubr.f32.mxu0 0.0
      %1045 = vmatmul.mubr.f32.gmra.mxu0 %v901
      %v1046 = vpop.f32.mrf.mxu0
      %v1047 = vadd.f32 0.0, %v1046
      %v1048 = vpop.f32.mrf.mxu0
      %1049 = vdwg.mxu0
      %v1050 = vadd.f32 %v881, %v976
      %v1051 = vadd.f32 %v882, %v978
      %v1052 = vadd.f32 %v883, %v1047
      %v1053 = vld [vmem:[%s209] sm:$0xff]
      %v1054 = vld [vmem:[%s209 + $0x8] sm:$0xf]
      %s1055 = scalar_lea.vmem %s213, 40
      %v1056 = vld [vmem:[%s1055] sm:$0xff]
      %v1059 = vcombine.high %v1053, %v1053
      %1060 = vrot.lane.b32.xlu0 %v1053, 108
      %v1061 = vpop.permute.xlu0 %1060
      %1062 = vrot.lane.b32.xlu0 %v1059, 108
      %v1063 = vpop.permute.xlu0 %1062
      %1064 = vrot.lane.b32.xlu0 %v1054, 108
      %v1065 = vpop.permute.xlu0 %1064
      %vm1066 = vcmask 883712
      %v1067 = vsel %vm1066, %v1061, %v1063
      %v1068 = vsel %vm1066, %v1063, %v1065
      %v1070 = vsel %vm244, %v1056, 0
      %v1072 = vsel %vm248, %v1067, 0
      %v1074 = vsel %vm248, %v1068, 0
      %v1076 = vsel %vm248, %v1065, 0
      %1078 = vmatprep.subr.mxu0 0.0
      %1079 = vmatpush1.msra.mxu0 0.0
      %1080 = vmatprep.subr.mxu0 0.0
      %1081 = vmatpush1.msra.mxu0 0.0
      %1082 = vmatprep.subr.mxu0 0.0
      %1083 = vmatpush1.msra.mxu0 0.0
      %1084 = vmatprep.subr.mxu0 0.0
      %1085 = vmatpush1.msra.mxu0 0.0
      %1086 = vmatprep.subr.mxu0 0.0
      %1087 = vmatpush1.msra.mxu0 0.0
      %1088 = vmatprep.subr.mxu0 0.0
      %1089 = vmatpush1.msra.mxu0 0.0
      %1090 = vmatprep.subr.mxu0 0.0
      %1091 = vmatpush1.msra.mxu0 0.0
      %1092 = vmatprep.subr.mxu0 0.0
      %1093 = vmatpush1.msra.mxu0 0.0
      %1094 = vmatprep.subr.mxu0 0.0
      %1095 = vmatpush1.msra.mxu0 0.0
      %1096 = vmatprep.subr.mxu0 0.0
      %1097 = vmatpush1.msra.mxu0 0.0
      %1098 = vmatprep.subr.mxu0 0.0
      %1099 = vmatpush1.msra.mxu0 0.0
      %1100 = vmatprep.subr.mxu0 0.0
      %1101 = vmatpush1.msra.mxu0 0.0
      %1102 = vmatprep.subr.mxu0 0.0
      %1103 = vmatpush1.msra.mxu0 0.0
      %1104 = vmatprep.subr.mxu0 0.0
      %1105 = vmatpush1.msra.mxu0 0.0
      %1106 = vmatprep.subr.mxu0 0.0
      %1107 = vmatpush1.msra.mxu0 0.0
      %1108 = vmatprep.subr.mxu0 %v1074
      %1109 = vmatpush1.msra.mxu0 %v1072
      %1110 = vmatprep.subr.mxu0 0.0
      %1111 = vmatpush2.msra.mxu0 0.0
      %1112 = vmatprep.subr.mxu0 0.0
      %1113 = vmatpush2.msra.mxu0 0.0
      %1114 = vmatprep.subr.mxu0 0.0
      %1115 = vmatpush2.msra.mxu0 0.0
      %1116 = vmatprep.subr.mxu0 0.0
      %1117 = vmatpush2.msra.mxu0 0.0
      %1118 = vmatprep.subr.mxu0 0.0
      %1119 = vmatpush2.msra.mxu0 0.0
      %1120 = vmatprep.subr.mxu0 0.0
      %1121 = vmatpush2.msra.mxu0 0.0
      %1122 = vmatprep.subr.mxu0 0.0
      %1123 = vmatpush2.msra.mxu0 0.0
      %1124 = vmatprep.subr.mxu0 0.0
      %1125 = vmatpush2.msra.mxu0 0.0
      %1126 = vmatprep.subr.mxu0 0.0
      %1127 = vmatpush2.msra.mxu0 0.0
      %1128 = vmatprep.subr.mxu0 0.0
      %1129 = vmatpush2.msra.mxu0 0.0
      %1130 = vmatprep.subr.mxu0 0.0
      %1131 = vmatpush2.msra.mxu0 0.0
      %1132 = vmatprep.subr.mxu0 0.0
      %1133 = vmatpush2.msra.mxu0 0.0
      %1134 = vmatprep.subr.mxu0 0.0
      %1135 = vmatpush2.msra.mxu0 0.0
      %1136 = vmatprep.subr.mxu0 0.0
      %1137 = vmatpush2.msra.mxu0 0.0
      %1138 = vmatprep.subr.mxu0 0.0
      %1139 = vmatpush2.msra.mxu0 0.0
      %1140 = vmatprep.subr.mxu0 0.0
      %1141 = vmatpush2.msra.mxu0 0.0
      %1142 = vmatprep.mubr.f32.mxu0 0.0
      %1143 = vmatmul.mubr.f32.gmra.mxu0 %v1070
      %v1144 = vpop.f32.mrf.mxu0
      %v1145 = vadd.f32 0.0, %v1144
      %v1146 = vpop.f32.mrf.mxu0
      %v1147 = vadd.f32 0.0, %v1146
      %1148 = vdwg.mxu0
      %1149 = vmatprep.subr.mxu0 0.0
      %1150 = vmatpush1.msra.mxu0 0.0
      %1151 = vmatprep.subr.mxu0 0.0
      %1152 = vmatpush1.msra.mxu0 0.0
      %1153 = vmatprep.subr.mxu0 0.0
      %1154 = vmatpush1.msra.mxu0 0.0
      %1155 = vmatprep.subr.mxu0 0.0
      %1156 = vmatpush1.msra.mxu0 0.0
      %1157 = vmatprep.subr.mxu0 0.0
      %1158 = vmatpush1.msra.mxu0 0.0
      %1159 = vmatprep.subr.mxu0 0.0
      %1160 = vmatpush1.msra.mxu0 0.0
      %1161 = vmatprep.subr.mxu0 0.0
      %1162 = vmatpush1.msra.mxu0 0.0
      %1163 = vmatprep.subr.mxu0 0.0
      %1164 = vmatpush1.msra.mxu0 0.0
      %1165 = vmatprep.subr.mxu0 0.0
      %1166 = vmatpush1.msra.mxu0 0.0
      %1167 = vmatprep.subr.mxu0 0.0
      %1168 = vmatpush1.msra.mxu0 0.0
      %1169 = vmatprep.subr.mxu0 0.0
      %1170 = vmatpush1.msra.mxu0 0.0
      %1171 = vmatprep.subr.mxu0 0.0
      %1172 = vmatpush1.msra.mxu0 0.0
      %1173 = vmatprep.subr.mxu0 0.0
      %1174 = vmatpush1.msra.mxu0 0.0
      %1175 = vmatprep.subr.mxu0 0.0
      %1176 = vmatpush1.msra.mxu0 0.0
      %1177 = vmatprep.subr.mxu0 0.0
      %1178 = vmatpush1.msra.mxu0 0.0
      %1179 = vmatprep.subr.mxu0 0.0
      %1180 = vmatpush1.msra.mxu0 %v1076
      %1181 = vmatprep.subr.mxu0 0.0
      %1182 = vmatpush2.msra.mxu0 0.0
      %1183 = vmatprep.subr.mxu0 0.0
      %1184 = vmatpush2.msra.mxu0 0.0
      %1185 = vmatprep.subr.mxu0 0.0
      %1186 = vmatpush2.msra.mxu0 0.0
      %1187 = vmatprep.subr.mxu0 0.0
      %1188 = vmatpush2.msra.mxu0 0.0
      %1189 = vmatprep.subr.mxu0 0.0
      %1190 = vmatpush2.msra.mxu0 0.0
      %1191 = vmatprep.subr.mxu0 0.0
      %1192 = vmatpush2.msra.mxu0 0.0
      %1193 = vmatprep.subr.mxu0 0.0
      %1194 = vmatpush2.msra.mxu0 0.0
      %1195 = vmatprep.subr.mxu0 0.0
      %1196 = vmatpush2.msra.mxu0 0.0
      %1197 = vmatprep.subr.mxu0 0.0
      %1198 = vmatpush2.msra.mxu0 0.0
      %1199 = vmatprep.subr.mxu0 0.0
      %1200 = vmatpush2.msra.mxu0 0.0
      %1201 = vmatprep.subr.mxu0 0.0
      %1202 = vmatpush2.msra.mxu0 0.0
      %1203 = vmatprep.subr.mxu0 0.0
      %1204 = vmatpush2.msra.mxu0 0.0
      %1205 = vmatprep.subr.mxu0 0.0
      %1206 = vmatpush2.msra.mxu0 0.0
      %1207 = vmatprep.subr.mxu0 0.0
      %1208 = vmatpush2.msra.mxu0 0.0
      %1209 = vmatprep.subr.mxu0 0.0
      %1210 = vmatpush2.msra.mxu0 0.0
      %1211 = vmatprep.subr.mxu0 0.0
      %1212 = vmatpush2.msra.mxu0 0.0
      %1213 = vmatprep.mubr.f32.mxu0 0.0
      %1214 = vmatmul.mubr.f32.gmra.mxu0 %v1070
      %v1215 = vpop.f32.mrf.mxu0
      %v1216 = vadd.f32 0.0, %v1215
      %v1217 = vpop.f32.mrf.mxu0
      %1218 = vdwg.mxu0
      %v1219 = vadd.f32 %v1050, %v1145
      %v1220 = vadd.f32 %v1051, %v1147
      %v1221 = vadd.f32 %v1052, %v1216
      %v1222 = vld [vmem:[%s209] sm:$0xff]
      %v1223 = vld [vmem:[%s209 + $0x8] sm:$0xf]
      %s1224 = scalar_lea.vmem %s213, 48
      %v1225 = vld [vmem:[%s1224] sm:$0xff]
      %v1228 = vcombine.high %v1222, %v1222
      %1229 = vrot.lane.b32.xlu0 %v1222, 92
      %v1230 = vpop.permute.xlu0 %1229
      %1231 = vrot.lane.b32.xlu0 %v1228, 92
      %v1232 = vpop.permute.xlu0 %1231
      %1233 = vrot.lane.b32.xlu0 %v1223, 92
      %v1234 = vpop.permute.xlu0 %1233
      %vm1235 = vcmask 752640
      %v1236 = vsel %vm1235, %v1230, %v1232
      %v1237 = vsel %vm1235, %v1232, %v1234
      %v1239 = vsel %vm244, %v1225, 0
      %v1241 = vsel %vm248, %v1236, 0
      %v1243 = vsel %vm248, %v1237, 0
      %v1245 = vsel %vm248, %v1234, 0
      %1247 = vmatprep.subr.mxu0 0.0
      %1248 = vmatpush1.msra.mxu0 0.0
      %1249 = vmatprep.subr.mxu0 0.0
      %1250 = vmatpush1.msra.mxu0 0.0
      %1251 = vmatprep.subr.mxu0 0.0
      %1252 = vmatpush1.msra.mxu0 0.0
      %1253 = vmatprep.subr.mxu0 0.0
      %1254 = vmatpush1.msra.mxu0 0.0
      %1255 = vmatprep.subr.mxu0 0.0
      %1256 = vmatpush1.msra.mxu0 0.0
      %1257 = vmatprep.subr.mxu0 0.0
      %1258 = vmatpush1.msra.mxu0 0.0
      %1259 = vmatprep.subr.mxu0 0.0
      %1260 = vmatpush1.msra.mxu0 0.0
      %1261 = vmatprep.subr.mxu0 0.0
      %1262 = vmatpush1.msra.mxu0 0.0
      %1263 = vmatprep.subr.mxu0 0.0
      %1264 = vmatpush1.msra.mxu0 0.0
      %1265 = vmatprep.subr.mxu0 0.0
      %1266 = vmatpush1.msra.mxu0 0.0
      %1267 = vmatprep.subr.mxu0 0.0
      %1268 = vmatpush1.msra.mxu0 0.0
      %1269 = vmatprep.subr.mxu0 0.0
      %1270 = vmatpush1.msra.mxu0 0.0
      %1271 = vmatprep.subr.mxu0 0.0
      %1272 = vmatpush1.msra.mxu0 0.0
      %1273 = vmatprep.subr.mxu0 0.0
      %1274 = vmatpush1.msra.mxu0 0.0
      %1275 = vmatprep.subr.mxu0 0.0
      %1276 = vmatpush1.msra.mxu0 0.0
      %1277 = vmatprep.subr.mxu0 %v1243
      %1278 = vmatpush1.msra.mxu0 %v1241
      %1279 = vmatprep.subr.mxu0 0.0
      %1280 = vmatpush2.msra.mxu0 0.0
      %1281 = vmatprep.subr.mxu0 0.0
      %1282 = vmatpush2.msra.mxu0 0.0
      %1283 = vmatprep.subr.mxu0 0.0
      %1284 = vmatpush2.msra.mxu0 0.0
      %1285 = vmatprep.subr.mxu0 0.0
      %1286 = vmatpush2.msra.mxu0 0.0
      %1287 = vmatprep.subr.mxu0 0.0
      %1288 = vmatpush2.msra.mxu0 0.0
      %1289 = vmatprep.subr.mxu0 0.0
      %1290 = vmatpush2.msra.mxu0 0.0
      %1291 = vmatprep.subr.mxu0 0.0
      %1292 = vmatpush2.msra.mxu0 0.0
      %1293 = vmatprep.subr.mxu0 0.0
      %1294 = vmatpush2.msra.mxu0 0.0
      %1295 = vmatprep.subr.mxu0 0.0
      %1296 = vmatpush2.msra.mxu0 0.0
      %1297 = vmatprep.subr.mxu0 0.0
      %1298 = vmatpush2.msra.mxu0 0.0
      %1299 = vmatprep.subr.mxu0 0.0
      %1300 = vmatpush2.msra.mxu0 0.0
      %1301 = vmatprep.subr.mxu0 0.0
      %1302 = vmatpush2.msra.mxu0 0.0
      %1303 = vmatprep.subr.mxu0 0.0
      %1304 = vmatpush2.msra.mxu0 0.0
      %1305 = vmatprep.subr.mxu0 0.0
      %1306 = vmatpush2.msra.mxu0 0.0
      %1307 = vmatprep.subr.mxu0 0.0
      %1308 = vmatpush2.msra.mxu0 0.0
      %1309 = vmatprep.subr.mxu0 0.0
      %1310 = vmatpush2.msra.mxu0 0.0
      %1311 = vmatprep.mubr.f32.mxu0 0.0
      %1312 = vmatmul.mubr.f32.gmra.mxu0 %v1239
      %v1313 = vpop.f32.mrf.mxu0
      %v1314 = vadd.f32 0.0, %v1313
      %v1315 = vpop.f32.mrf.mxu0
      %v1316 = vadd.f32 0.0, %v1315
      %1317 = vdwg.mxu0
      %1318 = vmatprep.subr.mxu0 0.0
      %1319 = vmatpush1.msra.mxu0 0.0
      %1320 = vmatprep.subr.mxu0 0.0
      %1321 = vmatpush1.msra.mxu0 0.0
      %1322 = vmatprep.subr.mxu0 0.0
      %1323 = vmatpush1.msra.mxu0 0.0
      %1324 = vmatprep.subr.mxu0 0.0
      %1325 = vmatpush1.msra.mxu0 0.0
      %1326 = vmatprep.subr.mxu0 0.0
      %1327 = vmatpush1.msra.mxu0 0.0
      %1328 = vmatprep.subr.mxu0 0.0
      %1329 = vmatpush1.msra.mxu0 0.0
      %1330 = vmatprep.subr.mxu0 0.0
      %1331 = vmatpush1.msra.mxu0 0.0
      %1332 = vmatprep.subr.mxu0 0.0
      %1333 = vmatpush1.msra.mxu0 0.0
      %1334 = vmatprep.subr.mxu0 0.0
      %1335 = vmatpush1.msra.mxu0 0.0
      %1336 = vmatprep.subr.mxu0 0.0
      %1337 = vmatpush1.msra.mxu0 0.0
      %1338 = vmatprep.subr.mxu0 0.0
      %1339 = vmatpush1.msra.mxu0 0.0
      %1340 = vmatprep.subr.mxu0 0.0
      %1341 = vmatpush1.msra.mxu0 0.0
      %1342 = vmatprep.subr.mxu0 0.0
      %1343 = vmatpush1.msra.mxu0 0.0
      %1344 = vmatprep.subr.mxu0 0.0
      %1345 = vmatpush1.msra.mxu0 0.0
      %1346 = vmatprep.subr.mxu0 0.0
      %1347 = vmatpush1.msra.mxu0 0.0
      %1348 = vmatprep.subr.mxu0 0.0
      %1349 = vmatpush1.msra.mxu0 %v1245
      %1350 = vmatprep.subr.mxu0 0.0
      %1351 = vmatpush2.msra.mxu0 0.0
      %1352 = vmatprep.subr.mxu0 0.0
      %1353 = vmatpush2.msra.mxu0 0.0
      %1354 = vmatprep.subr.mxu0 0.0
      %1355 = vmatpush2.msra.mxu0 0.0
      %1356 = vmatprep.subr.mxu0 0.0
      %1357 = vmatpush2.msra.mxu0 0.0
      %1358 = vmatprep.subr.mxu0 0.0
      %1359 = vmatpush2.msra.mxu0 0.0
      %1360 = vmatprep.subr.mxu0 0.0
      %1361 = vmatpush2.msra.mxu0 0.0
      %1362 = vmatprep.subr.mxu0 0.0
      %1363 = vmatpush2.msra.mxu0 0.0
      %1364 = vmatprep.subr.mxu0 0.0
      %1365 = vmatpush2.msra.mxu0 0.0
      %1366 = vmatprep.subr.mxu0 0.0
      %1367 = vmatpush2.msra.mxu0 0.0
      %1368 = vmatprep.subr.mxu0 0.0
      %1369 = vmatpush2.msra.mxu0 0.0
      %1370 = vmatprep.subr.mxu0 0.0
      %1371 = vmatpush2.msra.mxu0 0.0
      %1372 = vmatprep.subr.mxu0 0.0
      %1373 = vmatpush2.msra.mxu0 0.0
      %1374 = vmatprep.subr.mxu0 0.0
      %1375 = vmatpush2.msra.mxu0 0.0
      %1376 = vmatprep.subr.mxu0 0.0
      %1377 = vmatpush2.msra.mxu0 0.0
      %1378 = vmatprep.subr.mxu0 0.0
      %1379 = vmatpush2.msra.mxu0 0.0
      %1380 = vmatprep.subr.mxu0 0.0
      %1381 = vmatpush2.msra.mxu0 0.0
      %1382 = vmatprep.mubr.f32.mxu0 0.0
      %1383 = vmatmul.mubr.f32.gmra.mxu0 %v1239
      %v1384 = vpop.f32.mrf.mxu0
      %v1385 = vadd.f32 0.0, %v1384
      %v1386 = vpop.f32.mrf.mxu0
      %1387 = vdwg.mxu0
      %v1388 = vadd.f32 %v1219, %v1314
      %v1389 = vadd.f32 %v1220, %v1316
      %v1390 = vadd.f32 %v1221, %v1385
      %v1391 = vld [vmem:[%s209] sm:$0xff]
      %v1392 = vld [vmem:[%s209 + $0x8] sm:$0xf]
      %s1393 = scalar_lea.vmem %s213, 56
      %v1394 = vld [vmem:[%s1393] sm:$0xff]
      %v1397 = vcombine.high %v1391, %v1391
      %1398 = vrot.lane.b32.xlu0 %v1391, 91
      %v1399 = vpop.permute.xlu0 %1398
      %1400 = vrot.lane.b32.xlu0 %v1397, 91
      %v1401 = vpop.permute.xlu0 %1400
      %1402 = vrot.lane.b32.xlu0 %v1392, 91
      %v1403 = vpop.permute.xlu0 %1402
      %vm1404 = vcmask 744448
      %v1405 = vsel %vm1404, %v1399, %v1401
      %v1406 = vsel %vm1404, %v1401, %v1403
      %v1408 = vsel %vm244, %v1394, 0
      %v1410 = vsel %vm248, %v1405, 0
      %v1412 = vsel %vm248, %v1406, 0
      %v1414 = vsel %vm248, %v1403, 0
      %1416 = vmatprep.subr.mxu0 0.0
      %1417 = vmatpush1.msra.mxu0 0.0
      %1418 = vmatprep.subr.mxu0 0.0
      %1419 = vmatpush1.msra.mxu0 0.0
      %1420 = vmatprep.subr.mxu0 0.0
      %1421 = vmatpush1.msra.mxu0 0.0
      %1422 = vmatprep.subr.mxu0 0.0
      %1423 = vmatpush1.msra.mxu0 0.0
      %1424 = vmatprep.subr.mxu0 0.0
      %1425 = vmatpush1.msra.mxu0 0.0
      %1426 = vmatprep.subr.mxu0 0.0
      %1427 = vmatpush1.msra.mxu0 0.0
      %1428 = vmatprep.subr.mxu0 0.0
      %1429 = vmatpush1.msra.mxu0 0.0
      %1430 = vmatprep.subr.mxu0 0.0
      %1431 = vmatpush1.msra.mxu0 0.0
      %1432 = vmatprep.subr.mxu0 0.0
      %1433 = vmatpush1.msra.mxu0 0.0
      %1434 = vmatprep.subr.mxu0 0.0
      %1435 = vmatpush1.msra.mxu0 0.0
      %1436 = vmatprep.subr.mxu0 0.0
      %1437 = vmatpush1.msra.mxu0 0.0
      %1438 = vmatprep.subr.mxu0 0.0
      %1439 = vmatpush1.msra.mxu0 0.0
      %1440 = vmatprep.subr.mxu0 0.0
      %1441 = vmatpush1.msra.mxu0 0.0
      %1442 = vmatprep.subr.mxu0 0.0
      %1443 = vmatpush1.msra.mxu0 0.0
      %1444 = vmatprep.subr.mxu0 0.0
      %1445 = vmatpush1.msra.mxu0 0.0
      %1446 = vmatprep.subr.mxu0 %v1412
      %1447 = vmatpush1.msra.mxu0 %v1410
      %1448 = vmatprep.subr.mxu0 0.0
      %1449 = vmatpush2.msra.mxu0 0.0
      %1450 = vmatprep.subr.mxu0 0.0
      %1451 = vmatpush2.msra.mxu0 0.0
      %1452 = vmatprep.subr.mxu0 0.0
      %1453 = vmatpush2.msra.mxu0 0.0
      %1454 = vmatprep.subr.mxu0 0.0
      %1455 = vmatpush2.msra.mxu0 0.0
      %1456 = vmatprep.subr.mxu0 0.0
      %1457 = vmatpush2.msra.mxu0 0.0
      %1458 = vmatprep.subr.mxu0 0.0
      %1459 = vmatpush2.msra.mxu0 0.0
      %1460 = vmatprep.subr.mxu0 0.0
      %1461 = vmatpush2.msra.mxu0 0.0
      %1462 = vmatprep.subr.mxu0 0.0
      %1463 = vmatpush2.msra.mxu0 0.0
      %1464 = vmatprep.subr.mxu0 0.0
      %1465 = vmatpush2.msra.mxu0 0.0
      %1466 = vmatprep.subr.mxu0 0.0
      %1467 = vmatpush2.msra.mxu0 0.0
      %1468 = vmatprep.subr.mxu0 0.0
      %1469 = vmatpush2.msra.mxu0 0.0
      %1470 = vmatprep.subr.mxu0 0.0
      %1471 = vmatpush2.msra.mxu0 0.0
      %1472 = vmatprep.subr.mxu0 0.0
      %1473 = vmatpush2.msra.mxu0 0.0
      %1474 = vmatprep.subr.mxu0 0.0
      %1475 = vmatpush2.msra.mxu0 0.0
      %1476 = vmatprep.subr.mxu0 0.0
      %1477 = vmatpush2.msra.mxu0 0.0
      %1478 = vmatprep.subr.mxu0 0.0
      %1479 = vmatpush2.msra.mxu0 0.0
      %1480 = vmatprep.mubr.f32.mxu0 0.0
      %1481 = vmatmul.mubr.f32.gmra.mxu0 %v1408
      %v1482 = vpop.f32.mrf.mxu0
      %v1483 = vadd.f32 0.0, %v1482
      %v1484 = vpop.f32.mrf.mxu0
      %v1485 = vadd.f32 0.0, %v1484
      %1486 = vdwg.mxu0
      %1487 = vmatprep.subr.mxu0 0.0
      %1488 = vmatpush1.msra.mxu0 0.0
      %1489 = vmatprep.subr.mxu0 0.0
      %1490 = vmatpush1.msra.mxu0 0.0
      %1491 = vmatprep.subr.mxu0 0.0
      %1492 = vmatpush1.msra.mxu0 0.0
      %1493 = vmatprep.subr.mxu0 0.0
      %1494 = vmatpush1.msra.mxu0 0.0
      %1495 = vmatprep.subr.mxu0 0.0
      %1496 = vmatpush1.msra.mxu0 0.0
      %1497 = vmatprep.subr.mxu0 0.0
      %1498 = vmatpush1.msra.mxu0 0.0
      %1499 = vmatprep.subr.mxu0 0.0
      %1500 = vmatpush1.msra.mxu0 0.0
      %1501 = vmatprep.subr.mxu0 0.0
      %1502 = vmatpush1.msra.mxu0 0.0
      %1503 = vmatprep.subr.mxu0 0.0
      %1504 = vmatpush1.msra.mxu0 0.0
      %1505 = vmatprep.subr.mxu0 0.0
      %1506 = vmatpush1.msra.mxu0 0.0
      %1507 = vmatprep.subr.mxu0 0.0
      %1508 = vmatpush1.msra.mxu0 0.0
      %1509 = vmatprep.subr.mxu0 0.0
      %1510 = vmatpush1.msra.mxu0 0.0
      %1511 = vmatprep.subr.mxu0 0.0
      %1512 = vmatpush1.msra.mxu0 0.0
      %1513 = vmatprep.subr.mxu0 0.0
      %1514 = vmatpush1.msra.mxu0 0.0
      %1515 = vmatprep.subr.mxu0 0.0
      %1516 = vmatpush1.msra.mxu0 0.0
      %1517 = vmatprep.subr.mxu0 0.0
      %1518 = vmatpush1.msra.mxu0 %v1414
      %1519 = vmatprep.subr.mxu0 0.0
      %1520 = vmatpush2.msra.mxu0 0.0
      %1521 = vmatprep.subr.mxu0 0.0
      %1522 = vmatpush2.msra.mxu0 0.0
      %1523 = vmatprep.subr.mxu0 0.0
      %1524 = vmatpush2.msra.mxu0 0.0
      %1525 = vmatprep.subr.mxu0 0.0
      %1526 = vmatpush2.msra.mxu0 0.0
      %1527 = vmatprep.subr.mxu0 0.0
      %1528 = vmatpush2.msra.mxu0 0.0
      %1529 = vmatprep.subr.mxu0 0.0
      %1530 = vmatpush2.msra.mxu0 0.0
      %1531 = vmatprep.subr.mxu0 0.0
      %1532 = vmatpush2.msra.mxu0 0.0
      %1533 = vmatprep.subr.mxu0 0.0
      %1534 = vmatpush2.msra.mxu0 0.0
      %1535 = vmatprep.subr.mxu0 0.0
      %1536 = vmatpush2.msra.mxu0 0.0
      %1537 = vmatprep.subr.mxu0 0.0
      %1538 = vmatpush2.msra.mxu0 0.0
      %1539 = vmatprep.subr.mxu0 0.0
      %1540 = vmatpush2.msra.mxu0 0.0
      %1541 = vmatprep.subr.mxu0 0.0
      %1542 = vmatpush2.msra.mxu0 0.0
      %1543 = vmatprep.subr.mxu0 0.0
      %1544 = vmatpush2.msra.mxu0 0.0
      %1545 = vmatprep.subr.mxu0 0.0
      %1546 = vmatpush2.msra.mxu0 0.0
      %1547 = vmatprep.subr.mxu0 0.0
      %1548 = vmatpush2.msra.mxu0 0.0
      %1549 = vmatprep.subr.mxu0 0.0
      %1550 = vmatpush2.msra.mxu0 0.0
      %1551 = vmatprep.mubr.f32.mxu0 0.0
      %1552 = vmatmul.mubr.f32.gmra.mxu0 %v1408
      %v1553 = vpop.f32.mrf.mxu0
      %v1554 = vadd.f32 0.0, %v1553
      %v1555 = vpop.f32.mrf.mxu0
      %1556 = vdwg.mxu0
      %v1557 = vadd.f32 %v1388, %v1483
      %v1558 = vadd.f32 %v1389, %v1485
      %v1559 = vadd.f32 %v1390, %v1554
      %v1560 = vld [vmem:[%s209] sm:$0xff]
      %v1561 = vld [vmem:[%s209 + $0x8] sm:$0xf]
      %s1562 = scalar_lea.vmem %s213, 64
      %v1563 = vld [vmem:[%s1562] sm:$0xff]
      %v1566 = vcombine.high %v1560, %v1560
      %1567 = vrot.lane.b32.xlu0 %v1560, 90
      %v1568 = vpop.permute.xlu0 %1567
      %1569 = vrot.lane.b32.xlu0 %v1566, 90
      %v1570 = vpop.permute.xlu0 %1569
      %1571 = vrot.lane.b32.xlu0 %v1561, 90
      %v1572 = vpop.permute.xlu0 %1571
      %vm1573 = vcmask 736256
      %v1574 = vsel %vm1573, %v1568, %v1570
      %v1575 = vsel %vm1573, %v1570, %v1572
      %v1577 = vsel %vm244, %v1563, 0
      %v1579 = vsel %vm248, %v1574, 0
      %v1581 = vsel %vm248, %v1575, 0
      %v1583 = vsel %vm248, %v1572, 0
      %1585 = vmatprep.subr.mxu0 0.0
      %1586 = vmatpush1.msra.mxu0 0.0
      %1587 = vmatprep.subr.mxu0 0.0
      %1588 = vmatpush1.msra.mxu0 0.0
      %1589 = vmatprep.subr.mxu0 0.0
      %1590 = vmatpush1.msra.mxu0 0.0
      %1591 = vmatprep.subr.mxu0 0.0
      %1592 = vmatpush1.msra.mxu0 0.0
      %1593 = vmatprep.subr.mxu0 0.0
      %1594 = vmatpush1.msra.mxu0 0.0
      %1595 = vmatprep.subr.mxu0 0.0
      %1596 = vmatpush1.msra.mxu0 0.0
      %1597 = vmatprep.subr.mxu0 0.0
      %1598 = vmatpush1.msra.mxu0 0.0
      %1599 = vmatprep.subr.mxu0 0.0
      %1600 = vmatpush1.msra.mxu0 0.0
      %1601 = vmatprep.subr.mxu0 0.0
      %1602 = vmatpush1.msra.mxu0 0.0
      %1603 = vmatprep.subr.mxu0 0.0
      %1604 = vmatpush1.msra.mxu0 0.0
      %1605 = vmatprep.subr.mxu0 0.0
      %1606 = vmatpush1.msra.mxu0 0.0
      %1607 = vmatprep.subr.mxu0 0.0
      %1608 = vmatpush1.msra.mxu0 0.0
      %1609 = vmatprep.subr.mxu0 0.0
      %1610 = vmatpush1.msra.mxu0 0.0
      %1611 = vmatprep.subr.mxu0 0.0
      %1612 = vmatpush1.msra.mxu0 0.0
      %1613 = vmatprep.subr.mxu0 0.0
      %1614 = vmatpush1.msra.mxu0 0.0
      %1615 = vmatprep.subr.mxu0 %v1581
      %1616 = vmatpush1.msra.mxu0 %v1579
      %1617 = vmatprep.subr.mxu0 0.0
      %1618 = vmatpush2.msra.mxu0 0.0
      %1619 = vmatprep.subr.mxu0 0.0
      %1620 = vmatpush2.msra.mxu0 0.0
      %1621 = vmatprep.subr.mxu0 0.0
      %1622 = vmatpush2.msra.mxu0 0.0
      %1623 = vmatprep.subr.mxu0 0.0
      %1624 = vmatpush2.msra.mxu0 0.0
      %1625 = vmatprep.subr.mxu0 0.0
      %1626 = vmatpush2.msra.mxu0 0.0
      %1627 = vmatprep.subr.mxu0 0.0
      %1628 = vmatpush2.msra.mxu0 0.0
      %1629 = vmatprep.subr.mxu0 0.0
      %1630 = vmatpush2.msra.mxu0 0.0
      %1631 = vmatprep.subr.mxu0 0.0
      %1632 = vmatpush2.msra.mxu0 0.0
      %1633 = vmatprep.subr.mxu0 0.0
      %1634 = vmatpush2.msra.mxu0 0.0
      %1635 = vmatprep.subr.mxu0 0.0
      %1636 = vmatpush2.msra.mxu0 0.0
      %1637 = vmatprep.subr.mxu0 0.0
      %1638 = vmatpush2.msra.mxu0 0.0
      %1639 = vmatprep.subr.mxu0 0.0
      %1640 = vmatpush2.msra.mxu0 0.0
      %1641 = vmatprep.subr.mxu0 0.0
      %1642 = vmatpush2.msra.mxu0 0.0
      %1643 = vmatprep.subr.mxu0 0.0
      %1644 = vmatpush2.msra.mxu0 0.0
      %1645 = vmatprep.subr.mxu0 0.0
      %1646 = vmatpush2.msra.mxu0 0.0
      %1647 = vmatprep.subr.mxu0 0.0
      %1648 = vmatpush2.msra.mxu0 0.0
      %1649 = vmatprep.mubr.f32.mxu0 0.0
      %1650 = vmatmul.mubr.f32.gmra.mxu0 %v1577
      %v1651 = vpop.f32.mrf.mxu0
      %v1652 = vadd.f32 0.0, %v1651
      %v1653 = vpop.f32.mrf.mxu0
      %v1654 = vadd.f32 0.0, %v1653
      %1655 = vdwg.mxu0
      %1656 = vmatprep.subr.mxu0 0.0
      %1657 = vmatpush1.msra.mxu0 0.0
      %1658 = vmatprep.subr.mxu0 0.0
      %1659 = vmatpush1.msra.mxu0 0.0
      %1660 = vmatprep.subr.mxu0 0.0
      %1661 = vmatpush1.msra.mxu0 0.0
      %1662 = vmatprep.subr.mxu0 0.0
      %1663 = vmatpush1.msra.mxu0 0.0
      %1664 = vmatprep.subr.mxu0 0.0
      %1665 = vmatpush1.msra.mxu0 0.0
      %1666 = vmatprep.subr.mxu0 0.0
      %1667 = vmatpush1.msra.mxu0 0.0
      %1668 = vmatprep.subr.mxu0 0.0
      %1669 = vmatpush1.msra.mxu0 0.0
      %1670 = vmatprep.subr.mxu0 0.0
      %1671 = vmatpush1.msra.mxu0 0.0
      %1672 = vmatprep.subr.mxu0 0.0
      %1673 = vmatpush1.msra.mxu0 0.0
      %1674 = vmatprep.subr.mxu0 0.0
      %1675 = vmatpush1.msra.mxu0 0.0
      %1676 = vmatprep.subr.mxu0 0.0
      %1677 = vmatpush1.msra.mxu0 0.0
      %1678 = vmatprep.subr.mxu0 0.0
      %1679 = vmatpush1.msra.mxu0 0.0
      %1680 = vmatprep.subr.mxu0 0.0
      %1681 = vmatpush1.msra.mxu0 0.0
      %1682 = vmatprep.subr.mxu0 0.0
      %1683 = vmatpush1.msra.mxu0 0.0
      %1684 = vmatprep.subr.mxu0 0.0
      %1685 = vmatpush1.msra.mxu0 0.0
      %1686 = vmatprep.subr.mxu0 0.0
      %1687 = vmatpush1.msra.mxu0 %v1583
      %1688 = vmatprep.subr.mxu0 0.0
      %1689 = vmatpush2.msra.mxu0 0.0
      %1690 = vmatprep.subr.mxu0 0.0
      %1691 = vmatpush2.msra.mxu0 0.0
      %1692 = vmatprep.subr.mxu0 0.0
      %1693 = vmatpush2.msra.mxu0 0.0
      %1694 = vmatprep.subr.mxu0 0.0
      %1695 = vmatpush2.msra.mxu0 0.0
      %1696 = vmatprep.subr.mxu0 0.0
      %1697 = vmatpush2.msra.mxu0 0.0
      %1698 = vmatprep.subr.mxu0 0.0
      %1699 = vmatpush2.msra.mxu0 0.0
      %1700 = vmatprep.subr.mxu0 0.0
      %1701 = vmatpush2.msra.mxu0 0.0
      %1702 = vmatprep.subr.mxu0 0.0
      %1703 = vmatpush2.msra.mxu0 0.0
      %1704 = vmatprep.subr.mxu0 0.0
      %1705 = vmatpush2.msra.mxu0 0.0
      %1706 = vmatprep.subr.mxu0 0.0
      %1707 = vmatpush2.msra.mxu0 0.0
      %1708 = vmatprep.subr.mxu0 0.0
      %1709 = vmatpush2.msra.mxu0 0.0
      %1710 = vmatprep.subr.mxu0 0.0
      %1711 = vmatpush2.msra.mxu0 0.0
      %1712 = vmatprep.subr.mxu0 0.0
      %1713 = vmatpush2.msra.mxu0 0.0
      %1714 = vmatprep.subr.mxu0 0.0
      %1715 = vmatpush2.msra.mxu0 0.0
      %1716 = vmatprep.subr.mxu0 0.0
      %1717 = vmatpush2.msra.mxu0 0.0
      %1718 = vmatprep.subr.mxu0 0.0
      %1719 = vmatpush2.msra.mxu0 0.0
      %1720 = vmatprep.mubr.f32.mxu0 0.0
      %1721 = vmatmul.mubr.f32.gmra.mxu0 %v1577
      %v1722 = vpop.f32.mrf.mxu0
      %v1723 = vadd.f32 0.0, %v1722
      %v1724 = vpop.f32.mrf.mxu0
      %1725 = vdwg.mxu0
      %v1726 = vadd.f32 %v1557, %v1652
      %v1727 = vadd.f32 %v1558, %v1654
      %v1728 = vadd.f32 %v1559, %v1723
      %v1729 = vld [vmem:[%s217] sm:$0xff]
      %1731 = vset.pattern.permute.xlu0 0
      %1732 = vperm.xlu0 %1731, %v1729
      %v1733 = vpop.permute.xlu0 %1732
      %v1735 = vmul.f32 %v1726, %v1733
      %v1736 = vmul.f32 %v1727, %v1733
      %v1737 = vmul.f32 %v1728, %v1733
      %1738 = vset.pattern.permute.xlu0 1
      %1739 = vperm.xlu0 %1738, %v1729
      %v1740 = vpop.permute.xlu0 %1739
      %v1742 = vadd.f32 %v1735, %v1740
      %v1743 = vadd.f32 %v1736, %v1740
      %v1744 = vadd.f32 %v1737, %v1740
      %vm1745 = vcmp.ge.f32.partialorder %v1742, 0.0
      %vm1746 = vcmp.ge.f32.partialorder %v1743, 0.0
      %vm1747 = vcmp.ge.f32.partialorder %v1744, 0.0
      %v1748 = vmul.f32 %v1742, 0.2
      %v1749 = vmul.f32 %v1743, 0.2
      %v1750 = vmul.f32 %v1744, 0.2
      %v1751 = vsel %vm1745, %v1742, %v1748
      %v1752 = vsel %vm1746, %v1743, %v1749
      %v1753 = vsel %vm1747, %v1744, %v1750
      %1754 = vst [vmem:[#allocation2] sm:$0xff] %v1751
      %1755 = vst [vmem:[#allocation2 + $0x8] sm:$0xff] %v1752
      %vm1756 = vcmask 261120
      %1757 = vst.msk [vmem:[#allocation2 + $0x10] sm:$0xff] %vm1756, %v1753
      %v1758 = vld [vmem:[#allocation2] sm:$0xff]
      %vm1759 = vcmask 130048
      %1760 = vst.msk [vmem:[%s226] sm:$0xff] %vm1759, %v1758
      %v1761 = vld [vmem:[#allocation2] sm:$0xff]
      %1763 = vrot.lane.b32.xlu0 %v1761, 126
      %v1764 = vpop.permute.xlu0 %1763
      %vm1766 = vcmask 261248
      %1767 = vst.msk [vmem:[%s226] sm:$0xff] %vm1766, %v1764
      %v1768 = vld [vmem:[#allocation2] sm:$0xff]
      %1770 = vrot.lane.b32.xlu0 %v1768, 124
      %v1771 = vpop.permute.xlu0 %1770
      %vm1773 = vcmask 392448
      %1774 = vst.msk [vmem:[%s226] sm:$0xff] %vm1773, %v1771
      %v1775 = vld [vmem:[#allocation2] sm:$0xff]
      %1777 = vrot.lane.b32.xlu0 %v1775, 122
      %v1778 = vpop.permute.xlu0 %1777
      %vm1780 = vcmask 523648
      %1781 = vst.msk [vmem:[%s226] sm:$0xff] %vm1780, %v1778
      %v1782 = vld [vmem:[#allocation2] sm:$0xff]
      %1784 = vrot.lane.b32.xlu0 %v1782, 120
      %v1785 = vpop.permute.xlu0 %1784
      %vm1787 = vcmask 654848
      %1788 = vst.msk [vmem:[%s226] sm:$0xff] %vm1787, %v1785
      %v1789 = vld [vmem:[#allocation2] sm:$0xff]
      %1791 = vrot.lane.b32.xlu0 %v1789, 118
      %v1792 = vpop.permute.xlu0 %1791
      %vm1794 = vcmask 786048
      %1795 = vst.msk [vmem:[%s226] sm:$0xff] %vm1794, %v1792
      %v1796 = vld [vmem:[#allocation2] sm:$0xff]
      %1798 = vrot.lane.b32.xlu0 %v1796, 116
      %v1799 = vpop.permute.xlu0 %1798
      %vm1801 = vcmask 917248
      %1802 = vst.msk [vmem:[%s226] sm:$0xff] %vm1801, %v1799
      %v1803 = vld [vmem:[#allocation2] sm:$0xff]
      %v1804 = vld [vmem:[#allocation2 + $0x8] sm:$0xff]
      %1807 = vrot.lane.b32.xlu0 %v1803, 114
      %v1808 = vpop.permute.xlu0 %1807
      %1809 = vrot.lane.b32.xlu0 %v1804, 114
      %v1810 = vpop.permute.xlu0 %1809
      %vm1811 = vcmask 932864
      %v1812 = vsel %vm1811, %v1808, %v1810
      %vm1814 = vcmask 1048448
      %1815 = vst.msk [vmem:[%s226] sm:$0xff] %vm1814, %v1812
      %v1816 = vld [vmem:[#allocation2 + $0x8] sm:$0xff]
      %1818 = vrot.lane.b32.xlu0 %v1816, 112
      %v1819 = vpop.permute.xlu0 %1818
      %1821 = vst.msk [vmem:[%s226 + $0x8] sm:$0xff] %vm1759, %v1819
      %v1822 = vld [vmem:[#allocation2 + $0x8] sm:$0xff]
      %1824 = vrot.lane.b32.xlu0 %v1822, 110
      %v1825 = vpop.permute.xlu0 %1824
      %1827 = vst.msk [vmem:[%s226 + $0x8] sm:$0xff] %vm1766, %v1825
      %v1828 = vld [vmem:[#allocation2 + $0x8] sm:$0xff]
      %1830 = vrot.lane.b32.xlu0 %v1828, 108
      %v1831 = vpop.permute.xlu0 %1830
      %1833 = vst.msk [vmem:[%s226 + $0x8] sm:$0xff] %vm1773, %v1831
      %v1834 = vld [vmem:[#allocation2 + $0x8] sm:$0xff]
      %1836 = vrot.lane.b32.xlu0 %v1834, 106
      %v1837 = vpop.permute.xlu0 %1836
      %1839 = vst.msk [vmem:[%s226 + $0x8] sm:$0xff] %vm1780, %v1837
      %v1840 = vld [vmem:[#allocation2 + $0x8] sm:$0xff]
      %1842 = vrot.lane.b32.xlu0 %v1840, 104
      %v1843 = vpop.permute.xlu0 %1842
      %1845 = vst.msk [vmem:[%s226 + $0x8] sm:$0xff] %vm1787, %v1843
      %v1846 = vld [vmem:[#allocation2 + $0x8] sm:$0xff]
      %1848 = vrot.lane.b32.xlu0 %v1846, 102
      %v1849 = vpop.permute.xlu0 %1848
      %1851 = vst.msk [vmem:[%s226 + $0x8] sm:$0xff] %vm1794, %v1849
      %v1852 = vld [vmem:[#allocation2 + $0x8] sm:$0xff]
      %v1853 = vld [vmem:[#allocation2 + $0x10] sm:$0xff]
      %1856 = vrot.lane.b32.xlu0 %v1852, 100
      %v1857 = vpop.permute.xlu0 %1856
      %1858 = vrot.lane.b32.xlu0 %v1853, 100
      %v1859 = vpop.permute.xlu0 %1858
      %vm1860 = vcmask 818176
      %v1861 = vsel %vm1860, %v1857, %v1859
      %1863 = vst.msk [vmem:[%s226 + $0x8] sm:$0xff] %vm1801, %v1861
      %v1864 = vld [vmem:[#allocation2 + $0x10] sm:$0xff]
      %1866 = vrot.lane.b32.xlu0 %v1864, 98
      %v1867 = vpop.permute.xlu0 %1866
      %1869 = vst.msk [vmem:[%s226 + $0x8] sm:$0xff] %vm1814, %v1867
      %p1870 = scmp.lt.s32.totalorder %s18, 1
      %s1871 = scalar_select %p1870, %s18, 1
      %p1872 = scmp.lt.s32.totalorder %s19, 0
      %s1873 = scalar_select %p1872, %s19, 0
      %s1874 = smul.addr %s1873, 2
      %s1875 = smul.addr %s1871, 2
      %s1876 = sadd.s32 %s1874, %s1875
      %s1877 = smul.addr %s1876, 8
      %s1878 = scalar_lea.vmem %s3, %s1877
      // Predicated region
      $region33: #{conv_norm_relu.3} parent=31 // pred_check
        %p1879 = pneg %p124
      $region34: #{conv_norm_relu.3} parent=31 // pred_check_branch
        %1881 = sbr.rel (%p1879) target = $region36
      $region35: #{conv_norm_relu.3} parent=31 // pred_region
        _
      $region36: #{conv_norm_relu.3} parent=31 // pred_fallthru
        _
    $region32: #{conv_norm_relu.3} parent=5 // pred_fallthru
      _
    %p1882 = scmp.le.s32.totalorder 2, %s9
    // Predicated region
    $region37: #{conv_norm_relu.3} parent=5 // pred_check
      %p1883 = pneg %p1882
    $region38: #{conv_norm_relu.3} parent=5 // pred_check_branch
      %1885 = sbr.rel (%p1883) target = $region40
    $region39: #{conv_norm_relu.3} parent=5 // pred_region
      %s1886 = ssub.s32 %s9, 2
      // Predicated region
      $region41: #{conv_norm_relu.3} parent=39 // pred_check
        %p1887 = pneg %p130
      $region42: #{conv_norm_relu.3} parent=39 // pred_check_branch
        %1889 = sbr.rel (%p1887) target = $region44
      $region43: #{conv_norm_relu.3} parent=39 // pred_region
        %p1890 = scmp.lt.s32.totalorder %s20, 1
        %s1891 = scalar_select %p1890, %s20, 1
        %p1892 = scmp.lt.s32.totalorder %s21, 0
        %s1893 = scalar_select %p1892, %s21, 0
        %s1894 = smul.addr %s1893, 2
        %s1895 = smul.addr %s1891, 2
        %s1896 = sadd.s32 %s1894, %s1895
        %s1897 = smul.addr %s1896, 8
        %s1898 = scalar_lea.vmem %s3, %s1897
      $region44: #{conv_norm_relu.3} parent=39 // pred_fallthru
        _
    $region40: #{conv_norm_relu.3} parent=5 // pred_fallthru
      _
  $region6: #{conv_norm_relu.3} parent=0 // loop_footer
    %s13 = sadd.s32 1, %s9
  $region7: #{conv_norm_relu.3} parent=0 // loop_footer_branch
    %8 = sbr.rel target = $region3
  $region8: #{conv_norm_relu.3} parent=0 // loop_exit
    _

// kernel: conv_norm_relu.2
$region0: #{conv_norm_relu.2}
  #allocation0 [shape = 'u32[]', space=smem, size = 0x4, offset = 0x4, fixed_abs, tag = 'smem constant byte address 0x4 - core index']
  #allocation1 [shape = 'u32[144,128]{1,0:T(1,128)}', space=vmem, size = 0x12000, scoped, tag = 'internal scratch']
  %s0 = inlined_call_operand.vmem [shape: f32[2,4,326], index: 0, kind: input, shape index: {}]
  %s1 = inlined_call_operand.vmem [shape: f32[9,8,4], index: 1, kind: input, shape index: {}]
  %s2 = inlined_call_operand.vmem [shape: f32[1,288], index: 2, kind: input, shape index: {}]
  %s3 = inlined_call_operand.vmem [shape: f32[2,8,2], index: 3, kind: output, shape index: {}]
  %s4 = sld [smem:[#allocation0]]
  $region45: #{conv_norm_relu.2} parent=0
    _
  %s6 = ssub.s32 1, %s4
  %s7 = scalar_select 0, %s6, %s4
  loop: start=0, step=1, limit=4
  $region2: #{conv_norm_relu.2} parent=0 // loop_pre_header
    _
  $region3: #{conv_norm_relu.2} parent=0 // loop_header
    %s9 = sphi 0, %s13
    %p10 = scmp.ge.s32.totalorder %s9, 4
    %s16 = sphi 0, %s28
    %s17 = sphi 0, %s24
    %s18 = sphi 0, %s16
    %s19 = sphi 0, %s17
    %s20 = sphi 0, %s18
    %s21 = sphi 0, %s19
    %s31 = sphi 0, %s33
    %s34 = sphi 0, %s31
    %s35 = sphi 0, %s34
    %s51 = sphi 0, %s35
    %s57 = sphi 0, %s59
    %s60 = sphi 0, %s57
    %s61 = sphi 0, %s60
    %s77 = sphi 0, %s61
    %s81 = sphi 0, %s81
    %s83 = sphi 0, %s81
    %s84 = sphi 0, %s83
    %s98 = sphi 0, %s84
    %s106 = sphi 0, %s108
    %s109 = sphi 0, %s106
    %s110 = sphi 0, %s109
    %s126 = sphi 0, %s110
  $region4: #{conv_norm_relu.2} parent=0 // loop_header_branch
    %12 = sbr.rel (%p10) target = $region8
  $region5: #{conv_norm_relu.2} parent=0 // loop_body
    %s14 = ssub.s32 %s9, 1
    %s15 = ssub.s32 %s9, 2
    %s22 = sadd.s32 1, %s17
    %p23 = scmp.ge.s32.totalorder %s22, 1
    %s24 = scalar_select %p23, 0, %s22
    %s25 = sadd.s32 1, %s16
    %s26 = scalar_select %p23, %s25, %s16
    %p27 = scmp.ge.s32.totalorder %s26, 2
    %s28 = scalar_select %p27, 0, %s26
    %s29 = ssub.s32 %s16, %s28
    %p30 = scmp.eq.s32.totalorder %s29, 0
    %s32 = sadd.s32 %s31, 1
    %s33 = scalar_select %p30, %s31, %s32
    %p36 = pneg %p30
    %p37 = scmp.eq.s32.totalorder %s9, 1
    %p38 = por %p36, %p37
    %p39 = scmp.ne.s32.totalorder %s31, %s34
    %p40 = scmp.eq.s32.totalorder %s9, 0
    %p41 = por %p39, %p40
    %p42 = scmp.ne.s32.totalorder %s31, %s34
    %p43 = scmp.eq.s32.totalorder %s14, 1
    %p44 = por %p42, %p43
    %p45 = scmp.ne.s32.totalorder %s34, %s35
    %p46 = scmp.eq.s32.totalorder %s14, 0
    %p47 = por %p45, %p46
    %p48 = scmp.ne.s32.totalorder %s34, %s35
    %p49 = scmp.eq.s32.totalorder %s15, 1
    %p50 = por %p48, %p49
    %p52 = scmp.ne.s32.totalorder %s35, %s51
    %p53 = scmp.eq.s32.totalorder %s15, 0
    %p54 = por %p52, %p53
    %s55 = ssub.s32 %s17, %s24
    %p56 = scmp.eq.s32.totalorder %s55, 0
    %s58 = sadd.s32 %s57, 1
    %s59 = scalar_select %p56, %s57, %s58
    %p62 = pneg %p56
    %p63 = scmp.eq.s32.totalorder %s9, 1
    %p64 = por %p62, %p63
    %p65 = scmp.ne.s32.totalorder %s57, %s60
    %p66 = scmp.eq.s32.totalorder %s9, 0
    %p67 = por %p65, %p66
    %p68 = scmp.ne.s32.totalorder %s57, %s60
    %p69 = scmp.eq.s32.totalorder %s14, 1
    %p70 = por %p68, %p69
    %p71 = scmp.ne.s32.totalorder %s60, %s61
    %p72 = scmp.eq.s32.totalorder %s14, 0
    %p73 = por %p71, %p72
    %p74 = scmp.ne.s32.totalorder %s60, %s61
    %p75 = scmp.eq.s32.totalorder %s15, 1
    %p76 = por %p74, %p75
    %p78 = scmp.ne.s32.totalorder %s61, %s77
    %p79 = scmp.eq.s32.totalorder %s15, 0
    %p80 = por %p78, %p79
    %s82 = sadd.s32 %s81, 1
    %p85 = scmp.eq.s32.totalorder %s9, 1
    %p86 = scmp.ne.s32.totalorder %s81, %s83
    %p87 = scmp.eq.s32.totalorder %s9, 0
    %p88 = por %p86, %p87
    %p89 = scmp.ne.s32.totalorder %s81, %s83
    %p90 = scmp.eq.s32.totalorder %s14, 1
    %p91 = por %p89, %p90
    %p92 = scmp.ne.s32.totalorder %s83, %s84
    %p93 = scmp.eq.s32.totalorder %s14, 0
    %p94 = por %p92, %p93
    %p95 = scmp.ne.s32.totalorder %s83, %s84
    %p96 = scmp.eq.s32.totalorder %s15, 1
    %p97 = por %p95, %p96
    %p99 = scmp.ne.s32.totalorder %s84, %s98
    %p100 = scmp.eq.s32.totalorder %s15, 0
    %p101 = por %p99, %p100
    %s102 = ssub.s32 %s16, %s28
    %s103 = ssub.s32 %s17, %s24
    %s104 = sor.u32 %s102, %s103
    %p105 = scmp.eq.s32.totalorder %s104, 0
    %s107 = sadd.s32 %s106, 1
    %s108 = scalar_select %p105, %s106, %s107
    %p111 = pneg %p105
    %p112 = scmp.eq.s32.totalorder %s9, 1
    %p113 = por %p111, %p112
    %p114 = scmp.ne.s32.totalorder %s106, %s109
    %p115 = scmp.eq.s32.totalorder %s9, 0
    %p116 = por %p114, %p115
    %p117 = scmp.ne.s32.totalorder %s106, %s109
    %p118 = scmp.eq.s32.totalorder %s14, 1
    %p119 = por %p117, %p118
    %p120 = scmp.ne.s32.totalorder %s109, %s110
    %p121 = scmp.eq.s32.totalorder %s14, 0
    %p122 = por %p120, %p121
    %p123 = scmp.ne.s32.totalorder %s109, %s110
    %p124 = scmp.eq.s32.totalorder %s15, 1
    %p125 = por %p123, %p124
    %p127 = scmp.ne.s32.totalorder %s110, %s126
    %p128 = scmp.eq.s32.totalorder %s15, 0
    %p129 = por %p127, %p128
    %p130 = scmp.le.s32.totalorder 1, %s9
    %p131 = scmp.lt.s32.totalorder %s9, 3
    %p132 = pnand %p130, %p131
    %p133 = pneg %p132
    // Predicated region
    $region9: #{conv_norm_relu.2} parent=5 // pred_check
      _
    $region10: #{conv_norm_relu.2} parent=5 // pred_check_branch
      %135 = sbr.rel (%p132) target = $region12
    $region11: #{conv_norm_relu.2} parent=5 // pred_region
      %s136 = ssub.s32 %s9, 1
      // Predicated region
      $region13: #{conv_norm_relu.2} parent=11 // pred_check
        %p137 = pneg %p73
      $region14: #{conv_norm_relu.2} parent=11 // pred_check_branch
        %139 = sbr.rel (%p137) target = $region16
      $region15: #{conv_norm_relu.2} parent=11 // pred_region
        %p140 = scmp.lt.s32.totalorder %s19, 0
        %s141 = scalar_select %p140, %s19, 0
        %s142 = smul.addr %s141, 8
        %s143 = scalar_lea.vmem %s1, %s142
      $region16: #{conv_norm_relu.2} parent=11 // pred_fallthru
        _
      // Predicated region
      $region17: #{conv_norm_relu.2} parent=11 // pred_check
        %p144 = pneg %p94
      $region18: #{conv_norm_relu.2} parent=11 // pred_check_branch
        %146 = sbr.rel (%p144) target = $region20
      $region19: #{conv_norm_relu.2} parent=11 // pred_region
        _
      $region20: #{conv_norm_relu.2} parent=11 // pred_fallthru
        _
    $region12: #{conv_norm_relu.2} parent=5 // pred_fallthru
      _
    %p147 = scmp.lt.s32.totalorder %s9, 2
    // Predicated region
    $region21: #{conv_norm_relu.2} parent=5 // pred_check
      %p148 = pneg %p147
    $region22: #{conv_norm_relu.2} parent=5 // pred_check_branch
      %150 = sbr.rel (%p148) target = $region24
    $region23: #{conv_norm_relu.2} parent=5 // pred_region
      // Predicated region
      $region25: #{conv_norm_relu.2} parent=23 // pred_check
        %p151 = pneg %p41
      $region26: #{conv_norm_relu.2} parent=23 // pred_check_branch
        %153 = sbr.rel (%p151) target = $region28
      $region27: #{conv_norm_relu.2} parent=23 // pred_region
        %p154 = scmp.lt.s32.totalorder %s16, 1
        %s155 = scalar_select %p154, %s16, 1
        %s156 = smul.addr %s155, 3
        %s157 = smul.addr %s156, 4
        %s158 = scalar_lea.vmem %s0, %s157
      $region28: #{conv_norm_relu.2} parent=23 // pred_fallthru
        _
    $region24: #{conv_norm_relu.2} parent=5 // pred_fallthru
      _
    %p159 = scmp.le.s32.totalorder 1, %s9
    %p160 = scmp.lt.s32.totalorder %s9, 3
    %p161 = pnand %p159, %p160
    %p162 = pneg %p161
    // Predicated region
    $region29: #{conv_norm_relu.2} parent=5 // pred_check
      _
    $region30: #{conv_norm_relu.2} parent=5 // pred_check_branch
      %164 = sbr.rel (%p161) target = $region32
    $region31: #{conv_norm_relu.2} parent=5 // pred_region
      %s165 = ssub.s32 %s9, 1
      %p166 = scmp.lt.s32.totalorder %s18, 1
      %s167 = scalar_select %p166, %s18, 1
      %s168 = smul.addr %s167, 3
      %s169 = smul.addr %s168, 4
      %s170 = scalar_lea.vmem %s0, %s169
      %p171 = pneg %p47
      %p172 = pneg %p44
      %p173 = scmp.lt.s32.totalorder %s19, 0
      %s174 = scalar_select %p173, %s19, 0
      %s175 = smul.addr %s174, 8
      %s176 = scalar_lea.vmem %s1, %s175
      %p177 = pneg %p73
      %p178 = pneg %p70
      %p179 = pneg %p94
      %p180 = pneg %p91
      %p181 = pneg %p122
      %p182 = pneg %p119
      %p183 = scmp.lt.s32.totalorder %s18, 1
      %s184 = scalar_select %p183, %s18, 1
      %p185 = scmp.lt.s32.totalorder %s19, 0
      %s186 = scalar_select %p185, %s19, 0
      %s187 = sadd.s32 %s186, %s184
      %s188 = smul.addr %s187, 8
      %s189 = scalar_lea.vmem %s3, %s188
      %p190 = scmp.lt.s32.totalorder %s18, 1
      %s191 = scalar_select %p190, %s18, 1
      %s192 = smul.addr %s191, 3
      %s193 = smul.addr %s192, 4
      %s194 = scalar_lea.vmem %s0, %s193
      %p195 = scmp.lt.s32.totalorder %s19, 0
      %s196 = scalar_select %p195, %s19, 0
      %s197 = smul.addr %s196, 8
      %s198 = scalar_lea.vmem %s1, %s197
      %p199 = scmp.lt.s32.totalorder %s18, 1
      %s200 = scalar_select %p199, %s18, 1
      %p201 = scmp.lt.s32.totalorder %s19, 0
      %s202 = scalar_select %p201, %s19, 0
      %s203 = sadd.s32 %s202, %s200
      %s204 = smul.addr %s203, 8
      %s205 = scalar_lea.vmem %s3, %s204
      %v206 = vld [vmem:[%s194] sm:$0xff]
      %v207 = vld [vmem:[%s194 + $0x8] sm:$0xf]
      %v208 = vld [vmem:[%s198] sm:$0xff]
      %s209 = scalar_lea.vmem %s198, 8
      %v210 = vld [vmem:[%s209] sm:$0xff]
      %v213 = vcombine.high %v206, %v206
      %214 = vrot.lane.b32.xlu0 %v206, 127
      %v215 = vpop.permute.xlu0 %214
      %216 = vrot.lane.b32.xlu0 %v213, 127
      %v217 = vpop.permute.xlu0 %216
      %218 = vrot.lane.b32.xlu0 %v207, 127
      %v219 = vpop.permute.xlu0 %218
      %vm220 = vcmask 1039360
      %v221 = vsel %vm220, %v215, %v217
      %v222 = vsel %vm220, %v217, %v219
      %vm223 = vcmask 31744
      %v225 = vsel %vm223, %v210, 0
      %vm227 = vcmask 1043456
      %v228 = vsel %vm227, %v221, 0
      %v230 = vsel %vm227, %v222, 0
      %v232 = vsel %vm227, %v219, 0
      %234 = vmatprep.subr.mxu0 0.0
      %235 = vmatpush1.msra.mxu0 0.0
      %236 = vmatprep.subr.mxu0 0.0
      %237 = vmatpush1.msra.mxu0 0.0
      %238 = vmatprep.subr.mxu0 0.0
      %239 = vmatpush1.msra.mxu0 0.0
      %240 = vmatprep.subr.mxu0 0.0
      %241 = vmatpush1.msra.mxu0 0.0
      %242 = vmatprep.subr.mxu0 0.0
      %243 = vmatpush1.msra.mxu0 0.0
      %244 = vmatprep.subr.mxu0 0.0
      %245 = vmatpush1.msra.mxu0 0.0
      %246 = vmatprep.subr.mxu0 0.0
      %247 = vmatpush1.msra.mxu0 0.0
      %248 = vmatprep.subr.mxu0 0.0
      %249 = vmatpush1.msra.mxu0 0.0
      %250 = vmatprep.subr.mxu0 0.0
      %251 = vmatpush1.msra.mxu0 0.0
      %252 = vmatprep.subr.mxu0 0.0
      %253 = vmatpush1.msra.mxu0 0.0
      %254 = vmatprep.subr.mxu0 0.0
      %255 = vmatpush1.msra.mxu0 0.0
      %256 = vmatprep.subr.mxu0 0.0
      %257 = vmatpush1.msra.mxu0 0.0
      %258 = vmatprep.subr.mxu0 0.0
      %259 = vmatpush1.msra.mxu0 0.0
      %260 = vmatprep.subr.mxu0 0.0
      %261 = vmatpush1.msra.mxu0 0.0
      %262 = vmatprep.subr.mxu0 0.0
      %263 = vmatpush1.msra.mxu0 0.0
      %264 = vmatprep.subr.mxu0 %v230
      %265 = vmatpush1.msra.mxu0 %v228
      %266 = vmatprep.subr.mxu0 0.0
      %267 = vmatpush2.msra.mxu0 0.0
      %268 = vmatprep.subr.mxu0 0.0
      %269 = vmatpush2.msra.mxu0 0.0
      %270 = vmatprep.subr.mxu0 0.0
      %271 = vmatpush2.msra.mxu0 0.0
      %272 = vmatprep.subr.mxu0 0.0
      %273 = vmatpush2.msra.mxu0 0.0
      %274 = vmatprep.subr.mxu0 0.0
      %275 = vmatpush2.msra.mxu0 0.0
      %276 = vmatprep.subr.mxu0 0.0
      %277 = vmatpush2.msra.mxu0 0.0
      %278 = vmatprep.subr.mxu0 0.0
      %279 = vmatpush2.msra.mxu0 0.0
      %280 = vmatprep.subr.mxu0 0.0
      %281 = vmatpush2.msra.mxu0 0.0
      %282 = vmatprep.subr.mxu0 0.0
      %283 = vmatpush2.msra.mxu0 0.0
      %284 = vmatprep.subr.mxu0 0.0
      %285 = vmatpush2.msra.mxu0 0.0
      %286 = vmatprep.subr.mxu0 0.0
      %287 = vmatpush2.msra.mxu0 0.0
      %288 = vmatprep.subr.mxu0 0.0
      %289 = vmatpush2.msra.mxu0 0.0
      %290 = vmatprep.subr.mxu0 0.0
      %291 = vmatpush2.msra.mxu0 0.0
      %292 = vmatprep.subr.mxu0 0.0
      %293 = vmatpush2.msra.mxu0 0.0
      %294 = vmatprep.subr.mxu0 0.0
      %295 = vmatpush2.msra.mxu0 0.0
      %296 = vmatprep.subr.mxu0 0.0
      %297 = vmatpush2.msra.mxu0 0.0
      %298 = vmatprep.mubr.f32.mxu0 0.0
      %299 = vmatmul.mubr.f32.gmra.mxu0 %v225
      %v300 = vpop.f32.mrf.mxu0
      %v301 = vadd.f32 0.0, %v300
      %v302 = vpop.f32.mrf.mxu0
      %v303 = vadd.f32 0.0, %v302
      %304 = vdwg.mxu0
      %305 = vmatprep.subr.mxu0 0.0
      %306 = vmatpush1.msra.mxu0 0.0
      %307 = vmatprep.subr.mxu0 0.0
      %308 = vmatpush1.msra.mxu0 0.0
      %309 = vmatprep.subr.mxu0 0.0
      %310 = vmatpush1.msra.mxu0 0.0
      %311 = vmatprep.subr.mxu0 0.0
      %312 = vmatpush1.msra.mxu0 0.0
      %313 = vmatprep.subr.mxu0 0.0
      %314 = vmatpush1.msra.mxu0 0.0
      %315 = vmatprep.subr.mxu0 0.0
      %316 = vmatpush1.msra.mxu0 0.0
      %317 = vmatprep.subr.mxu0 0.0
      %318 = vmatpush1.msra.mxu0 0.0
      %319 = vmatprep.subr.mxu0 0.0
      %320 = vmatpush1.msra.mxu0 0.0
      %321 = vmatprep.subr.mxu0 0.0
      %322 = vmatpush1.msra.mxu0 0.0
      %323 = vmatprep.subr.mxu0 0.0
      %324 = vmatpush1.msra.mxu0 0.0
      %325 = vmatprep.subr.mxu0 0.0
      %326 = vmatpush1.msra.mxu0 0.0
      %327 = vmatprep.subr.mxu0 0.0
      %328 = vmatpush1.msra.mxu0 0.0
      %329 = vmatprep.subr.mxu0 0.0
      %330 = vmatpush1.msra.mxu0 0.0
      %331 = vmatprep.subr.mxu0 0.0
      %332 = vmatpush1.msra.mxu0 0.0
      %333 = vmatprep.subr.mxu0 0.0
      %334 = vmatpush1.msra.mxu0 0.0
      %335 = vmatprep.subr.mxu0 0.0
      %336 = vmatpush1.msra.mxu0 %v232
      %337 = vmatprep.subr.mxu0 0.0
      %338 = vmatpush2.msra.mxu0 0.0
      %339 = vmatprep.subr.mxu0 0.0
      %340 = vmatpush2.msra.mxu0 0.0
      %341 = vmatprep.subr.mxu0 0.0
      %342 = vmatpush2.msra.mxu0 0.0
      %343 = vmatprep.subr.mxu0 0.0
      %344 = vmatpush2.msra.mxu0 0.0
      %345 = vmatprep.subr.mxu0 0.0
      %346 = vmatpush2.msra.mxu0 0.0
      %347 = vmatprep.subr.mxu0 0.0
      %348 = vmatpush2.msra.mxu0 0.0
      %349 = vmatprep.subr.mxu0 0.0
      %350 = vmatpush2.msra.mxu0 0.0
      %351 = vmatprep.subr.mxu0 0.0
      %352 = vmatpush2.msra.mxu0 0.0
      %353 = vmatprep.subr.mxu0 0.0
      %354 = vmatpush2.msra.mxu0 0.0
      %355 = vmatprep.subr.mxu0 0.0
      %356 = vmatpush2.msra.mxu0 0.0
      %357 = vmatprep.subr.mxu0 0.0
      %358 = vmatpush2.msra.mxu0 0.0
      %359 = vmatprep.subr.mxu0 0.0
      %360 = vmatpush2.msra.mxu0 0.0
      %361 = vmatprep.subr.mxu0 0.0
      %362 = vmatpush2.msra.mxu0 0.0
      %363 = vmatprep.subr.mxu0 0.0
      %364 = vmatpush2.msra.mxu0 0.0
      %365 = vmatprep.subr.mxu0 0.0
      %366 = vmatpush2.msra.mxu0 0.0
      %367 = vmatprep.subr.mxu0 0.0
      %368 = vmatpush2.msra.mxu0 0.0
      %369 = vmatprep.mubr.f32.mxu0 0.0
      %370 = vmatmul.mubr.f32.gmra.mxu0 %v225
      %v371 = vpop.f32.mrf.mxu0
      %v372 = vadd.f32 0.0, %v371
      %v373 = vpop.f32.mrf.mxu0
      %374 = vdwg.mxu0
      %v376 = vsel %vm223, %v208, 0
      %v378 = vsel %vm227, %v206, 0
      %v380 = vsel %vm227, %v213, 0
      %v382 = vsel %vm227, %v207, 0
      %384 = vmatprep.subr.mxu0 0.0
      %385 = vmatpush1.msra.mxu0 0.0
      %386 = vmatprep.subr.mxu0 0.0
      %387 = vmatpush1.msra.mxu0 0.0
      %388 = vmatprep.subr.mxu0 0.0
      %389 = vmatpush1.msra.mxu0 0.0
      %390 = vmatprep.subr.mxu0 0.0
      %391 = vmatpush1.msra.mxu0 0.0
      %392 = vmatprep.subr.mxu0 0.0
      %393 = vmatpush1.msra.mxu0 0.0
      %394 = vmatprep.subr.mxu0 0.0
      %395 = vmatpush1.msra.mxu0 0.0
      %396 = vmatprep.subr.mxu0 0.0
      %397 = vmatpush1.msra.mxu0 0.0
      %398 = vmatprep.subr.mxu0 0.0
      %399 = vmatpush1.msra.mxu0 0.0
      %400 = vmatprep.subr.mxu0 0.0
      %401 = vmatpush1.msra.mxu0 0.0
      %402 = vmatprep.subr.mxu0 0.0
      %403 = vmatpush1.msra.mxu0 0.0
      %404 = vmatprep.subr.mxu0 0.0
      %405 = vmatpush1.msra.mxu0 0.0
      %406 = vmatprep.subr.mxu0 0.0
      %407 = vmatpush1.msra.mxu0 0.0
      %408 = vmatprep.subr.mxu0 0.0
      %409 = vmatpush1.msra.mxu0 0.0
      %410 = vmatprep.subr.mxu0 0.0
      %411 = vmatpush1.msra.mxu0 0.0
      %412 = vmatprep.subr.mxu0 0.0
      %413 = vmatpush1.msra.mxu0 0.0
      %414 = vmatprep.subr.mxu0 %v380
      %415 = vmatpush1.msra.mxu0 %v378
      %416 = vmatprep.subr.mxu0 0.0
      %417 = vmatpush2.msra.mxu0 0.0
      %418 = vmatprep.subr.mxu0 0.0
      %419 = vmatpush2.msra.mxu0 0.0
      %420 = vmatprep.subr.mxu0 0.0
      %421 = vmatpush2.msra.mxu0 0.0
      %422 = vmatprep.subr.mxu0 0.0
      %423 = vmatpush2.msra.mxu0 0.0
      %424 = vmatprep.subr.mxu0 0.0
      %425 = vmatpush2.msra.mxu0 0.0
      %426 = vmatprep.subr.mxu0 0.0
      %427 = vmatpush2.msra.mxu0 0.0
      %428 = vmatprep.subr.mxu0 0.0
      %429 = vmatpush2.msra.mxu0 0.0
      %430 = vmatprep.subr.mxu0 0.0
      %431 = vmatpush2.msra.mxu0 0.0
      %432 = vmatprep.subr.mxu0 0.0
      %433 = vmatpush2.msra.mxu0 0.0
      %434 = vmatprep.subr.mxu0 0.0
      %435 = vmatpush2.msra.mxu0 0.0
      %436 = vmatprep.subr.mxu0 0.0
      %437 = vmatpush2.msra.mxu0 0.0
      %438 = vmatprep.subr.mxu0 0.0
      %439 = vmatpush2.msra.mxu0 0.0
      %440 = vmatprep.subr.mxu0 0.0
      %441 = vmatpush2.msra.mxu0 0.0
      %442 = vmatprep.subr.mxu0 0.0
      %443 = vmatpush2.msra.mxu0 0.0
      %444 = vmatprep.subr.mxu0 0.0
      %445 = vmatpush2.msra.mxu0 0.0
      %446 = vmatprep.subr.mxu0 0.0
      %447 = vmatpush2.msra.mxu0 0.0
      %448 = vmatprep.mubr.f32.mxu0 0.0
      %449 = vmatmul.mubr.f32.gmra.mxu0 %v376
      %v450 = vpop.f32.mrf.mxu0
      %v451 = vadd.f32 %v301, %v450
      %v452 = vpop.f32.mrf.mxu0
      %v453 = vadd.f32 %v303, %v452
      %454 = vdwg.mxu0
      %455 = vmatprep.subr.mxu0 0.0
      %456 = vmatpush1.msra.mxu0 0.0
      %457 = vmatprep.subr.mxu0 0.0
      %458 = vmatpush1.msra.mxu0 0.0
      %459 = vmatprep.subr.mxu0 0.0
      %460 = vmatpush1.msra.mxu0 0.0
      %461 = vmatprep.subr.mxu0 0.0
      %462 = vmatpush1.msra.mxu0 0.0
      %463 = vmatprep.subr.mxu0 0.0
      %464 = vmatpush1.msra.mxu0 0.0
      %465 = vmatprep.subr.mxu0 0.0
      %466 = vmatpush1.msra.mxu0 0.0
      %467 = vmatprep.subr.mxu0 0.0
      %468 = vmatpush1.msra.mxu0 0.0
      %469 = vmatprep.subr.mxu0 0.0
      %470 = vmatpush1.msra.mxu0 0.0
      %471 = vmatprep.subr.mxu0 0.0
      %472 = vmatpush1.msra.mxu0 0.0
      %473 = vmatprep.subr.mxu0 0.0
      %474 = vmatpush1.msra.mxu0 0.0
      %475 = vmatprep.subr.mxu0 0.0
      %476 = vmatpush1.msra.mxu0 0.0
      %477 = vmatprep.subr.mxu0 0.0
      %478 = vmatpush1.msra.mxu0 0.0
      %479 = vmatprep.subr.mxu0 0.0
      %480 = vmatpush1.msra.mxu0 0.0
      %481 = vmatprep.subr.mxu0 0.0
      %482 = vmatpush1.msra.mxu0 0.0
      %483 = vmatprep.subr.mxu0 0.0
      %484 = vmatpush1.msra.mxu0 0.0
      %485 = vmatprep.subr.mxu0 0.0
      %486 = vmatpush1.msra.mxu0 %v382
      %487 = vmatprep.subr.mxu0 0.0
      %488 = vmatpush2.msra.mxu0 0.0
      %489 = vmatprep.subr.mxu0 0.0
      %490 = vmatpush2.msra.mxu0 0.0
      %491 = vmatprep.subr.mxu0 0.0
      %492 = vmatpush2.msra.mxu0 0.0
      %493 = vmatprep.subr.mxu0 0.0
      %494 = vmatpush2.msra.mxu0 0.0
      %495 = vmatprep.subr.mxu0 0.0
      %496 = vmatpush2.msra.mxu0 0.0
      %497 = vmatprep.subr.mxu0 0.0
      %498 = vmatpush2.msra.mxu0 0.0
      %499 = vmatprep.subr.mxu0 0.0
      %500 = vmatpush2.msra.mxu0 0.0
      %501 = vmatprep.subr.mxu0 0.0
      %502 = vmatpush2.msra.mxu0 0.0
      %503 = vmatprep.subr.mxu0 0.0
      %504 = vmatpush2.msra.mxu0 0.0
      %505 = vmatprep.subr.mxu0 0.0
      %506 = vmatpush2.msra.mxu0 0.0
      %507 = vmatprep.subr.mxu0 0.0
      %508 = vmatpush2.msra.mxu0 0.0
      %509 = vmatprep.subr.mxu0 0.0
      %510 = vmatpush2.msra.mxu0 0.0
      %511 = vmatprep.subr.mxu0 0.0
      %512 = vmatpush2.msra.mxu0 0.0
      %513 = vmatprep.subr.mxu0 0.0
      %514 = vmatpush2.msra.mxu0 0.0
      %515 = vmatprep.subr.mxu0 0.0
      %516 = vmatpush2.msra.mxu0 0.0
      %517 = vmatprep.subr.mxu0 0.0
      %518 = vmatpush2.msra.mxu0 0.0
      %519 = vmatprep.mubr.f32.mxu0 0.0
      %520 = vmatmul.mubr.f32.gmra.mxu0 %v376
      %v521 = vpop.f32.mrf.mxu0
      %v522 = vadd.f32 %v372, %v521
      %v523 = vpop.f32.mrf.mxu0
      %524 = vdwg.mxu0
      %v525 = vld [vmem:[%s194] sm:$0xff]
      %v526 = vld [vmem:[%s194 + $0x8] sm:$0xf]
      %s527 = scalar_lea.vmem %s198, 16
      %v528 = vld [vmem:[%s527] sm:$0xff]
      %v531 = vcombine.high %v525, %v525
      %532 = vrot.lane.b32.xlu0 %v525, 126
      %v533 = vpop.permute.xlu0 %532
      %534 = vrot.lane.b32.xlu0 %v531, 126
      %v535 = vpop.permute.xlu0 %534
      %536 = vrot.lane.b32.xlu0 %v526, 126
      %v537 = vpop.permute.xlu0 %536
      %vm538 = vcmask 1031168
      %v539 = vsel %vm538, %v533, %v535
      %v540 = vsel %vm538, %v535, %v537
      %v542 = vsel %vm223, %v528, 0
      %v544 = vsel %vm227, %v539, 0
      %v546 = vsel %vm227, %v540, 0
      %v548 = vsel %vm227, %v537, 0
      %550 = vmatprep.subr.mxu0 0.0
      %551 = vmatpush1.msra.mxu0 0.0
      %552 = vmatprep.subr.mxu0 0.0
      %553 = vmatpush1.msra.mxu0 0.0
      %554 = vmatprep.subr.mxu0 0.0
      %555 = vmatpush1.msra.mxu0 0.0
      %556 = vmatprep.subr.mxu0 0.0
      %557 = vmatpush1.msra.mxu0 0.0
      %558 = vmatprep.subr.mxu0 0.0
      %559 = vmatpush1.msra.mxu0 0.0
      %560 = vmatprep.subr.mxu0 0.0
      %561 = vmatpush1.msra.mxu0 0.0
      %562 = vmatprep.subr.mxu0 0.0
      %563 = vmatpush1.msra.mxu0 0.0
      %564 = vmatprep.subr.mxu0 0.0
      %565 = vmatpush1.msra.mxu0 0.0
      %566 = vmatprep.subr.mxu0 0.0
      %567 = vmatpush1.msra.mxu0 0.0
      %568 = vmatprep.subr.mxu0 0.0
      %569 = vmatpush1.msra.mxu0 0.0
      %570 = vmatprep.subr.mxu0 0.0
      %571 = vmatpush1.msra.mxu0 0.0
      %572 = vmatprep.subr.mxu0 0.0
      %573 = vmatpush1.msra.mxu0 0.0
      %574 = vmatprep.subr.mxu0 0.0
      %575 = vmatpush1.msra.mxu0 0.0
      %576 = vmatprep.subr.mxu0 0.0
      %577 = vmatpush1.msra.mxu0 0.0
      %578 = vmatprep.subr.mxu0 0.0
      %579 = vmatpush1.msra.mxu0 0.0
      %580 = vmatprep.subr.mxu0 %v546
      %581 = vmatpush1.msra.mxu0 %v544
      %582 = vmatprep.subr.mxu0 0.0
      %583 = vmatpush2.msra.mxu0 0.0
      %584 = vmatprep.subr.mxu0 0.0
      %585 = vmatpush2.msra.mxu0 0.0
      %586 = vmatprep.subr.mxu0 0.0
      %587 = vmatpush2.msra.mxu0 0.0
      %588 = vmatprep.subr.mxu0 0.0
      %589 = vmatpush2.msra.mxu0 0.0
      %590 = vmatprep.subr.mxu0 0.0
      %591 = vmatpush2.msra.mxu0 0.0
      %592 = vmatprep.subr.mxu0 0.0
      %593 = vmatpush2.msra.mxu0 0.0
      %594 = vmatprep.subr.mxu0 0.0
      %595 = vmatpush2.msra.mxu0 0.0
      %596 = vmatprep.subr.mxu0 0.0
      %597 = vmatpush2.msra.mxu0 0.0
      %598 = vmatprep.subr.mxu0 0.0
      %599 = vmatpush2.msra.mxu0 0.0
      %600 = vmatprep.subr.mxu0 0.0
      %601 = vmatpush2.msra.mxu0 0.0
      %602 = vmatprep.subr.mxu0 0.0
      %603 = vmatpush2.msra.mxu0 0.0
      %604 = vmatprep.subr.mxu0 0.0
      %605 = vmatpush2.msra.mxu0 0.0
      %606 = vmatprep.subr.mxu0 0.0
      %607 = vmatpush2.msra.mxu0 0.0
      %608 = vmatprep.subr.mxu0 0.0
      %609 = vmatpush2.msra.mxu0 0.0
      %610 = vmatprep.subr.mxu0 0.0
      %611 = vmatpush2.msra.mxu0 0.0
      %612 = vmatprep.subr.mxu0 0.0
      %613 = vmatpush2.msra.mxu0 0.0
      %614 = vmatprep.mubr.f32.mxu0 0.0
      %615 = vmatmul.mubr.f32.gmra.mxu0 %v542
      %v616 = vpop.f32.mrf.mxu0
      %v617 = vadd.f32 0.0, %v616
      %v618 = vpop.f32.mrf.mxu0
      %v619 = vadd.f32 0.0, %v618
      %620 = vdwg.mxu0
      %621 = vmatprep.subr.mxu0 0.0
      %622 = vmatpush1.msra.mxu0 0.0
      %623 = vmatprep.subr.mxu0 0.0
      %624 = vmatpush1.msra.mxu0 0.0
      %625 = vmatprep.subr.mxu0 0.0
      %626 = vmatpush1.msra.mxu0 0.0
      %627 = vmatprep.subr.mxu0 0.0
      %628 = vmatpush1.msra.mxu0 0.0
      %629 = vmatprep.subr.mxu0 0.0
      %630 = vmatpush1.msra.mxu0 0.0
      %631 = vmatprep.subr.mxu0 0.0
      %632 = vmatpush1.msra.mxu0 0.0
      %633 = vmatprep.subr.mxu0 0.0
      %634 = vmatpush1.msra.mxu0 0.0
      %635 = vmatprep.subr.mxu0 0.0
      %636 = vmatpush1.msra.mxu0 0.0
      %637 = vmatprep.subr.mxu0 0.0
      %638 = vmatpush1.msra.mxu0 0.0
      %639 = vmatprep.subr.mxu0 0.0
      %640 = vmatpush1.msra.mxu0 0.0
      %641 = vmatprep.subr.mxu0 0.0
      %642 = vmatpush1.msra.mxu0 0.0
      %643 = vmatprep.subr.mxu0 0.0
      %644 = vmatpush1.msra.mxu0 0.0
      %645 = vmatprep.subr.mxu0 0.0
      %646 = vmatpush1.msra.mxu0 0.0
      %647 = vmatprep.subr.mxu0 0.0
      %648 = vmatpush1.msra.mxu0 0.0
      %649 = vmatprep.subr.mxu0 0.0
      %650 = vmatpush1.msra.mxu0 0.0
      %651 = vmatprep.subr.mxu0 0.0
      %652 = vmatpush1.msra.mxu0 %v548
      %653 = vmatprep.subr.mxu0 0.0
      %654 = vmatpush2.msra.mxu0 0.0
      %655 = vmatprep.subr.mxu0 0.0
      %656 = vmatpush2.msra.mxu0 0.0
      %657 = vmatprep.subr.mxu0 0.0
      %658 = vmatpush2.msra.mxu0 0.0
      %659 = vmatprep.subr.mxu0 0.0
      %660 = vmatpush2.msra.mxu0 0.0
      %661 = vmatprep.subr.mxu0 0.0
      %662 = vmatpush2.msra.mxu0 0.0
      %663 = vmatprep.subr.mxu0 0.0
      %664 = vmatpush2.msra.mxu0 0.0
      %665 = vmatprep.subr.mxu0 0.0
      %666 = vmatpush2.msra.mxu0 0.0
      %667 = vmatprep.subr.mxu0 0.0
      %668 = vmatpush2.msra.mxu0 0.0
      %669 = vmatprep.subr.mxu0 0.0
      %670 = vmatpush2.msra.mxu0 0.0
      %671 = vmatprep.subr.mxu0 0.0
      %672 = vmatpush2.msra.mxu0 0.0
      %673 = vmatprep.subr.mxu0 0.0
      %674 = vmatpush2.msra.mxu0 0.0
      %675 = vmatprep.subr.mxu0 0.0
      %676 = vmatpush2.msra.mxu0 0.0
      %677 = vmatprep.subr.mxu0 0.0
      %678 = vmatpush2.msra.mxu0 0.0
      %679 = vmatprep.subr.mxu0 0.0
      %680 = vmatpush2.msra.mxu0 0.0
      %681 = vmatprep.subr.mxu0 0.0
      %682 = vmatpush2.msra.mxu0 0.0
      %683 = vmatprep.subr.mxu0 0.0
      %684 = vmatpush2.msra.mxu0 0.0
      %685 = vmatprep.mubr.f32.mxu0 0.0
      %686 = vmatmul.mubr.f32.gmra.mxu0 %v542
      %v687 = vpop.f32.mrf.mxu0
      %v688 = vadd.f32 0.0, %v687
      %v689 = vpop.f32.mrf.mxu0
      %690 = vdwg.mxu0
      %v691 = vadd.f32 %v451, %v617
      %v692 = vadd.f32 %v453, %v619
      %v693 = vadd.f32 %v522, %v688
      %v694 = vld [vmem:[%s194] sm:$0xff]
      %v695 = vld [vmem:[%s194 + $0x8] sm:$0xf]
      %s696 = scalar_lea.vmem %s198, 24
      %v697 = vld [vmem:[%s696] sm:$0xff]
      %v700 = vcombine.high %v694, %v694
      %701 = vrot.lane.b32.xlu0 %v694, 110
      %v702 = vpop.permute.xlu0 %701
      %703 = vrot.lane.b32.xlu0 %v700, 110
      %v704 = vpop.permute.xlu0 %703
      %705 = vrot.lane.b32.xlu0 %v695, 110
      %v706 = vpop.permute.xlu0 %705
      %vm707 = vcmask 900096
      %v708 = vsel %vm707, %v702, %v704
      %v709 = vsel %vm707, %v704, %v706
      %v711 = vsel %vm223, %v697, 0
      %v713 = vsel %vm227, %v708, 0
      %v715 = vsel %vm227, %v709, 0
      %v717 = vsel %vm227, %v706, 0
      %719 = vmatprep.subr.mxu0 0.0
      %720 = vmatpush1.msra.mxu0 0.0
      %721 = vmatprep.subr.mxu0 0.0
      %722 = vmatpush1.msra.mxu0 0.0
      %723 = vmatprep.subr.mxu0 0.0
      %724 = vmatpush1.msra.mxu0 0.0
      %725 = vmatprep.subr.mxu0 0.0
      %726 = vmatpush1.msra.mxu0 0.0
      %727 = vmatprep.subr.mxu0 0.0
      %728 = vmatpush1.msra.mxu0 0.0
      %729 = vmatprep.subr.mxu0 0.0
      %730 = vmatpush1.msra.mxu0 0.0
      %731 = vmatprep.subr.mxu0 0.0
      %732 = vmatpush1.msra.mxu0 0.0
      %733 = vmatprep.subr.mxu0 0.0
      %734 = vmatpush1.msra.mxu0 0.0
      %735 = vmatprep.subr.mxu0 0.0
      %736 = vmatpush1.msra.mxu0 0.0
      %737 = vmatprep.subr.mxu0 0.0
      %738 = vmatpush1.msra.mxu0 0.0
      %739 = vmatprep.subr.mxu0 0.0
      %740 = vmatpush1.msra.mxu0 0.0
      %741 = vmatprep.subr.mxu0 0.0
      %742 = vmatpush1.msra.mxu0 0.0
      %743 = vmatprep.subr.mxu0 0.0
      %744 = vmatpush1.msra.mxu0 0.0
      %745 = vmatprep.subr.mxu0 0.0
      %746 = vmatpush1.msra.mxu0 0.0
      %747 = vmatprep.subr.mxu0 0.0
      %748 = vmatpush1.msra.mxu0 0.0
      %749 = vmatprep.subr.mxu0 %v715
      %750 = vmatpush1.msra.mxu0 %v713
      %751 = vmatprep.subr.mxu0 0.0
      %752 = vmatpush2.msra.mxu0 0.0
      %753 = vmatprep.subr.mxu0 0.0
      %754 = vmatpush2.msra.mxu0 0.0
      %755 = vmatprep.subr.mxu0 0.0
      %756 = vmatpush2.msra.mxu0 0.0
      %757 = vmatprep.subr.mxu0 0.0
      %758 = vmatpush2.msra.mxu0 0.0
      %759 = vmatprep.subr.mxu0 0.0
      %760 = vmatpush2.msra.mxu0 0.0
      %761 = vmatprep.subr.mxu0 0.0
      %762 = vmatpush2.msra.mxu0 0.0
      %763 = vmatprep.subr.mxu0 0.0
      %764 = vmatpush2.msra.mxu0 0.0
      %765 = vmatprep.subr.mxu0 0.0
      %766 = vmatpush2.msra.mxu0 0.0
      %767 = vmatprep.subr.mxu0 0.0
      %768 = vmatpush2.msra.mxu0 0.0
      %769 = vmatprep.subr.mxu0 0.0
      %770 = vmatpush2.msra.mxu0 0.0
      %771 = vmatprep.subr.mxu0 0.0
      %772 = vmatpush2.msra.mxu0 0.0
      %773 = vmatprep.subr.mxu0 0.0
      %774 = vmatpush2.msra.mxu0 0.0
      %775 = vmatprep.subr.mxu0 0.0
      %776 = vmatpush2.msra.mxu0 0.0
      %777 = vmatprep.subr.mxu0 0.0
      %778 = vmatpush2.msra.mxu0 0.0
      %779 = vmatprep.subr.mxu0 0.0
      %780 = vmatpush2.msra.mxu0 0.0
      %781 = vmatprep.subr.mxu0 0.0
      %782 = vmatpush2.msra.mxu0 0.0
      %783 = vmatprep.mubr.f32.mxu0 0.0
      %784 = vmatmul.mubr.f32.gmra.mxu0 %v711
      %v785 = vpop.f32.mrf.mxu0
      %v786 = vadd.f32 0.0, %v785
      %v787 = vpop.f32.mrf.mxu0
      %v788 = vadd.f32 0.0, %v787
      %789 = vdwg.mxu0
      %790 = vmatprep.subr.mxu0 0.0
      %791 = vmatpush1.msra.mxu0 0.0
      %792 = vmatprep.subr.mxu0 0.0
      %793 = vmatpush1.msra.mxu0 0.0
      %794 = vmatprep.subr.mxu0 0.0
      %795 = vmatpush1.msra.mxu0 0.0
      %796 = vmatprep.subr.mxu0 0.0
      %797 = vmatpush1.msra.mxu0 0.0
      %798 = vmatprep.subr.mxu0 0.0
      %799 = vmatpush1.msra.mxu0 0.0
      %800 = vmatprep.subr.mxu0 0.0
      %801 = vmatpush1.msra.mxu0 0.0
      %802 = vmatprep.subr.mxu0 0.0
      %803 = vmatpush1.msra.mxu0 0.0
      %804 = vmatprep.subr.mxu0 0.0
      %805 = vmatpush1.msra.mxu0 0.0
      %806 = vmatprep.subr.mxu0 0.0
      %807 = vmatpush1.msra.mxu0 0.0
      %808 = vmatprep.subr.mxu0 0.0
      %809 = vmatpush1.msra.mxu0 0.0
      %810 = vmatprep.subr.mxu0 0.0
      %811 = vmatpush1.msra.mxu0 0.0
      %812 = vmatprep.subr.mxu0 0.0
      %813 = vmatpush1.msra.mxu0 0.0
      %814 = vmatprep.subr.mxu0 0.0
      %815 = vmatpush1.msra.mxu0 0.0
      %816 = vmatprep.subr.mxu0 0.0
      %817 = vmatpush1.msra.mxu0 0.0
      %818 = vmatprep.subr.mxu0 0.0
      %819 = vmatpush1.msra.mxu0 0.0
      %820 = vmatprep.subr.mxu0 0.0
      %821 = vmatpush1.msra.mxu0 %v717
      %822 = vmatprep.subr.mxu0 0.0
      %823 = vmatpush2.msra.mxu0 0.0
      %824 = vmatprep.subr.mxu0 0.0
      %825 = vmatpush2.msra.mxu0 0.0
      %826 = vmatprep.subr.mxu0 0.0
      %827 = vmatpush2.msra.mxu0 0.0
      %828 = vmatprep.subr.mxu0 0.0
      %829 = vmatpush2.msra.mxu0 0.0
      %830 = vmatprep.subr.mxu0 0.0
      %831 = vmatpush2.msra.mxu0 0.0
      %832 = vmatprep.subr.mxu0 0.0
      %833 = vmatpush2.msra.mxu0 0.0
      %834 = vmatprep.subr.mxu0 0.0
      %835 = vmatpush2.msra.mxu0 0.0
      %836 = vmatprep.subr.mxu0 0.0
      %837 = vmatpush2.msra.mxu0 0.0
      %838 = vmatprep.subr.mxu0 0.0
      %839 = vmatpush2.msra.mxu0 0.0
      %840 = vmatprep.subr.mxu0 0.0
      %841 = vmatpush2.msra.mxu0 0.0
      %842 = vmatprep.subr.mxu0 0.0
      %843 = vmatpush2.msra.mxu0 0.0
      %844 = vmatprep.subr.mxu0 0.0
      %845 = vmatpush2.msra.mxu0 0.0
      %846 = vmatprep.subr.mxu0 0.0
      %847 = vmatpush2.msra.mxu0 0.0
      %848 = vmatprep.subr.mxu0 0.0
      %849 = vmatpush2.msra.mxu0 0.0
      %850 = vmatprep.subr.mxu0 0.0
      %851 = vmatpush2.msra.mxu0 0.0
      %852 = vmatprep.subr.mxu0 0.0
      %853 = vmatpush2.msra.mxu0 0.0
      %854 = vmatprep.mubr.f32.mxu0 0.0
      %855 = vmatmul.mubr.f32.gmra.mxu0 %v711
      %v856 = vpop.f32.mrf.mxu0
      %v857 = vadd.f32 0.0, %v856
      %v858 = vpop.f32.mrf.mxu0
      %859 = vdwg.mxu0
      %v860 = vadd.f32 %v691, %v786
      %v861 = vadd.f32 %v692, %v788
      %v862 = vadd.f32 %v693, %v857
      %v863 = vld [vmem:[%s194] sm:$0xff]
      %v864 = vld [vmem:[%s194 + $0x8] sm:$0xf]
      %s865 = scalar_lea.vmem %s198, 32
      %v866 = vld [vmem:[%s865] sm:$0xff]
      %v869 = vcombine.high %v863, %v863
      %870 = vrot.lane.b32.xlu0 %v863, 109
      %v871 = vpop.permute.xlu0 %870
      %872 = vrot.lane.b32.xlu0 %v869, 109
      %v873 = vpop.permute.xlu0 %872
      %874 = vrot.lane.b32.xlu0 %v864, 109
      %v875 = vpop.permute.xlu0 %874
      %vm876 = vcmask 891904
      %v877 = vsel %vm876, %v871, %v873
      %v878 = vsel %vm876, %v873, %v875
      %v880 = vsel %vm223, %v866, 0
      %v882 = vsel %vm227, %v877, 0
      %v884 = vsel %vm227, %v878, 0
      %v886 = vsel %vm227, %v875, 0
      %888 = vmatprep.subr.mxu0 0.0
      %889 = vmatpush1.msra.mxu0 0.0
      %890 = vmatprep.subr.mxu0 0.0
      %891 = vmatpush1.msra.mxu0 0.0
      %892 = vmatprep.subr.mxu0 0.0
      %893 = vmatpush1.msra.mxu0 0.0
      %894 = vmatprep.subr.mxu0 0.0
      %895 = vmatpush1.msra.mxu0 0.0
      %896 = vmatprep.subr.mxu0 0.0
      %897 = vmatpush1.msra.mxu0 0.0
      %898 = vmatprep.subr.mxu0 0.0
      %899 = vmatpush1.msra.mxu0 0.0
      %900 = vmatprep.subr.mxu0 0.0
      %901 = vmatpush1.msra.mxu0 0.0
      %902 = vmatprep.subr.mxu0 0.0
      %903 = vmatpush1.msra.mxu0 0.0
      %904 = vmatprep.subr.mxu0 0.0
      %905 = vmatpush1.msra.mxu0 0.0
      %906 = vmatprep.subr.mxu0 0.0
      %907 = vmatpush1.msra.mxu0 0.0
      %908 = vmatprep.subr.mxu0 0.0
      %909 = vmatpush1.msra.mxu0 0.0
      %910 = vmatprep.subr.mxu0 0.0
      %911 = vmatpush1.msra.mxu0 0.0
      %912 = vmatprep.subr.mxu0 0.0
      %913 = vmatpush1.msra.mxu0 0.0
      %914 = vmatprep.subr.mxu0 0.0
      %915 = vmatpush1.msra.mxu0 0.0
      %916 = vmatprep.subr.mxu0 0.0
      %917 = vmatpush1.msra.mxu0 0.0
      %918 = vmatprep.subr.mxu0 %v884
      %919 = vmatpush1.msra.mxu0 %v882
      %920 = vmatprep.subr.mxu0 0.0
      %921 = vmatpush2.msra.mxu0 0.0
      %922 = vmatprep.subr.mxu0 0.0
      %923 = vmatpush2.msra.mxu0 0.0
      %924 = vmatprep.subr.mxu0 0.0
      %925 = vmatpush2.msra.mxu0 0.0
      %926 = vmatprep.subr.mxu0 0.0
      %927 = vmatpush2.msra.mxu0 0.0
      %928 = vmatprep.subr.mxu0 0.0
      %929 = vmatpush2.msra.mxu0 0.0
      %930 = vmatprep.subr.mxu0 0.0
      %931 = vmatpush2.msra.mxu0 0.0
      %932 = vmatprep.subr.mxu0 0.0
      %933 = vmatpush2.msra.mxu0 0.0
      %934 = vmatprep.subr.mxu0 0.0
      %935 = vmatpush2.msra.mxu0 0.0
      %936 = vmatprep.subr.mxu0 0.0
      %937 = vmatpush2.msra.mxu0 0.0
      %938 = vmatprep.subr.mxu0 0.0
      %939 = vmatpush2.msra.mxu0 0.0
      %940 = vmatprep.subr.mxu0 0.0
      %941 = vmatpush2.msra.mxu0 0.0
      %942 = vmatprep.subr.mxu0 0.0
      %943 = vmatpush2.msra.mxu0 0.0
      %944 = vmatprep.subr.mxu0 0.0
      %945 = vmatpush2.msra.mxu0 0.0
      %946 = vmatprep.subr.mxu0 0.0
      %947 = vmatpush2.msra.mxu0 0.0
      %948 = vmatprep.subr.mxu0 0.0
      %949 = vmatpush2.msra.mxu0 0.0
      %950 = vmatprep.subr.mxu0 0.0
      %951 = vmatpush2.msra.mxu0 0.0
      %952 = vmatprep.mubr.f32.mxu0 0.0
      %953 = vmatmul.mubr.f32.gmra.mxu0 %v880
      %v954 = vpop.f32.mrf.mxu0
      %v955 = vadd.f32 0.0, %v954
      %v956 = vpop.f32.mrf.mxu0
      %v957 = vadd.f32 0.0, %v956
      %958 = vdwg.mxu0
      %959 = vmatprep.subr.mxu0 0.0
      %960 = vmatpush1.msra.mxu0 0.0
      %961 = vmatprep.subr.mxu0 0.0
      %962 = vmatpush1.msra.mxu0 0.0
      %963 = vmatprep.subr.mxu0 0.0
      %964 = vmatpush1.msra.mxu0 0.0
      %965 = vmatprep.subr.mxu0 0.0
      %966 = vmatpush1.msra.mxu0 0.0
      %967 = vmatprep.subr.mxu0 0.0
      %968 = vmatpush1.msra.mxu0 0.0
      %969 = vmatprep.subr.mxu0 0.0
      %970 = vmatpush1.msra.mxu0 0.0
      %971 = vmatprep.subr.mxu0 0.0
      %972 = vmatpush1.msra.mxu0 0.0
      %973 = vmatprep.subr.mxu0 0.0
      %974 = vmatpush1.msra.mxu0 0.0
      %975 = vmatprep.subr.mxu0 0.0
      %976 = vmatpush1.msra.mxu0 0.0
      %977 = vmatprep.subr.mxu0 0.0
      %978 = vmatpush1.msra.mxu0 0.0
      %979 = vmatprep.subr.mxu0 0.0
      %980 = vmatpush1.msra.mxu0 0.0
      %981 = vmatprep.subr.mxu0 0.0
      %982 = vmatpush1.msra.mxu0 0.0
      %983 = vmatprep.subr.mxu0 0.0
      %984 = vmatpush1.msra.mxu0 0.0
      %985 = vmatprep.subr.mxu0 0.0
      %986 = vmatpush1.msra.mxu0 0.0
      %987 = vmatprep.subr.mxu0 0.0
      %988 = vmatpush1.msra.mxu0 0.0
      %989 = vmatprep.subr.mxu0 0.0
      %990 = vmatpush1.msra.mxu0 %v886
      %991 = vmatprep.subr.mxu0 0.0
      %992 = vmatpush2.msra.mxu0 0.0
      %993 = vmatprep.subr.mxu0 0.0
      %994 = vmatpush2.msra.mxu0 0.0
      %995 = vmatprep.subr.mxu0 0.0
      %996 = vmatpush2.msra.mxu0 0.0
      %997 = vmatprep.subr.mxu0 0.0
      %998 = vmatpush2.msra.mxu0 0.0
      %999 = vmatprep.subr.mxu0 0.0
      %1000 = vmatpush2.msra.mxu0 0.0
      %1001 = vmatprep.subr.mxu0 0.0
      %1002 = vmatpush2.msra.mxu0 0.0
      %1003 = vmatprep.subr.mxu0 0.0
      %1004 = vmatpush2.msra.mxu0 0.0
      %1005 = vmatprep.subr.mxu0 0.0
      %1006 = vmatpush2.msra.mxu0 0.0
      %1007 = vmatprep.subr.mxu0 0.0
      %1008 = vmatpush2.msra.mxu0 0.0
      %1009 = vmatprep.subr.mxu0 0.0
      %1010 = vmatpush2.msra.mxu0 0.0
      %1011 = vmatprep.subr.mxu0 0.0
      %1012 = vmatpush2.msra.mxu0 0.0
      %1013 = vmatprep.subr.mxu0 0.0
      %1014 = vmatpush2.msra.mxu0 0.0
      %1015 = vmatprep.subr.mxu0 0.0
      %1016 = vmatpush2.msra.mxu0 0.0
      %1017 = vmatprep.subr.mxu0 0.0
      %1018 = vmatpush2.msra.mxu0 0.0
      %1019 = vmatprep.subr.mxu0 0.0
      %1020 = vmatpush2.msra.mxu0 0.0
      %1021 = vmatprep.subr.mxu0 0.0
      %1022 = vmatpush2.msra.mxu0 0.0
      %1023 = vmatprep.mubr.f32.mxu0 0.0
      %1024 = vmatmul.mubr.f32.gmra.mxu0 %v880
      %v1025 = vpop.f32.mrf.mxu0
      %v1026 = vadd.f32 0.0, %v1025
      %v1027 = vpop.f32.mrf.mxu0
      %1028 = vdwg.mxu0
      %v1029 = vadd.f32 %v860, %v955
      %v1030 = vadd.f32 %v861, %v957
      %v1031 = vadd.f32 %v862, %v1026
      %v1032 = vld [vmem:[%s194] sm:$0xff]
      %v1033 = vld [vmem:[%s194 + $0x8] sm:$0xf]
      %s1034 = scalar_lea.vmem %s198, 40
      %v1035 = vld [vmem:[%s1034] sm:$0xff]
      %v1038 = vcombine.high %v1032, %v1032
      %1039 = vrot.lane.b32.xlu0 %v1032, 108
      %v1040 = vpop.permute.xlu0 %1039
      %1041 = vrot.lane.b32.xlu0 %v1038, 108
      %v1042 = vpop.permute.xlu0 %1041
      %1043 = vrot.lane.b32.xlu0 %v1033, 108
      %v1044 = vpop.permute.xlu0 %1043
      %vm1045 = vcmask 883712
      %v1046 = vsel %vm1045, %v1040, %v1042
      %v1047 = vsel %vm1045, %v1042, %v1044
      %v1049 = vsel %vm223, %v1035, 0
      %v1051 = vsel %vm227, %v1046, 0
      %v1053 = vsel %vm227, %v1047, 0
      %v1055 = vsel %vm227, %v1044, 0
      %1057 = vmatprep.subr.mxu0 0.0
      %1058 = vmatpush1.msra.mxu0 0.0
      %1059 = vmatprep.subr.mxu0 0.0
      %1060 = vmatpush1.msra.mxu0 0.0
      %1061 = vmatprep.subr.mxu0 0.0
      %1062 = vmatpush1.msra.mxu0 0.0
      %1063 = vmatprep.subr.mxu0 0.0
      %1064 = vmatpush1.msra.mxu0 0.0
      %1065 = vmatprep.subr.mxu0 0.0
      %1066 = vmatpush1.msra.mxu0 0.0
      %1067 = vmatprep.subr.mxu0 0.0
      %1068 = vmatpush1.msra.mxu0 0.0
      %1069 = vmatprep.subr.mxu0 0.0
      %1070 = vmatpush1.msra.mxu0 0.0
      %1071 = vmatprep.subr.mxu0 0.0
      %1072 = vmatpush1.msra.mxu0 0.0
      %1073 = vmatprep.subr.mxu0 0.0
      %1074 = vmatpush1.msra.mxu0 0.0
      %1075 = vmatprep.subr.mxu0 0.0
      %1076 = vmatpush1.msra.mxu0 0.0
      %1077 = vmatprep.subr.mxu0 0.0
      %1078 = vmatpush1.msra.mxu0 0.0
      %1079 = vmatprep.subr.mxu0 0.0
      %1080 = vmatpush1.msra.mxu0 0.0
      %1081 = vmatprep.subr.mxu0 0.0
      %1082 = vmatpush1.msra.mxu0 0.0
      %1083 = vmatprep.subr.mxu0 0.0
      %1084 = vmatpush1.msra.mxu0 0.0
      %1085 = vmatprep.subr.mxu0 0.0
      %1086 = vmatpush1.msra.mxu0 0.0
      %1087 = vmatprep.subr.mxu0 %v1053
      %1088 = vmatpush1.msra.mxu0 %v1051
      %1089 = vmatprep.subr.mxu0 0.0
      %1090 = vmatpush2.msra.mxu0 0.0
      %1091 = vmatprep.subr.mxu0 0.0
      %1092 = vmatpush2.msra.mxu0 0.0
      %1093 = vmatprep.subr.mxu0 0.0
      %1094 = vmatpush2.msra.mxu0 0.0
      %1095 = vmatprep.subr.mxu0 0.0
      %1096 = vmatpush2.msra.mxu0 0.0
      %1097 = vmatprep.subr.mxu0 0.0
      %1098 = vmatpush2.msra.mxu0 0.0
      %1099 = vmatprep.subr.mxu0 0.0
      %1100 = vmatpush2.msra.mxu0 0.0
      %1101 = vmatprep.subr.mxu0 0.0
      %1102 = vmatpush2.msra.mxu0 0.0
      %1103 = vmatprep.subr.mxu0 0.0
      %1104 = vmatpush2.msra.mxu0 0.0
      %1105 = vmatprep.subr.mxu0 0.0
      %1106 = vmatpush2.msra.mxu0 0.0
      %1107 = vmatprep.subr.mxu0 0.0
      %1108 = vmatpush2.msra.mxu0 0.0
      %1109 = vmatprep.subr.mxu0 0.0
      %1110 = vmatpush2.msra.mxu0 0.0
      %1111 = vmatprep.subr.mxu0 0.0
      %1112 = vmatpush2.msra.mxu0 0.0
      %1113 = vmatprep.subr.mxu0 0.0
      %1114 = vmatpush2.msra.mxu0 0.0
      %1115 = vmatprep.subr.mxu0 0.0
      %1116 = vmatpush2.msra.mxu0 0.0
      %1117 = vmatprep.subr.mxu0 0.0
      %1118 = vmatpush2.msra.mxu0 0.0
      %1119 = vmatprep.subr.mxu0 0.0
      %1120 = vmatpush2.msra.mxu0 0.0
      %1121 = vmatprep.mubr.f32.mxu0 0.0
      %1122 = vmatmul.mubr.f32.gmra.mxu0 %v1049
      %v1123 = vpop.f32.mrf.mxu0
      %v1124 = vadd.f32 0.0, %v1123
      %v1125 = vpop.f32.mrf.mxu0
      %v1126 = vadd.f32 0.0, %v1125
      %1127 = vdwg.mxu0
      %1128 = vmatprep.subr.mxu0 0.0
      %1129 = vmatpush1.msra.mxu0 0.0
      %1130 = vmatprep.subr.mxu0 0.0
      %1131 = vmatpush1.msra.mxu0 0.0
      %1132 = vmatprep.subr.mxu0 0.0
      %1133 = vmatpush1.msra.mxu0 0.0
      %1134 = vmatprep.subr.mxu0 0.0
      %1135 = vmatpush1.msra.mxu0 0.0
      %1136 = vmatprep.subr.mxu0 0.0
      %1137 = vmatpush1.msra.mxu0 0.0
      %1138 = vmatprep.subr.mxu0 0.0
      %1139 = vmatpush1.msra.mxu0 0.0
      %1140 = vmatprep.subr.mxu0 0.0
      %1141 = vmatpush1.msra.mxu0 0.0
      %1142 = vmatprep.subr.mxu0 0.0
      %1143 = vmatpush1.msra.mxu0 0.0
      %1144 = vmatprep.subr.mxu0 0.0
      %1145 = vmatpush1.msra.mxu0 0.0
      %1146 = vmatprep.subr.mxu0 0.0
      %1147 = vmatpush1.msra.mxu0 0.0
      %1148 = vmatprep.subr.mxu0 0.0
      %1149 = vmatpush1.msra.mxu0 0.0
      %1150 = vmatprep.subr.mxu0 0.0
      %1151 = vmatpush1.msra.mxu0 0.0
      %1152 = vmatprep.subr.mxu0 0.0
      %1153 = vmatpush1.msra.mxu0 0.0
      %1154 = vmatprep.subr.mxu0 0.0
      %1155 = vmatpush1.msra.mxu0 0.0
      %1156 = vmatprep.subr.mxu0 0.0
      %1157 = vmatpush1.msra.mxu0 0.0
      %1158 = vmatprep.subr.mxu0 0.0
      %1159 = vmatpush1.msra.mxu0 %v1055
      %1160 = vmatprep.subr.mxu0 0.0
      %1161 = vmatpush2.msra.mxu0 0.0
      %1162 = vmatprep.subr.mxu0 0.0
      %1163 = vmatpush2.msra.mxu0 0.0
      %1164 = vmatprep.subr.mxu0 0.0
      %1165 = vmatpush2.msra.mxu0 0.0
      %1166 = vmatprep.subr.mxu0 0.0
      %1167 = vmatpush2.msra.mxu0 0.0
      %1168 = vmatprep.subr.mxu0 0.0
      %1169 = vmatpush2.msra.mxu0 0.0
      %1170 = vmatprep.subr.mxu0 0.0
      %1171 = vmatpush2.msra.mxu0 0.0
      %1172 = vmatprep.subr.mxu0 0.0
      %1173 = vmatpush2.msra.mxu0 0.0
      %1174 = vmatprep.subr.mxu0 0.0
      %1175 = vmatpush2.msra.mxu0 0.0
      %1176 = vmatprep.subr.mxu0 0.0
      %1177 = vmatpush2.msra.mxu0 0.0
      %1178 = vmatprep.subr.mxu0 0.0
      %1179 = vmatpush2.msra.mxu0 0.0
      %1180 = vmatprep.subr.mxu0 0.0
      %1181 = vmatpush2.msra.mxu0 0.0
      %1182 = vmatprep.subr.mxu0 0.0
      %1183 = vmatpush2.msra.mxu0 0.0
      %1184 = vmatprep.subr.mxu0 0.0
      %1185 = vmatpush2.msra.mxu0 0.0
      %1186 = vmatprep.subr.mxu0 0.0
      %1187 = vmatpush2.msra.mxu0 0.0
      %1188 = vmatprep.subr.mxu0 0.0
      %1189 = vmatpush2.msra.mxu0 0.0
      %1190 = vmatprep.subr.mxu0 0.0
      %1191 = vmatpush2.msra.mxu0 0.0
      %1192 = vmatprep.mubr.f32.mxu0 0.0
      %1193 = vmatmul.mubr.f32.gmra.mxu0 %v1049
      %v1194 = vpop.f32.mrf.mxu0
      %v1195 = vadd.f32 0.0, %v1194
      %v1196 = vpop.f32.mrf.mxu0
      %1197 = vdwg.mxu0
      %v1198 = vadd.f32 %v1029, %v1124
      %v1199 = vadd.f32 %v1030, %v1126
      %v1200 = vadd.f32 %v1031, %v1195
      %v1201 = vld [vmem:[%s194] sm:$0xff]
      %v1202 = vld [vmem:[%s194 + $0x8] sm:$0xf]
      %s1203 = scalar_lea.vmem %s198, 48
      %v1204 = vld [vmem:[%s1203] sm:$0xff]
      %v1207 = vcombine.high %v1201, %v1201
      %1208 = vrot.lane.b32.xlu0 %v1201, 92
      %v1209 = vpop.permute.xlu0 %1208
      %1210 = vrot.lane.b32.xlu0 %v1207, 92
      %v1211 = vpop.permute.xlu0 %1210
      %1212 = vrot.lane.b32.xlu0 %v1202, 92
      %v1213 = vpop.permute.xlu0 %1212
      %vm1214 = vcmask 752640
      %v1215 = vsel %vm1214, %v1209, %v1211
      %v1216 = vsel %vm1214, %v1211, %v1213
      %v1218 = vsel %vm223, %v1204, 0
      %v1220 = vsel %vm227, %v1215, 0
      %v1222 = vsel %vm227, %v1216, 0
      %v1224 = vsel %vm227, %v1213, 0
      %1226 = vmatprep.subr.mxu0 0.0
      %1227 = vmatpush1.msra.mxu0 0.0
      %1228 = vmatprep.subr.mxu0 0.0
      %1229 = vmatpush1.msra.mxu0 0.0
      %1230 = vmatprep.subr.mxu0 0.0
      %1231 = vmatpush1.msra.mxu0 0.0
      %1232 = vmatprep.subr.mxu0 0.0
      %1233 = vmatpush1.msra.mxu0 0.0
      %1234 = vmatprep.subr.mxu0 0.0
      %1235 = vmatpush1.msra.mxu0 0.0
      %1236 = vmatprep.subr.mxu0 0.0
      %1237 = vmatpush1.msra.mxu0 0.0
      %1238 = vmatprep.subr.mxu0 0.0
      %1239 = vmatpush1.msra.mxu0 0.0
      %1240 = vmatprep.subr.mxu0 0.0
      %1241 = vmatpush1.msra.mxu0 0.0
      %1242 = vmatprep.subr.mxu0 0.0
      %1243 = vmatpush1.msra.mxu0 0.0
      %1244 = vmatprep.subr.mxu0 0.0
      %1245 = vmatpush1.msra.mxu0 0.0
      %1246 = vmatprep.subr.mxu0 0.0
      %1247 = vmatpush1.msra.mxu0 0.0
      %1248 = vmatprep.subr.mxu0 0.0
      %1249 = vmatpush1.msra.mxu0 0.0
      %1250 = vmatprep.subr.mxu0 0.0
      %1251 = vmatpush1.msra.mxu0 0.0
      %1252 = vmatprep.subr.mxu0 0.0
      %1253 = vmatpush1.msra.mxu0 0.0
      %1254 = vmatprep.subr.mxu0 0.0
      %1255 = vmatpush1.msra.mxu0 0.0
      %1256 = vmatprep.subr.mxu0 %v1222
      %1257 = vmatpush1.msra.mxu0 %v1220
      %1258 = vmatprep.subr.mxu0 0.0
      %1259 = vmatpush2.msra.mxu0 0.0
      %1260 = vmatprep.subr.mxu0 0.0
      %1261 = vmatpush2.msra.mxu0 0.0
      %1262 = vmatprep.subr.mxu0 0.0
      %1263 = vmatpush2.msra.mxu0 0.0
      %1264 = vmatprep.subr.mxu0 0.0
      %1265 = vmatpush2.msra.mxu0 0.0
      %1266 = vmatprep.subr.mxu0 0.0
      %1267 = vmatpush2.msra.mxu0 0.0
      %1268 = vmatprep.subr.mxu0 0.0
      %1269 = vmatpush2.msra.mxu0 0.0
      %1270 = vmatprep.subr.mxu0 0.0
      %1271 = vmatpush2.msra.mxu0 0.0
      %1272 = vmatprep.subr.mxu0 0.0
      %1273 = vmatpush2.msra.mxu0 0.0
      %1274 = vmatprep.subr.mxu0 0.0
      %1275 = vmatpush2.msra.mxu0 0.0
      %1276 = vmatprep.subr.mxu0 0.0
      %1277 = vmatpush2.msra.mxu0 0.0
      %1278 = vmatprep.subr.mxu0 0.0
      %1279 = vmatpush2.msra.mxu0 0.0
      %1280 = vmatprep.subr.mxu0 0.0
      %1281 = vmatpush2.msra.mxu0 0.0
      %1282 = vmatprep.subr.mxu0 0.0
      %1283 = vmatpush2.msra.mxu0 0.0
      %1284 = vmatprep.subr.mxu0 0.0
      %1285 = vmatpush2.msra.mxu0 0.0
      %1286 = vmatprep.subr.mxu0 0.0
      %1287 = vmatpush2.msra.mxu0 0.0
      %1288 = vmatprep.subr.mxu0 0.0
      %1289 = vmatpush2.msra.mxu0 0.0
      %1290 = vmatprep.mubr.f32.mxu0 0.0
      %1291 = vmatmul.mubr.f32.gmra.mxu0 %v1218
      %v1292 = vpop.f32.mrf.mxu0
      %v1293 = vadd.f32 0.0, %v1292
      %v1294 = vpop.f32.mrf.mxu0
      %v1295 = vadd.f32 0.0, %v1294
      %1296 = vdwg.mxu0
      %1297 = vmatprep.subr.mxu0 0.0
      %1298 = vmatpush1.msra.mxu0 0.0
      %1299 = vmatprep.subr.mxu0 0.0
      %1300 = vmatpush1.msra.mxu0 0.0
      %1301 = vmatprep.subr.mxu0 0.0
      %1302 = vmatpush1.msra.mxu0 0.0
      %1303 = vmatprep.subr.mxu0 0.0
      %1304 = vmatpush1.msra.mxu0 0.0
      %1305 = vmatprep.subr.mxu0 0.0
      %1306 = vmatpush1.msra.mxu0 0.0
      %1307 = vmatprep.subr.mxu0 0.0
      %1308 = vmatpush1.msra.mxu0 0.0
      %1309 = vmatprep.subr.mxu0 0.0
      %1310 = vmatpush1.msra.mxu0 0.0
      %1311 = vmatprep.subr.mxu0 0.0
      %1312 = vmatpush1.msra.mxu0 0.0
      %1313 = vmatprep.subr.mxu0 0.0
      %1314 = vmatpush1.msra.mxu0 0.0
      %1315 = vmatprep.subr.mxu0 0.0
      %1316 = vmatpush1.msra.mxu0 0.0
      %1317 = vmatprep.subr.mxu0 0.0
      %1318 = vmatpush1.msra.mxu0 0.0
      %1319 = vmatprep.subr.mxu0 0.0
      %1320 = vmatpush1.msra.mxu0 0.0
      %1321 = vmatprep.subr.mxu0 0.0
      %1322 = vmatpush1.msra.mxu0 0.0
      %1323 = vmatprep.subr.mxu0 0.0
      %1324 = vmatpush1.msra.mxu0 0.0
      %1325 = vmatprep.subr.mxu0 0.0
      %1326 = vmatpush1.msra.mxu0 0.0
      %1327 = vmatprep.subr.mxu0 0.0
      %1328 = vmatpush1.msra.mxu0 %v1224
      %1329 = vmatprep.subr.mxu0 0.0
      %1330 = vmatpush2.msra.mxu0 0.0
      %1331 = vmatprep.subr.mxu0 0.0
      %1332 = vmatpush2.msra.mxu0 0.0
      %1333 = vmatprep.subr.mxu0 0.0
      %1334 = vmatpush2.msra.mxu0 0.0
      %1335 = vmatprep.subr.mxu0 0.0
      %1336 = vmatpush2.msra.mxu0 0.0
      %1337 = vmatprep.subr.mxu0 0.0
      %1338 = vmatpush2.msra.mxu0 0.0
      %1339 = vmatprep.subr.mxu0 0.0
      %1340 = vmatpush2.msra.mxu0 0.0
      %1341 = vmatprep.subr.mxu0 0.0
      %1342 = vmatpush2.msra.mxu0 0.0
      %1343 = vmatprep.subr.mxu0 0.0
      %1344 = vmatpush2.msra.mxu0 0.0
      %1345 = vmatprep.subr.mxu0 0.0
      %1346 = vmatpush2.msra.mxu0 0.0
      %1347 = vmatprep.subr.mxu0 0.0
      %1348 = vmatpush2.msra.mxu0 0.0
      %1349 = vmatprep.subr.mxu0 0.0
      %1350 = vmatpush2.msra.mxu0 0.0
      %1351 = vmatprep.subr.mxu0 0.0
      %1352 = vmatpush2.msra.mxu0 0.0
      %1353 = vmatprep.subr.mxu0 0.0
      %1354 = vmatpush2.msra.mxu0 0.0
      %1355 = vmatprep.subr.mxu0 0.0
      %1356 = vmatpush2.msra.mxu0 0.0
      %1357 = vmatprep.subr.mxu0 0.0
      %1358 = vmatpush2.msra.mxu0 0.0
      %1359 = vmatprep.subr.mxu0 0.0
      %1360 = vmatpush2.msra.mxu0 0.0
      %1361 = vmatprep.mubr.f32.mxu0 0.0
      %1362 = vmatmul.mubr.f32.gmra.mxu0 %v1218
      %v1363 = vpop.f32.mrf.mxu0
      %v1364 = vadd.f32 0.0, %v1363
      %v1365 = vpop.f32.mrf.mxu0
      %1366 = vdwg.mxu0
      %v1367 = vadd.f32 %v1198, %v1293
      %v1368 = vadd.f32 %v1199, %v1295
      %v1369 = vadd.f32 %v1200, %v1364
      %v1370 = vld [vmem:[%s194] sm:$0xff]
      %v1371 = vld [vmem:[%s194 + $0x8] sm:$0xf]
      %s1372 = scalar_lea.vmem %s198, 56
      %v1373 = vld [vmem:[%s1372] sm:$0xff]
      %v1376 = vcombine.high %v1370, %v1370
      %1377 = vrot.lane.b32.xlu0 %v1370, 91
      %v1378 = vpop.permute.xlu0 %1377
      %1379 = vrot.lane.b32.xlu0 %v1376, 91
      %v1380 = vpop.permute.xlu0 %1379
      %1381 = vrot.lane.b32.xlu0 %v1371, 91
      %v1382 = vpop.permute.xlu0 %1381
      %vm1383 = vcmask 744448
      %v1384 = vsel %vm1383, %v1378, %v1380
      %v1385 = vsel %vm1383, %v1380, %v1382
      %v1387 = vsel %vm223, %v1373, 0
      %v1389 = vsel %vm227, %v1384, 0
      %v1391 = vsel %vm227, %v1385, 0
      %v1393 = vsel %vm227, %v1382, 0
      %1395 = vmatprep.subr.mxu0 0.0
      %1396 = vmatpush1.msra.mxu0 0.0
      %1397 = vmatprep.subr.mxu0 0.0
      %1398 = vmatpush1.msra.mxu0 0.0
      %1399 = vmatprep.subr.mxu0 0.0
      %1400 = vmatpush1.msra.mxu0 0.0
      %1401 = vmatprep.subr.mxu0 0.0
      %1402 = vmatpush1.msra.mxu0 0.0
      %1403 = vmatprep.subr.mxu0 0.0
      %1404 = vmatpush1.msra.mxu0 0.0
      %1405 = vmatprep.subr.mxu0 0.0
      %1406 = vmatpush1.msra.mxu0 0.0
      %1407 = vmatprep.subr.mxu0 0.0
      %1408 = vmatpush1.msra.mxu0 0.0
      %1409 = vmatprep.subr.mxu0 0.0
      %1410 = vmatpush1.msra.mxu0 0.0
      %1411 = vmatprep.subr.mxu0 0.0
      %1412 = vmatpush1.msra.mxu0 0.0
      %1413 = vmatprep.subr.mxu0 0.0
      %1414 = vmatpush1.msra.mxu0 0.0
      %1415 = vmatprep.subr.mxu0 0.0
      %1416 = vmatpush1.msra.mxu0 0.0
      %1417 = vmatprep.subr.mxu0 0.0
      %1418 = vmatpush1.msra.mxu0 0.0
      %1419 = vmatprep.subr.mxu0 0.0
      %1420 = vmatpush1.msra.mxu0 0.0
      %1421 = vmatprep.subr.mxu0 0.0
      %1422 = vmatpush1.msra.mxu0 0.0
      %1423 = vmatprep.subr.mxu0 0.0
      %1424 = vmatpush1.msra.mxu0 0.0
      %1425 = vmatprep.subr.mxu0 %v1391
      %1426 = vmatpush1.msra.mxu0 %v1389
      %1427 = vmatprep.subr.mxu0 0.0
      %1428 = vmatpush2.msra.mxu0 0.0
      %1429 = vmatprep.subr.mxu0 0.0
      %1430 = vmatpush2.msra.mxu0 0.0
      %1431 = vmatprep.subr.mxu0 0.0
      %1432 = vmatpush2.msra.mxu0 0.0
      %1433 = vmatprep.subr.mxu0 0.0
      %1434 = vmatpush2.msra.mxu0 0.0
      %1435 = vmatprep.subr.mxu0 0.0
      %1436 = vmatpush2.msra.mxu0 0.0
      %1437 = vmatprep.subr.mxu0 0.0
      %1438 = vmatpush2.msra.mxu0 0.0
      %1439 = vmatprep.subr.mxu0 0.0
      %1440 = vmatpush2.msra.mxu0 0.0
      %1441 = vmatprep.subr.mxu0 0.0
      %1442 = vmatpush2.msra.mxu0 0.0
      %1443 = vmatprep.subr.mxu0 0.0
      %1444 = vmatpush2.msra.mxu0 0.0
      %1445 = vmatprep.subr.mxu0 0.0
      %1446 = vmatpush2.msra.mxu0 0.0
      %1447 = vmatprep.subr.mxu0 0.0
      %1448 = vmatpush2.msra.mxu0 0.0
      %1449 = vmatprep.subr.mxu0 0.0
      %1450 = vmatpush2.msra.mxu0 0.0
      %1451 = vmatprep.subr.mxu0 0.0
      %1452 = vmatpush2.msra.mxu0 0.0
      %1453 = vmatprep.subr.mxu0 0.0
      %1454 = vmatpush2.msra.mxu0 0.0
      %1455 = vmatprep.subr.mxu0 0.0
      %1456 = vmatpush2.msra.mxu0 0.0
      %1457 = vmatprep.subr.mxu0 0.0
      %1458 = vmatpush2.msra.mxu0 0.0
      %1459 = vmatprep.mubr.f32.mxu0 0.0
      %1460 = vmatmul.mubr.f32.gmra.mxu0 %v1387
      %v1461 = vpop.f32.mrf.mxu0
      %v1462 = vadd.f32 0.0, %v1461
      %v1463 = vpop.f32.mrf.mxu0
      %v1464 = vadd.f32 0.0, %v1463
      %1465 = vdwg.mxu0
      %1466 = vmatprep.subr.mxu0 0.0
      %1467 = vmatpush1.msra.mxu0 0.0
      %1468 = vmatprep.subr.mxu0 0.0
      %1469 = vmatpush1.msra.mxu0 0.0
      %1470 = vmatprep.subr.mxu0 0.0
      %1471 = vmatpush1.msra.mxu0 0.0
      %1472 = vmatprep.subr.mxu0 0.0
      %1473 = vmatpush1.msra.mxu0 0.0
      %1474 = vmatprep.subr.mxu0 0.0
      %1475 = vmatpush1.msra.mxu0 0.0
      %1476 = vmatprep.subr.mxu0 0.0
      %1477 = vmatpush1.msra.mxu0 0.0
      %1478 = vmatprep.subr.mxu0 0.0
      %1479 = vmatpush1.msra.mxu0 0.0
      %1480 = vmatprep.subr.mxu0 0.0
      %1481 = vmatpush1.msra.mxu0 0.0
      %1482 = vmatprep.subr.mxu0 0.0
      %1483 = vmatpush1.msra.mxu0 0.0
      %1484 = vmatprep.subr.mxu0 0.0
      %1485 = vmatpush1.msra.mxu0 0.0
      %1486 = vmatprep.subr.mxu0 0.0
      %1487 = vmatpush1.msra.mxu0 0.0
      %1488 = vmatprep.subr.mxu0 0.0
      %1489 = vmatpush1.msra.mxu0 0.0
      %1490 = vmatprep.subr.mxu0 0.0
      %1491 = vmatpush1.msra.mxu0 0.0
      %1492 = vmatprep.subr.mxu0 0.0
      %1493 = vmatpush1.msra.mxu0 0.0
      %1494 = vmatprep.subr.mxu0 0.0
      %1495 = vmatpush1.msra.mxu0 0.0
      %1496 = vmatprep.subr.mxu0 0.0
      %1497 = vmatpush1.msra.mxu0 %v1393
      %1498 = vmatprep.subr.mxu0 0.0
      %1499 = vmatpush2.msra.mxu0 0.0
      %1500 = vmatprep.subr.mxu0 0.0
      %1501 = vmatpush2.msra.mxu0 0.0
      %1502 = vmatprep.subr.mxu0 0.0
      %1503 = vmatpush2.msra.mxu0 0.0
      %1504 = vmatprep.subr.mxu0 0.0
      %1505 = vmatpush2.msra.mxu0 0.0
      %1506 = vmatprep.subr.mxu0 0.0
      %1507 = vmatpush2.msra.mxu0 0.0
      %1508 = vmatprep.subr.mxu0 0.0
      %1509 = vmatpush2.msra.mxu0 0.0
      %1510 = vmatprep.subr.mxu0 0.0
      %1511 = vmatpush2.msra.mxu0 0.0
      %1512 = vmatprep.subr.mxu0 0.0
      %1513 = vmatpush2.msra.mxu0 0.0
      %1514 = vmatprep.subr.mxu0 0.0
      %1515 = vmatpush2.msra.mxu0 0.0
      %1516 = vmatprep.subr.mxu0 0.0
      %1517 = vmatpush2.msra.mxu0 0.0
      %1518 = vmatprep.subr.mxu0 0.0
      %1519 = vmatpush2.msra.mxu0 0.0
      %1520 = vmatprep.subr.mxu0 0.0
      %1521 = vmatpush2.msra.mxu0 0.0
      %1522 = vmatprep.subr.mxu0 0.0
      %1523 = vmatpush2.msra.mxu0 0.0
      %1524 = vmatprep.subr.mxu0 0.0
      %1525 = vmatpush2.msra.mxu0 0.0
      %1526 = vmatprep.subr.mxu0 0.0
      %1527 = vmatpush2.msra.mxu0 0.0
      %1528 = vmatprep.subr.mxu0 0.0
      %1529 = vmatpush2.msra.mxu0 0.0
      %1530 = vmatprep.mubr.f32.mxu0 0.0
      %1531 = vmatmul.mubr.f32.gmra.mxu0 %v1387
      %v1532 = vpop.f32.mrf.mxu0
      %v1533 = vadd.f32 0.0, %v1532
      %v1534 = vpop.f32.mrf.mxu0
      %1535 = vdwg.mxu0
      %v1536 = vadd.f32 %v1367, %v1462
      %v1537 = vadd.f32 %v1368, %v1464
      %v1538 = vadd.f32 %v1369, %v1533
      %v1539 = vld [vmem:[%s194] sm:$0xff]
      %v1540 = vld [vmem:[%s194 + $0x8] sm:$0xf]
      %s1541 = scalar_lea.vmem %s198, 64
      %v1542 = vld [vmem:[%s1541] sm:$0xff]
      %v1545 = vcombine.high %v1539, %v1539
      %1546 = vrot.lane.b32.xlu0 %v1539, 90
      %v1547 = vpop.permute.xlu0 %1546
      %1548 = vrot.lane.b32.xlu0 %v1545, 90
      %v1549 = vpop.permute.xlu0 %1548
      %1550 = vrot.lane.b32.xlu0 %v1540, 90
      %v1551 = vpop.permute.xlu0 %1550
      %vm1552 = vcmask 736256
      %v1553 = vsel %vm1552, %v1547, %v1549
      %v1554 = vsel %vm1552, %v1549, %v1551
      %v1556 = vsel %vm223, %v1542, 0
      %v1558 = vsel %vm227, %v1553, 0
      %v1560 = vsel %vm227, %v1554, 0
      %v1562 = vsel %vm227, %v1551, 0
      %1564 = vmatprep.subr.mxu0 0.0
      %1565 = vmatpush1.msra.mxu0 0.0
      %1566 = vmatprep.subr.mxu0 0.0
      %1567 = vmatpush1.msra.mxu0 0.0
      %1568 = vmatprep.subr.mxu0 0.0
      %1569 = vmatpush1.msra.mxu0 0.0
      %1570 = vmatprep.subr.mxu0 0.0
      %1571 = vmatpush1.msra.mxu0 0.0
      %1572 = vmatprep.subr.mxu0 0.0
      %1573 = vmatpush1.msra.mxu0 0.0
      %1574 = vmatprep.subr.mxu0 0.0
      %1575 = vmatpush1.msra.mxu0 0.0
      %1576 = vmatprep.subr.mxu0 0.0
      %1577 = vmatpush1.msra.mxu0 0.0
      %1578 = vmatprep.subr.mxu0 0.0
      %1579 = vmatpush1.msra.mxu0 0.0
      %1580 = vmatprep.subr.mxu0 0.0
      %1581 = vmatpush1.msra.mxu0 0.0
      %1582 = vmatprep.subr.mxu0 0.0
      %1583 = vmatpush1.msra.mxu0 0.0
      %1584 = vmatprep.subr.mxu0 0.0
      %1585 = vmatpush1.msra.mxu0 0.0
      %1586 = vmatprep.subr.mxu0 0.0
      %1587 = vmatpush1.msra.mxu0 0.0
      %1588 = vmatprep.subr.mxu0 0.0
      %1589 = vmatpush1.msra.mxu0 0.0
      %1590 = vmatprep.subr.mxu0 0.0
      %1591 = vmatpush1.msra.mxu0 0.0
      %1592 = vmatprep.subr.mxu0 0.0
      %1593 = vmatpush1.msra.mxu0 0.0
      %1594 = vmatprep.subr.mxu0 %v1560
      %1595 = vmatpush1.msra.mxu0 %v1558
      %1596 = vmatprep.subr.mxu0 0.0
      %1597 = vmatpush2.msra.mxu0 0.0
      %1598 = vmatprep.subr.mxu0 0.0
      %1599 = vmatpush2.msra.mxu0 0.0
      %1600 = vmatprep.subr.mxu0 0.0
      %1601 = vmatpush2.msra.mxu0 0.0
      %1602 = vmatprep.subr.mxu0 0.0
      %1603 = vmatpush2.msra.mxu0 0.0
      %1604 = vmatprep.subr.mxu0 0.0
      %1605 = vmatpush2.msra.mxu0 0.0
      %1606 = vmatprep.subr.mxu0 0.0
      %1607 = vmatpush2.msra.mxu0 0.0
      %1608 = vmatprep.subr.mxu0 0.0
      %1609 = vmatpush2.msra.mxu0 0.0
      %1610 = vmatprep.subr.mxu0 0.0
      %1611 = vmatpush2.msra.mxu0 0.0
      %1612 = vmatprep.subr.mxu0 0.0
      %1613 = vmatpush2.msra.mxu0 0.0
      %1614 = vmatprep.subr.mxu0 0.0
      %1615 = vmatpush2.msra.mxu0 0.0
      %1616 = vmatprep.subr.mxu0 0.0
      %1617 = vmatpush2.msra.mxu0 0.0
      %1618 = vmatprep.subr.mxu0 0.0
      %1619 = vmatpush2.msra.mxu0 0.0
      %1620 = vmatprep.subr.mxu0 0.0
      %1621 = vmatpush2.msra.mxu0 0.0
      %1622 = vmatprep.subr.mxu0 0.0
      %1623 = vmatpush2.msra.mxu0 0.0
      %1624 = vmatprep.subr.mxu0 0.0
      %1625 = vmatpush2.msra.mxu0 0.0
      %1626 = vmatprep.subr.mxu0 0.0
      %1627 = vmatpush2.msra.mxu0 0.0
      %1628 = vmatprep.mubr.f32.mxu0 0.0
      %1629 = vmatmul.mubr.f32.gmra.mxu0 %v1556
      %v1630 = vpop.f32.mrf.mxu0
      %v1631 = vadd.f32 0.0, %v1630
      %v1632 = vpop.f32.mrf.mxu0
      %v1633 = vadd.f32 0.0, %v1632
      %1634 = vdwg.mxu0
      %1635 = vmatprep.subr.mxu0 0.0
      %1636 = vmatpush1.msra.mxu0 0.0
      %1637 = vmatprep.subr.mxu0 0.0
      %1638 = vmatpush1.msra.mxu0 0.0
      %1639 = vmatprep.subr.mxu0 0.0
      %1640 = vmatpush1.msra.mxu0 0.0
      %1641 = vmatprep.subr.mxu0 0.0
      %1642 = vmatpush1.msra.mxu0 0.0
      %1643 = vmatprep.subr.mxu0 0.0
      %1644 = vmatpush1.msra.mxu0 0.0
      %1645 = vmatprep.subr.mxu0 0.0
      %1646 = vmatpush1.msra.mxu0 0.0
      %1647 = vmatprep.subr.mxu0 0.0
      %1648 = vmatpush1.msra.mxu0 0.0
      %1649 = vmatprep.subr.mxu0 0.0
      %1650 = vmatpush1.msra.mxu0 0.0
      %1651 = vmatprep.subr.mxu0 0.0
      %1652 = vmatpush1.msra.mxu0 0.0
      %1653 = vmatprep.subr.mxu0 0.0
      %1654 = vmatpush1.msra.mxu0 0.0
      %1655 = vmatprep.subr.mxu0 0.0
      %1656 = vmatpush1.msra.mxu0 0.0
      %1657 = vmatprep.subr.mxu0 0.0
      %1658 = vmatpush1.msra.mxu0 0.0
      %1659 = vmatprep.subr.mxu0 0.0
      %1660 = vmatpush1.msra.mxu0 0.0
      %1661 = vmatprep.subr.mxu0 0.0
      %1662 = vmatpush1.msra.mxu0 0.0
      %1663 = vmatprep.subr.mxu0 0.0
      %1664 = vmatpush1.msra.mxu0 0.0
      %1665 = vmatprep.subr.mxu0 0.0
      %1666 = vmatpush1.msra.mxu0 %v1562
      %1667 = vmatprep.subr.mxu0 0.0
      %1668 = vmatpush2.msra.mxu0 0.0
      %1669 = vmatprep.subr.mxu0 0.0
      %1670 = vmatpush2.msra.mxu0 0.0
      %1671 = vmatprep.subr.mxu0 0.0
      %1672 = vmatpush2.msra.mxu0 0.0
      %1673 = vmatprep.subr.mxu0 0.0
      %1674 = vmatpush2.msra.mxu0 0.0
      %1675 = vmatprep.subr.mxu0 0.0
      %1676 = vmatpush2.msra.mxu0 0.0
      %1677 = vmatprep.subr.mxu0 0.0
      %1678 = vmatpush2.msra.mxu0 0.0
      %1679 = vmatprep.subr.mxu0 0.0
      %1680 = vmatpush2.msra.mxu0 0.0
      %1681 = vmatprep.subr.mxu0 0.0
      %1682 = vmatpush2.msra.mxu0 0.0
      %1683 = vmatprep.subr.mxu0 0.0
      %1684 = vmatpush2.msra.mxu0 0.0
      %1685 = vmatprep.subr.mxu0 0.0
      %1686 = vmatpush2.msra.mxu0 0.0
      %1687 = vmatprep.subr.mxu0 0.0
      %1688 = vmatpush2.msra.mxu0 0.0
      %1689 = vmatprep.subr.mxu0 0.0
      %1690 = vmatpush2.msra.mxu0 0.0
      %1691 = vmatprep.subr.mxu0 0.0
      %1692 = vmatpush2.msra.mxu0 0.0
      %1693 = vmatprep.subr.mxu0 0.0
      %1694 = vmatpush2.msra.mxu0 0.0
      %1695 = vmatprep.subr.mxu0 0.0
      %1696 = vmatpush2.msra.mxu0 0.0
      %1697 = vmatprep.subr.mxu0 0.0
      %1698 = vmatpush2.msra.mxu0 0.0
      %1699 = vmatprep.mubr.f32.mxu0 0.0
      %1700 = vmatmul.mubr.f32.gmra.mxu0 %v1556
      %v1701 = vpop.f32.mrf.mxu0
      %v1702 = vadd.f32 0.0, %v1701
      %v1703 = vpop.f32.mrf.mxu0
      %1704 = vdwg.mxu0
      %v1705 = vadd.f32 %v1536, %v1631
      %v1706 = vadd.f32 %v1537, %v1633
      %v1707 = vadd.f32 %v1538, %v1702
      %v1708 = vld [vmem:[%s2] sm:$0x7]
      %v1710 = vlaneseq
      %v1711 = vshrl.u32 %v1710, 7
      %v1712 = vsub.s32 0, %v1711
      %v1713 = vrot.slane %v1708, %v1712
      %v1714 = vlaneseq
      %v1715 = vshrl.u32 %v1714, 7
      %v1716 = vsub.s32 1, %v1715
      %v1717 = vrot.slane %v1708, %v1716
      %v1718 = vlaneseq
      %v1719 = vshrl.u32 %v1718, 7
      %v1720 = vsub.s32 2, %v1719
      %v1721 = vrot.slane %v1708, %v1720
      %v1725 = vmul.f32 %v1705, %v1713
      %v1726 = vmul.f32 %v1706, %v1717
      %v1727 = vmul.f32 %v1707, %v1721
      %v1728 = vadd.f32 %v1725, %v1726
      %vm1729 = vcmask 261120
      %v1730 = vsel %vm1729, %v1727, 0.0
      %v1731 = vadd.f32 %v1728, %v1730
      %1732 = vadd.xlane.f32.xlu0 %v1731
      %v1733 = vpop.xlane.xlu0 %1732
      %v1734 = vmul.f32 %v1733, 0.00390625
      %v1735 = vsub.f32 %v1705, %v1734
      %v1736 = vsub.f32 %v1706, %v1734
      %v1737 = vsub.f32 %v1707, %v1734
      %v1738 = vmul.f32 %v1735, %v1735
      %v1739 = vmul.f32 %v1736, %v1736
      %v1740 = vmul.f32 %v1737, %v1737
      %v1741 = vmul.f32 %v1738, %v1713
      %v1742 = vmul.f32 %v1739, %v1717
      %v1743 = vmul.f32 %v1740, %v1721
      %v1744 = vadd.f32 %v1741, %v1742
      %v1745 = vsel %vm1729, %v1743, 0.0
      %v1746 = vadd.f32 %v1744, %v1745
      %1747 = vadd.xlane.f32.xlu0 %v1746
      %v1748 = vpop.xlane.xlu0 %1747
      %vm1749 = vcmask 7168
      %1750 = vst.msk [vmem:[%s205] sm:$0xff] %vm1749, %v1733
      %vm1751 = vcmask 15368
      %1752 = vst.msk [vmem:[%s205] sm:$0xff] %vm1751, %v1748
      %p1753 = scmp.lt.s32.totalorder %s18, 1
      %s1754 = scalar_select %p1753, %s18, 1
      %p1755 = scmp.lt.s32.totalorder %s19, 0
      %s1756 = scalar_select %p1755, %s19, 0
      %s1757 = sadd.s32 %s1756, %s1754
      %s1758 = smul.addr %s1757, 8
      %s1759 = scalar_lea.vmem %s3, %s1758
      // Predicated region
      $region33: #{conv_norm_relu.2} parent=31 // pred_check
        %p1760 = pneg %p119
      $region34: #{conv_norm_relu.2} parent=31 // pred_check_branch
        %1762 = sbr.rel (%p1760) target = $region36
      $region35: #{conv_norm_relu.2} parent=31 // pred_region
        _
      $region36: #{conv_norm_relu.2} parent=31 // pred_fallthru
        _
    $region32: #{conv_norm_relu.2} parent=5 // pred_fallthru
      _
    %p1763 = scmp.le.s32.totalorder 2, %s9
    // Predicated region
    $region37: #{conv_norm_relu.2} parent=5 // pred_check
      %p1764 = pneg %p1763
    $region38: #{conv_norm_relu.2} parent=5 // pred_check_branch
      %1766 = sbr.rel (%p1764) target = $region40
    $region39: #{conv_norm_relu.2} parent=5 // pred_region
      %s1767 = ssub.s32 %s9, 2
      // Predicated region
      $region41: #{conv_norm_relu.2} parent=39 // pred_check
        %p1768 = pneg %p125
      $region42: #{conv_norm_relu.2} parent=39 // pred_check_branch
        %1770 = sbr.rel (%p1768) target = $region44
      $region43: #{conv_norm_relu.2} parent=39 // pred_region
        %p1771 = scmp.lt.s32.totalorder %s20, 1
        %s1772 = scalar_select %p1771, %s20, 1
        %p1773 = scmp.lt.s32.totalorder %s21, 0
        %s1774 = scalar_select %p1773, %s21, 0
        %s1775 = sadd.s32 %s1774, %s1772
        %s1776 = smul.addr %s1775, 8
        %s1777 = scalar_lea.vmem %s3, %s1776
      $region44: #{conv_norm_relu.2} parent=39 // pred_fallthru
        _
    $region40: #{conv_norm_relu.2} parent=5 // pred_fallthru
      _
  $region6: #{conv_norm_relu.2} parent=0 // loop_footer
    %s13 = sadd.s32 1, %s9
  $region7: #{conv_norm_relu.2} parent=0 // loop_footer_branch
    %8 = sbr.rel target = $region3
  $region8: #{conv_norm_relu.2} parent=0 // loop_exit
    _

</llo_original>
